<compile_context>
chip_gen: v5e
topology: v5e:2x2
jax: 0.10.0
libtpu: 0.0.40
codegen_flags: <defaults>
</compile_context>

<pallas_src>
import jax
import jax.numpy as jnp
from jax.experimental import pallas as pl
from jax.experimental.pallas import tpu as pltpu


def _round_up(x, m):
    return ((x + m - 1) // m) * m


B_TILE = 8  # one sublane tile of batch per grid step


# ----------------------------------------------------------------------------
# Fused kernel factory: whole model (all GRU layers + FC + tanh) in one body.
# ----------------------------------------------------------------------------
def make_fused_gru_kernel(num_layers, seq_len, b_tile, hidden_sizes):
    T, Bt = seq_len, b_tile

    def kernel(*refs):
        # refs layout:
        #   gx0,
        #   layer 0:       w_hh, b_hn
        #   layer l>=1:    w_ih, b_ih(folded), w_hh, b_hn
        #   w_fc, b_fc,
        #   out,
        #   gx_scr, seq_scr  (VMEM scratch)
        gx0_ref = refs[0]
        idx = 1
        layers = []
        for l in range(num_layers):
            if l == 0:
                w_ih_ref = b_ih_ref = None
            else:
                w_ih_ref, b_ih_ref = refs[idx], refs[idx + 1]
                idx += 2
            w_hh_ref, b_hn_ref = refs[idx], refs[idx + 1]
            idx += 2
            layers.append((w_ih_ref, b_ih_ref, w_hh_ref, b_hn_ref))
        w_fc_ref, b_fc_ref = refs[idx], refs[idx + 1]
        out_ref = refs[idx + 2]
        gx_scr, seq_scr = refs[idx + 3], refs[idx + 4]

        h = None
        for l, (w_ih_ref, b_ih_ref, w_hh_ref, b_hn_ref) in enumerate(layers):
            H = hidden_sizes[l]
            last = (l == num_layers - 1)

            if l >= 1:
                # Whole-sequence input projection: one (T*Bt, Hp) x (Hp, 3H)
                # MXU matmul, result parked in VMEM scratch (not carried in vregs).
                H_prev = hidden_sizes[l - 1]
                if H_prev == seq_scr.shape[-1]:
                    seq = seq_scr[...]
                else:
                    seq = seq_scr[:, :H_prev]
                gx_all = jnp.dot(seq, w_ih_ref[...],
                                 preferred_element_type=jnp.float32) + b_ih_ref[...]
                if 3 * H == gx_scr.shape[-1]:
                    gx_scr[...] = gx_all
                else:
                    gx_scr[:, :3 * H] = gx_all

            b_hn = b_hn_ref[...]          # (1, H)
            for t in range(T):            # T small & static: full unroll
                if l == 0:
                    gx = gx0_ref[t]                                   # (Bt, 3H)
                else:
                    gx = gx_scr[t * Bt:(t + 1) * Bt, :3 * H]          # (Bt, 3H)
                gx_r = gx[:, 0 * H:1 * H]
                gx_z = gx[:, 1 * H:2 * H]
                gx_n = gx[:, 2 * H:3 * H]
                if t == 0:
                    # h0 == 0 -> recurrent matmul skipped (gh == 0).
                    r = jax.nn.sigmoid(gx_r)
                    z = jax.nn.sigmoid(gx_z)
                    n = jnp.tanh(gx_n + r * b_hn)
                    h = n - z * n
                else:
                    gh = jnp.dot(h, w_hh_ref[...],
                                 preferred_element_type=jnp.float32)
                    r = jax.nn.sigmoid(gx_r + gh[:, 0 * H:1 * H])
                    z = jax.nn.sigmoid(gx_z + gh[:, 1 * H:2 * H])
                    n = jnp.tanh(gx_n + r * (gh[:, 2 * H:3 * H] + b_hn))
                    h = n + z * (h - n)
                if not last:
                    # Inter-layer sequence stays on-chip in VMEM scratch.
                    if H == seq_scr.shape[-1]:
                        seq_scr[t * Bt:(t + 1) * Bt, :] = h
                    else:
                        seq_scr[t * Bt:(t + 1) * Bt, :H] = h

        # Fused FC + tanh on the last timestep's hidden state.
        y = jnp.dot(h, w_fc_ref[...],
                    preferred_element_type=jnp.float32) + b_fc_ref[...]
        out_ref[...] = jnp.tanh(y).astype(out_ref.dtype)  # (8, 128) unmasked store

    return kernel


# ----------------------------------------------------------------------------
# Model: parameter init + forward
# ----------------------------------------------------------------------------
def init_params(key, input_size, hidden_sizes, output_size):
    params = {"gru": [], "fc": None}
    in_dim = input_size
    for h in hidden_sizes:
        key, k1, k2, k3, k4 = jax.random.split(key, 5)
        bound = 1.0 / jnp.sqrt(h)   # PyTorch default GRU init: U(-1/sqrt(H), 1/sqrt(H))
        params["gru"].append(dict(
            w_ih=jax.random.uniform(k1, (in_dim, 3 * h), jnp.float32, -bound, bound),
            w_hh=jax.random.uniform(k2, (h, 3 * h), jnp.float32, -bound, bound),
            b_ih=jax.random.uniform(k3, (1, 3 * h), jnp.float32, -bound, bound),
            b_hh=jax.random.uniform(k4, (1, 3 * h), jnp.float32, -bound, bound),
        ))
        in_dim = h
    key, k1, k2 = jax.random.split(key, 3)
    bound = 1.0 / jnp.sqrt(in_dim)  # PyTorch default Linear init
    params["fc"] = dict(
        w=jax.random.uniform(k1, (in_dim, output_size), jnp.float32, -bound, bound),
        b=jax.random.uniform(k2, (1, output_size), jnp.float32, -bound, bound),
    )
    return params


@jax.jit
def custom_gru_model_forward(params, x_btd):
    """x_btd: (B, T, input_size), batch_first like the PyTorch module."""
    B, T, D_in = x_btd.shape
    num_layers = len(params["gru"])
    hidden_sizes = tuple(layer["w_hh"].shape[0] for layer in params["gru"])
    H0 = hidden_sizes[0]
    H_last = hidden_sizes[-1]
    O = params["fc"]["w"].shape[1]

    B_pad = _round_up(max(B, B_TILE), B_TILE)
    O_pad = _round_up(O, 128)
    n_btiles = B_pad // B_TILE

    x32 = x_btd.astype(jnp.float32)
    x_pad = jnp.zeros((B_pad, T, D_in), jnp.float32).at[:B].set(x32)

    # Layer-0 input projection + r/z bias fold done in the wrapper: the kernel
    # gets a lane-dense (T, B_pad, 3H0) slab instead of a (T*B, 1) input.
    l0 = params["gru"][0]
    b0 = l0["b_ih"].at[:, :2 * H0].add(l0["b_hh"][:, :2 * H0])
    gx0 = jnp.transpose(x_pad @ l0["w_ih"] + b0, (1, 0, 2))  # (T, B_pad, 3H0)

    w_fc_pad = jnp.zeros((H_last, O_pad), jnp.float32).at[:, :O].set(params["fc"]["w"])
    b_fc_pad = jnp.zeros((1, O_pad), jnp.float32).at[:, :O].set(params["fc"]["b"])

    args = [gx0]
    in_specs = [pl.BlockSpec((T, B_TILE, 3 * H0), lambda b: (0, b, 0))]
    for l, layer in enumerate(params["gru"]):
        H = hidden_sizes[l]
        if l >= 1:
            b_ih_folded = layer["b_ih"].at[:, :2 * H].add(layer["b_hh"][:, :2 * H])
            for a in (layer["w_ih"], b_ih_folded):
                args.append(a)
                in_specs.append(pl.BlockSpec(a.shape, lambda b: (0, 0)))
        b_hn = layer["b_hh"][:, 2 * H:3 * H]
        for a in (layer["w_hh"], b_hn):
            args.append(a)
            in_specs.append(pl.BlockSpec(a.shape, lambda b: (0, 0)))
    for a in (w_fc_pad, b_fc_pad):
        args.append(a)
        in_specs.append(pl.BlockSpec(a.shape, lambda b: (0, 0)))

    H_scr = max(hidden_sizes)
    kernel = make_fused_gru_kernel(num_layers, T, B_TILE, hidden_sizes)

    out_pad = pl.pallas_call(
        kernel,
        out_shape=jax.ShapeDtypeStruct((B_pad, O_pad), jnp.float32),
        grid=(n_btiles,),
        in_specs=in_specs,
        out_specs=pl.BlockSpec((B_TILE, O_pad), lambda b: (b, 0)),
        scratch_shapes=[
            pltpu.VMEM((T * B_TILE, 3 * H_scr), jnp.float32),  # gx slab (layers >= 1)
            pltpu.VMEM((T * B_TILE, H_scr), jnp.float32),      # inter-layer sequence
        ],
        compiler_params=pltpu.CompilerParams(dimension_semantics=("parallel",)),
    )(*args)

    return out_pad[:B, :O]


# ----------------------------------------------------------------------------
# Pure-JAX reference (for correctness check)
# ----------------------------------------------------------------------------
def reference_forward(params, x_btd):
    out = x_btd
    for layer in params["gru"]:
        H = layer["w_hh"].shape[0]
        B = out.shape[0]

        def step(h, x_t, layer=layer, H=H):
            gx = x_t @ layer["w_ih"] + layer["b_ih"]
            gh = h @ layer["w_hh"] + layer["b_hh"]
            r = jax.nn.sigmoid(gx[:, :H] + gh[:, :H])
            z = jax.nn.sigmoid(gx[:, H:2 * H] + gh[:, H:2 * H])
            n = jnp.tanh(gx[:, 2 * H:] + r * gh[:, 2 * H:])
            h_new = (1.0 - z) * n + z * h
            return h_new, h_new

        h0 = jnp.zeros((B, H), jnp.float32)
        _, ys = jax.lax.scan(step, h0, jnp.transpose(out, (1, 0, 2)))
        out = jnp.transpose(ys, (1, 0, 2))
    last = out[:, -1, :]
    return jnp.tanh(last @ params["fc"]["w"] + params["fc"]["b"])


if __name__ == "__main__":
    # Small shapes consistent with the module (input_size=1, output_size=120).
    batch, seq_len = 2, 8
    input_size = 1
    hidden_sizes = [128, 128]
    output_size = 120

    key = jax.random.PRNGKey(0)
    key, pkey, xkey = jax.random.split(key, 3)
    params = init_params(pkey, input_size, hidden_sizes, output_size)
    x = jax.random.normal(xkey, (batch, seq_len, input_size), jnp.float32)

    out = custom_gru_model_forward(params, x)
    out = jax.block_until_ready(out)
    assert out.shape == (batch, output_size), out.shape

    ref = reference_forward(params, x)
    assert jnp.allclose(out, ref, atol=1e-4, rtol=1e-5), \
        f"max abs err {jnp.max(jnp.abs(out - ref))}"

    print("KERNEL_OK")
</pallas_src>

<mosaic_0001>
module attributes {stable_mosaic.version = 11 : i64} {
  func.func @kernel(%arg0: i32, %arg1: memref<8x8x384xf32, #tpu.memory_space<vmem>>, %arg2: memref<128x384xf32, #tpu.memory_space<vmem>>, %arg3: memref<1x128xf32, #tpu.memory_space<vmem>>, %arg4: memref<128x384xf32, #tpu.memory_space<vmem>>, %arg5: memref<1x384xf32, #tpu.memory_space<vmem>>, %arg6: memref<128x384xf32, #tpu.memory_space<vmem>>, %arg7: memref<1x128xf32, #tpu.memory_space<vmem>>, %arg8: memref<128x128xf32, #tpu.memory_space<vmem>>, %arg9: memref<1x128xf32, #tpu.memory_space<vmem>>, %arg10: memref<8x128xf32, #tpu.memory_space<vmem>>, %arg11: memref<64x384xf32, #tpu.memory_space<vmem>>, %arg12: memref<64x128xf32, #tpu.memory_space<vmem>>) attributes {dimension_semantics = [#tpu.dimension_semantics<parallel>], iteration_bounds = array<i64: 1>, scalar_prefetch = 0 : i64, scratch_operands = 2 : i64, tpu.core_type = #tpu.core_type<tc>, window_params = [{transform_indices = @transform_0, window_bounds = array<i64: 8, 8, 384>}, {pipeline_mode = #tpu.pipeline_mode<synchronous>, transform_indices = @transform_1, window_bounds = array<i64: 128, 384>}, {pipeline_mode = #tpu.pipeline_mode<synchronous>, transform_indices = @transform_2, window_bounds = array<i64: 1, 128>}, {pipeline_mode = #tpu.pipeline_mode<synchronous>, transform_indices = @transform_3, window_bounds = array<i64: 128, 384>}, {pipeline_mode = #tpu.pipeline_mode<synchronous>, transform_indices = @transform_4, window_bounds = array<i64: 1, 384>}, {pipeline_mode = #tpu.pipeline_mode<synchronous>, transform_indices = @transform_5, window_bounds = array<i64: 128, 384>}, {pipeline_mode = #tpu.pipeline_mode<synchronous>, transform_indices = @transform_6, window_bounds = array<i64: 1, 128>}, {pipeline_mode = #tpu.pipeline_mode<synchronous>, transform_indices = @transform_7, window_bounds = array<i64: 128, 128>}, {pipeline_mode = #tpu.pipeline_mode<synchronous>, transform_indices = @transform_8, window_bounds = array<i64: 1, 128>}, {transform_indices = @transform_9, window_bounds = array<i64: 8, 128>}]} {
    %c0 = arith.constant 0 : index
    %c0_0 = arith.constant 0 : index
    %0 = vector.load %arg3[%c0, %c0_0] : memref<1x128xf32, #tpu.memory_space<vmem>>, vector<1x128xf32>
    %c0_1 = arith.constant 0 : index
    %c0_2 = arith.constant 0 : index
    %c0_3 = arith.constant 0 : index
    %1 = vector.load %arg1[%c0_1, %c0_2, %c0_3] : memref<8x8x384xf32, #tpu.memory_space<vmem>>, vector<1x8x384xf32>
    %2 = vector.shape_cast %1 : vector<1x8x384xf32> to vector<8x384xf32>
    %3 = vector.extract_strided_slice %2 {offsets = [0, 0], sizes = [8, 128], strides = [1, 1]} : vector<8x384xf32> to vector<8x128xf32>
    %4 = vector.extract_strided_slice %2 {offsets = [0, 128], sizes = [8, 128], strides = [1, 1]} : vector<8x384xf32> to vector<8x128xf32>
    %5 = vector.extract_strided_slice %2 {offsets = [0, 256], sizes = [8, 128], strides = [1, 1]} : vector<8x384xf32> to vector<8x128xf32>
    %6 = arith.negf %3 : vector<8x128xf32>
    %7 = math.exp %6 : vector<8x128xf32>
    %cst = arith.constant 1.000000e+00 : f32
    %8 = vector.broadcast %cst : f32 to vector<8x128xf32>
    %9 = arith.addf %8, %7 : vector<8x128xf32>
    %10 = arith.divf %8, %9 : vector<8x128xf32>
    %11 = arith.negf %4 : vector<8x128xf32>
    %12 = math.exp %11 : vector<8x128xf32>
    %cst_4 = arith.constant 1.000000e+00 : f32
    %13 = vector.broadcast %cst_4 : f32 to vector<8x128xf32>
    %14 = arith.addf %13, %12 : vector<8x128xf32>
    %15 = arith.divf %13, %14 : vector<8x128xf32>
    %16 = vector.broadcast %0 : vector<1x128xf32> to vector<8x128xf32>
    %17 = arith.mulf %10, %16 : vector<8x128xf32>
    %18 = arith.addf %5, %17 : vector<8x128xf32>
    %19 = math.tanh %18 : vector<8x128xf32>
    %20 = arith.mulf %15, %19 : vector<8x128xf32>
    %21 = arith.subf %19, %20 : vector<8x128xf32>
    %c0_5 = arith.constant 0 : index
    %c0_6 = arith.constant 0 : index
    %22 = vector.load %arg12[%c0_5, %c0_6] : memref<64x128xf32, #tpu.memory_space<vmem>>, vector<8x128xf32>
    tpu.vector_store %arg12[%c0_5, %c0_6], %21 {strides = array<i32>} : memref<64x128xf32, #tpu.memory_space<vmem>>, vector<8x128xf32>,
    %c1 = arith.constant 1 : index
    %c0_7 = arith.constant 0 : index
    %c0_8 = arith.constant 0 : index
    %23 = vector.load %arg1[%c1, %c0_7, %c0_8] : memref<8x8x384xf32, #tpu.memory_space<vmem>>, vector<1x8x384xf32>
    %24 = vector.shape_cast %23 : vector<1x8x384xf32> to vector<8x384xf32>
    %25 = vector.extract_strided_slice %24 {offsets = [0, 0], sizes = [8, 128], strides = [1, 1]} : vector<8x384xf32> to vector<8x128xf32>
    %26 = vector.extract_strided_slice %24 {offsets = [0, 128], sizes = [8, 128], strides = [1, 1]} : vector<8x384xf32> to vector<8x128xf32>
    %27 = vector.extract_strided_slice %24 {offsets = [0, 256], sizes = [8, 128], strides = [1, 1]} : vector<8x384xf32> to vector<8x128xf32>
    %c0_9 = arith.constant 0 : index
    %c0_10 = arith.constant 0 : index
    %28 = vector.load %arg2[%c0_9, %c0_10] : memref<128x384xf32, #tpu.memory_space<vmem>>, vector<128x384xf32>
    %cst_11 = arith.constant dense<0.000000e+00> : vector<8x384xf32>
    %29 = tpu.matmul %21, %28, %cst_11 {dimension_numbers = #tpu.dot_dimension_numbers<[1], [0], [0], [1], [0, 0, 1, 1], [], []>} : vector<8x128xf32>, vector<128x384xf32>, vector<8x384xf32> -> vector<8x384xf32>
    %30 = vector.extract_strided_slice %29 {offsets = [0, 0], sizes = [8, 128], strides = [1, 1]} : vector<8x384xf32> to vector<8x128xf32>
    %31 = arith.addf %25, %30 : vector<8x128xf32>
    %32 = arith.negf %31 : vector<8x128xf32>
    %33 = math.exp %32 : vector<8x128xf32>
    %cst_12 = arith.constant 1.000000e+00 : f32
    %34 = vector.broadcast %cst_12 : f32 to vector<8x128xf32>
    %35 = arith.addf %34, %33 : vector<8x128xf32>
    %36 = arith.divf %34, %35 : vector<8x128xf32>
    %37 = vector.extract_strided_slice %29 {offsets = [0, 128], sizes = [8, 128], strides = [1, 1]} : vector<8x384xf32> to vector<8x128xf32>
    %38 = arith.addf %26, %37 : vector<8x128xf32>
    %39 = arith.negf %38 : vector<8x128xf32>
    %40 = math.exp %39 : vector<8x128xf32>
    %cst_13 = arith.constant 1.000000e+00 : f32
    %41 = vector.broadcast %cst_13 : f32 to vector<8x128xf32>
    %42 = arith.addf %41, %40 : vector<8x128xf32>
    %43 = arith.divf %41, %42 : vector<8x128xf32>
    %44 = vector.extract_strided_slice %29 {offsets = [0, 256], sizes = [8, 128], strides = [1, 1]} : vector<8x384xf32> to vector<8x128xf32>
    %45 = vector.broadcast %0 : vector<1x128xf32> to vector<8x128xf32>
    %46 = arith.addf %44, %45 : vector<8x128xf32>
    %47 = arith.mulf %36, %46 : vector<8x128xf32>
    %48 = arith.addf %27, %47 : vector<8x128xf32>
    %49 = math.tanh %48 : vector<8x128xf32>
    %50 = arith.subf %21, %49 : vector<8x128xf32>
    %51 = arith.mulf %43, %50 : vector<8x128xf32>
    %52 = arith.addf %49, %51 : vector<8x128xf32>
    %c8 = arith.constant 8 : index
    %c0_14 = arith.constant 0 : index
    %53 = vector.load %arg12[%c8, %c0_14] : memref<64x128xf32, #tpu.memory_space<vmem>>, vector<8x128xf32>
    tpu.vector_store %arg12[%c8, %c0_14], %52 {strides = array<i32>} : memref<64x128xf32, #tpu.memory_space<vmem>>, vector<8x128xf32>,
    %c2 = arith.constant 2 : index
    %c0_15 = arith.constant 0 : index
    %c0_16 = arith.constant 0 : index
    %54 = vector.load %arg1[%c2, %c0_15, %c0_16] : memref<8x8x384xf32, #tpu.memory_space<vmem>>, vector<1x8x384xf32>
    %55 = vector.shape_cast %54 : vector<1x8x384xf32> to vector<8x384xf32>
    %56 = vector.extract_strided_slice %55 {offsets = [0, 0], sizes = [8, 128], strides = [1, 1]} : vector<8x384xf32> to vector<8x128xf32>
    %57 = vector.extract_strided_slice %55 {offsets = [0, 128], sizes = [8, 128], strides = [1, 1]} : vector<8x384xf32> to vector<8x128xf32>
    %58 = vector.extract_strided_slice %55 {offsets = [0, 256], sizes = [8, 128], strides = [1, 1]} : vector<8x384xf32> to vector<8x128xf32>
    %c0_17 = arith.constant 0 : index
    %c0_18 = arith.constant 0 : index
    %59 = vector.load %arg2[%c0_17, %c0_18] : memref<128x384xf32, #tpu.memory_space<vmem>>, vector<128x384xf32>
    %cst_19 = arith.constant dense<0.000000e+00> : vector<8x384xf32>
    %60 = tpu.matmul %52, %59, %cst_19 {dimension_numbers = #tpu.dot_dimension_numbers<[1], [0], [0], [1], [0, 0, 1, 1], [], []>} : vector<8x128xf32>, vector<128x384xf32>, vector<8x384xf32> -> vector<8x384xf32>
    %61 = vector.extract_strided_slice %60 {offsets = [0, 0], sizes = [8, 128], strides = [1, 1]} : vector<8x384xf32> to vector<8x128xf32>
    %62 = arith.addf %56, %61 : vector<8x128xf32>
    %63 = arith.negf %62 : vector<8x128xf32>
    %64 = math.exp %63 : vector<8x128xf32>
    %cst_20 = arith.constant 1.000000e+00 : f32
    %65 = vector.broadcast %cst_20 : f32 to vector<8x128xf32>
    %66 = arith.addf %65, %64 : vector<8x128xf32>
    %67 = arith.divf %65, %66 : vector<8x128xf32>
    %68 = vector.extract_strided_slice %60 {offsets = [0, 128], sizes = [8, 128], strides = [1, 1]} : vector<8x384xf32> to vector<8x128xf32>
    %69 = arith.addf %57, %68 : vector<8x128xf32>
    %70 = arith.negf %69 : vector<8x128xf32>
    %71 = math.exp %70 : vector<8x128xf32>
    %cst_21 = arith.constant 1.000000e+00 : f32
    %72 = vector.broadcast %cst_21 : f32 to vector<8x128xf32>
    %73 = arith.addf %72, %71 : vector<8x128xf32>
    %74 = arith.divf %72, %73 : vector<8x128xf32>
    %75 = vector.extract_strided_slice %60 {offsets = [0, 256], sizes = [8, 128], strides = [1, 1]} : vector<8x384xf32> to vector<8x128xf32>
    %76 = vector.broadcast %0 : vector<1x128xf32> to vector<8x128xf32>
    %77 = arith.addf %75, %76 : vector<8x128xf32>
    %78 = arith.mulf %67, %77 : vector<8x128xf32>
    %79 = arith.addf %58, %78 : vector<8x128xf32>
    %80 = math.tanh %79 : vector<8x128xf32>
    %81 = arith.subf %52, %80 : vector<8x128xf32>
    %82 = arith.mulf %74, %81 : vector<8x128xf32>
    %83 = arith.addf %80, %82 : vector<8x128xf32>
    %c16 = arith.constant 16 : index
    %c0_22 = arith.constant 0 : index
    %84 = vector.load %arg12[%c16, %c0_22] : memref<64x128xf32, #tpu.memory_space<vmem>>, vector<8x128xf32>
    tpu.vector_store %arg12[%c16, %c0_22], %83 {strides = array<i32>} : memref<64x128xf32, #tpu.memory_space<vmem>>, vector<8x128xf32>,
    %c3 = arith.constant 3 : index
    %c0_23 = arith.constant 0 : index
    %c0_24 = arith.constant 0 : index
    %85 = vector.load %arg1[%c3, %c0_23, %c0_24] : memref<8x8x384xf32, #tpu.memory_space<vmem>>, vector<1x8x384xf32>
    %86 = vector.shape_cast %85 : vector<1x8x384xf32> to vector<8x384xf32>
    %87 = vector.extract_strided_slice %86 {offsets = [0, 0], sizes = [8, 128], strides = [1, 1]} : vector<8x384xf32> to vector<8x128xf32>
    %88 = vector.extract_strided_slice %86 {offsets = [0, 128], sizes = [8, 128], strides = [1, 1]} : vector<8x384xf32> to vector<8x128xf32>
    %89 = vector.extract_strided_slice %86 {offsets = [0, 256], sizes = [8, 128], strides = [1, 1]} : vector<8x384xf32> to vector<8x128xf32>
    %c0_25 = arith.constant 0 : index
    %c0_26 = arith.constant 0 : index
    %90 = vector.load %arg2[%c0_25, %c0_26] : memref<128x384xf32, #tpu.memory_space<vmem>>, vector<128x384xf32>
    %cst_27 = arith.constant dense<0.000000e+00> : vector<8x384xf32>
    %91 = tpu.matmul %83, %90, %cst_27 {dimension_numbers = #tpu.dot_dimension_numbers<[1], [0], [0], [1], [0, 0, 1, 1], [], []>} : vector<8x128xf32>, vector<128x384xf32>, vector<8x384xf32> -> vector<8x384xf32>
    %92 = vector.extract_strided_slice %91 {offsets = [0, 0], sizes = [8, 128], strides = [1, 1]} : vector<8x384xf32> to vector<8x128xf32>
    %93 = arith.addf %87, %92 : vector<8x128xf32>
    %94 = arith.negf %93 : vector<8x128xf32>
    %95 = math.exp %94 : vector<8x128xf32>
    %cst_28 = arith.constant 1.000000e+00 : f32
    %96 = vector.broadcast %cst_28 : f32 to vector<8x128xf32>
    %97 = arith.addf %96, %95 : vector<8x128xf32>
    %98 = arith.divf %96, %97 : vector<8x128xf32>
    %99 = vector.extract_strided_slice %91 {offsets = [0, 128], sizes = [8, 128], strides = [1, 1]} : vector<8x384xf32> to vector<8x128xf32>
    %100 = arith.addf %88, %99 : vector<8x128xf32>
    %101 = arith.negf %100 : vector<8x128xf32>
    %102 = math.exp %101 : vector<8x128xf32>
    %cst_29 = arith.constant 1.000000e+00 : f32
    %103 = vector.broadcast %cst_29 : f32 to vector<8x128xf32>
    %104 = arith.addf %103, %102 : vector<8x128xf32>
    %105 = arith.divf %103, %104 : vector<8x128xf32>
    %106 = vector.extract_strided_slice %91 {offsets = [0, 256], sizes = [8, 128], strides = [1, 1]} : vector<8x384xf32> to vector<8x128xf32>
    %107 = vector.broadcast %0 : vector<1x128xf32> to vector<8x128xf32>
    %108 = arith.addf %106, %107 : vector<8x128xf32>
    %109 = arith.mulf %98, %108 : vector<8x128xf32>
    %110 = arith.addf %89, %109 : vector<8x128xf32>
    %111 = math.tanh %110 : vector<8x128xf32>
    %112 = arith.subf %83, %111 : vector<8x128xf32>
    %113 = arith.mulf %105, %112 : vector<8x128xf32>
    %114 = arith.addf %111, %113 : vector<8x128xf32>
    %c24 = arith.constant 24 : index
    %c0_30 = arith.constant 0 : index
    %115 = vector.load %arg12[%c24, %c0_30] : memref<64x128xf32, #tpu.memory_space<vmem>>, vector<8x128xf32>
    tpu.vector_store %arg12[%c24, %c0_30], %114 {strides = array<i32>} : memref<64x128xf32, #tpu.memory_space<vmem>>, vector<8x128xf32>,
    %c4 = arith.constant 4 : index
    %c0_31 = arith.constant 0 : index
    %c0_32 = arith.constant 0 : index
    %116 = vector.load %arg1[%c4, %c0_31, %c0_32] : memref<8x8x384xf32, #tpu.memory_space<vmem>>, vector<1x8x384xf32>
    %117 = vector.shape_cast %116 : vector<1x8x384xf32> to vector<8x384xf32>
    %118 = vector.extract_strided_slice %117 {offsets = [0, 0], sizes = [8, 128], strides = [1, 1]} : vector<8x384xf32> to vector<8x128xf32>
    %119 = vector.extract_strided_slice %117 {offsets = [0, 128], sizes = [8, 128], strides = [1, 1]} : vector<8x384xf32> to vector<8x128xf32>
    %120 = vector.extract_strided_slice %117 {offsets = [0, 256], sizes = [8, 128], strides = [1, 1]} : vector<8x384xf32> to vector<8x128xf32>
    %c0_33 = arith.constant 0 : index
    %c0_34 = arith.constant 0 : index
    %121 = vector.load %arg2[%c0_33, %c0_34] : memref<128x384xf32, #tpu.memory_space<vmem>>, vector<128x384xf32>
    %cst_35 = arith.constant dense<0.000000e+00> : vector<8x384xf32>
    %122 = tpu.matmul %114, %121, %cst_35 {dimension_numbers = #tpu.dot_dimension_numbers<[1], [0], [0], [1], [0, 0, 1, 1], [], []>} : vector<8x128xf32>, vector<128x384xf32>, vector<8x384xf32> -> vector<8x384xf32>
    %123 = vector.extract_strided_slice %122 {offsets = [0, 0], sizes = [8, 128], strides = [1, 1]} : vector<8x384xf32> to vector<8x128xf32>
    %124 = arith.addf %118, %123 : vector<8x128xf32>
    %125 = arith.negf %124 : vector<8x128xf32>
    %126 = math.exp %125 : vector<8x128xf32>
    %cst_36 = arith.constant 1.000000e+00 : f32
    %127 = vector.broadcast %cst_36 : f32 to vector<8x128xf32>
    %128 = arith.addf %127, %126 : vector<8x128xf32>
    %129 = arith.divf %127, %128 : vector<8x128xf32>
    %130 = vector.extract_strided_slice %122 {offsets = [0, 128], sizes = [8, 128], strides = [1, 1]} : vector<8x384xf32> to vector<8x128xf32>
    %131 = arith.addf %119, %130 : vector<8x128xf32>
    %132 = arith.negf %131 : vector<8x128xf32>
    %133 = math.exp %132 : vector<8x128xf32>
    %cst_37 = arith.constant 1.000000e+00 : f32
    %134 = vector.broadcast %cst_37 : f32 to vector<8x128xf32>
    %135 = arith.addf %134, %133 : vector<8x128xf32>
    %136 = arith.divf %134, %135 : vector<8x128xf32>
    %137 = vector.extract_strided_slice %122 {offsets = [0, 256], sizes = [8, 128], strides = [1, 1]} : vector<8x384xf32> to vector<8x128xf32>
    %138 = vector.broadcast %0 : vector<1x128xf32> to vector<8x128xf32>
    %139 = arith.addf %137, %138 : vector<8x128xf32>
    %140 = arith.mulf %129, %139 : vector<8x128xf32>
    %141 = arith.addf %120, %140 : vector<8x128xf32>
    %142 = math.tanh %141 : vector<8x128xf32>
    %143 = arith.subf %114, %142 : vector<8x128xf32>
    %144 = arith.mulf %136, %143 : vector<8x128xf32>
    %145 = arith.addf %142, %144 : vector<8x128xf32>
    %c32 = arith.constant 32 : index
    %c0_38 = arith.constant 0 : index
    %146 = vector.load %arg12[%c32, %c0_38] : memref<64x128xf32, #tpu.memory_space<vmem>>, vector<8x128xf32>
    tpu.vector_store %arg12[%c32, %c0_38], %145 {strides = array<i32>} : memref<64x128xf32, #tpu.memory_space<vmem>>, vector<8x128xf32>,
    %c5 = arith.constant 5 : index
    %c0_39 = arith.constant 0 : index
    %c0_40 = arith.constant 0 : index
    %147 = vector.load %arg1[%c5, %c0_39, %c0_40] : memref<8x8x384xf32, #tpu.memory_space<vmem>>, vector<1x8x384xf32>
    %148 = vector.shape_cast %147 : vector<1x8x384xf32> to vector<8x384xf32>
    %149 = vector.extract_strided_slice %148 {offsets = [0, 0], sizes = [8, 128], strides = [1, 1]} : vector<8x384xf32> to vector<8x128xf32>
    %150 = vector.extract_strided_slice %148 {offsets = [0, 128], sizes = [8, 128], strides = [1, 1]} : vector<8x384xf32> to vector<8x128xf32>
    %151 = vector.extract_strided_slice %148 {offsets = [0, 256], sizes = [8, 128], strides = [1, 1]} : vector<8x384xf32> to vector<8x128xf32>
    %c0_41 = arith.constant 0 : index
    %c0_42 = arith.constant 0 : index
    %152 = vector.load %arg2[%c0_41, %c0_42] : memref<128x384xf32, #tpu.memory_space<vmem>>, vector<128x384xf32>
    %cst_43 = arith.constant dense<0.000000e+00> : vector<8x384xf32>
    %153 = tpu.matmul %145, %152, %cst_43 {dimension_numbers = #tpu.dot_dimension_numbers<[1], [0], [0], [1], [0, 0, 1, 1], [], []>} : vector<8x128xf32>, vector<128x384xf32>, vector<8x384xf32> -> vector<8x384xf32>
    %154 = vector.extract_strided_slice %153 {offsets = [0, 0], sizes = [8, 128], strides = [1, 1]} : vector<8x384xf32> to vector<8x128xf32>
    %155 = arith.addf %149, %154 : vector<8x128xf32>
    %156 = arith.negf %155 : vector<8x128xf32>
    %157 = math.exp %156 : vector<8x128xf32>
    %cst_44 = arith.constant 1.000000e+00 : f32
    %158 = vector.broadcast %cst_44 : f32 to vector<8x128xf32>
    %159 = arith.addf %158, %157 : vector<8x128xf32>
    %160 = arith.divf %158, %159 : vector<8x128xf32>
    %161 = vector.extract_strided_slice %153 {offsets = [0, 128], sizes = [8, 128], strides = [1, 1]} : vector<8x384xf32> to vector<8x128xf32>
    %162 = arith.addf %150, %161 : vector<8x128xf32>
    %163 = arith.negf %162 : vector<8x128xf32>
    %164 = math.exp %163 : vector<8x128xf32>
    %cst_45 = arith.constant 1.000000e+00 : f32
    %165 = vector.broadcast %cst_45 : f32 to vector<8x128xf32>
    %166 = arith.addf %165, %164 : vector<8x128xf32>
    %167 = arith.divf %165, %166 : vector<8x128xf32>
    %168 = vector.extract_strided_slice %153 {offsets = [0, 256], sizes = [8, 128], strides = [1, 1]} : vector<8x384xf32> to vector<8x128xf32>
    %169 = vector.broadcast %0 : vector<1x128xf32> to vector<8x128xf32>
    %170 = arith.addf %168, %169 : vector<8x128xf32>
    %171 = arith.mulf %160, %170 : vector<8x128xf32>
    %172 = arith.addf %151, %171 : vector<8x128xf32>
    %173 = math.tanh %172 : vector<8x128xf32>
    %174 = arith.subf %145, %173 : vector<8x128xf32>
    %175 = arith.mulf %167, %174 : vector<8x128xf32>
    %176 = arith.addf %173, %175 : vector<8x128xf32>
    %c40 = arith.constant 40 : index
    %c0_46 = arith.constant 0 : index
    %177 = vector.load %arg12[%c40, %c0_46] : memref<64x128xf32, #tpu.memory_space<vmem>>, vector<8x128xf32>
    tpu.vector_store %arg12[%c40, %c0_46], %176 {strides = array<i32>} : memref<64x128xf32, #tpu.memory_space<vmem>>, vector<8x128xf32>,
    %c6 = arith.constant 6 : index
    %c0_47 = arith.constant 0 : index
    %c0_48 = arith.constant 0 : index
    %178 = vector.load %arg1[%c6, %c0_47, %c0_48] : memref<8x8x384xf32, #tpu.memory_space<vmem>>, vector<1x8x384xf32>
    %179 = vector.shape_cast %178 : vector<1x8x384xf32> to vector<8x384xf32>
    %180 = vector.extract_strided_slice %179 {offsets = [0, 0], sizes = [8, 128], strides = [1, 1]} : vector<8x384xf32> to vector<8x128xf32>
    %181 = vector.extract_strided_slice %179 {offsets = [0, 128], sizes = [8, 128], strides = [1, 1]} : vector<8x384xf32> to vector<8x128xf32>
    %182 = vector.extract_strided_slice %179 {offsets = [0, 256], sizes = [8, 128], strides = [1, 1]} : vector<8x384xf32> to vector<8x128xf32>
    %c0_49 = arith.constant 0 : index
    %c0_50 = arith.constant 0 : index
    %183 = vector.load %arg2[%c0_49, %c0_50] : memref<128x384xf32, #tpu.memory_space<vmem>>, vector<128x384xf32>
    %cst_51 = arith.constant dense<0.000000e+00> : vector<8x384xf32>
    %184 = tpu.matmul %176, %183, %cst_51 {dimension_numbers = #tpu.dot_dimension_numbers<[1], [0], [0], [1], [0, 0, 1, 1], [], []>} : vector<8x128xf32>, vector<128x384xf32>, vector<8x384xf32> -> vector<8x384xf32>
    %185 = vector.extract_strided_slice %184 {offsets = [0, 0], sizes = [8, 128], strides = [1, 1]} : vector<8x384xf32> to vector<8x128xf32>
    %186 = arith.addf %180, %185 : vector<8x128xf32>
    %187 = arith.negf %186 : vector<8x128xf32>
    %188 = math.exp %187 : vector<8x128xf32>
    %cst_52 = arith.constant 1.000000e+00 : f32
    %189 = vector.broadcast %cst_52 : f32 to vector<8x128xf32>
    %190 = arith.addf %189, %188 : vector<8x128xf32>
    %191 = arith.divf %189, %190 : vector<8x128xf32>
    %192 = vector.extract_strided_slice %184 {offsets = [0, 128], sizes = [8, 128], strides = [1, 1]} : vector<8x384xf32> to vector<8x128xf32>
    %193 = arith.addf %181, %192 : vector<8x128xf32>
    %194 = arith.negf %193 : vector<8x128xf32>
    %195 = math.exp %194 : vector<8x128xf32>
    %cst_53 = arith.constant 1.000000e+00 : f32
    %196 = vector.broadcast %cst_53 : f32 to vector<8x128xf32>
    %197 = arith.addf %196, %195 : vector<8x128xf32>
    %198 = arith.divf %196, %197 : vector<8x128xf32>
    %199 = vector.extract_strided_slice %184 {offsets = [0, 256], sizes = [8, 128], strides = [1, 1]} : vector<8x384xf32> to vector<8x128xf32>
    %200 = vector.broadcast %0 : vector<1x128xf32> to vector<8x128xf32>
    %201 = arith.addf %199, %200 : vector<8x128xf32>
    %202 = arith.mulf %191, %201 : vector<8x128xf32>
    %203 = arith.addf %182, %202 : vector<8x128xf32>
    %204 = math.tanh %203 : vector<8x128xf32>
    %205 = arith.subf %176, %204 : vector<8x128xf32>
    %206 = arith.mulf %198, %205 : vector<8x128xf32>
    %207 = arith.addf %204, %206 : vector<8x128xf32>
    %c48 = arith.constant 48 : index
    %c0_54 = arith.constant 0 : index
    %208 = vector.load %arg12[%c48, %c0_54] : memref<64x128xf32, #tpu.memory_space<vmem>>, vector<8x128xf32>
    tpu.vector_store %arg12[%c48, %c0_54], %207 {strides = array<i32>} : memref<64x128xf32, #tpu.memory_space<vmem>>, vector<8x128xf32>,
    %c7 = arith.constant 7 : index
    %c0_55 = arith.constant 0 : index
    %c0_56 = arith.constant 0 : index
    %209 = vector.load %arg1[%c7, %c0_55, %c0_56] : memref<8x8x384xf32, #tpu.memory_space<vmem>>, vector<1x8x384xf32>
    %210 = vector.shape_cast %209 : vector<1x8x384xf32> to vector<8x384xf32>
    %211 = vector.extract_strided_slice %210 {offsets = [0, 0], sizes = [8, 128], strides = [1, 1]} : vector<8x384xf32> to vector<8x128xf32>
    %212 = vector.extract_strided_slice %210 {offsets = [0, 128], sizes = [8, 128], strides = [1, 1]} : vector<8x384xf32> to vector<8x128xf32>
    %213 = vector.extract_strided_slice %210 {offsets = [0, 256], sizes = [8, 128], strides = [1, 1]} : vector<8x384xf32> to vector<8x128xf32>
    %c0_57 = arith.constant 0 : index
    %c0_58 = arith.constant 0 : index
    %214 = vector.load %arg2[%c0_57, %c0_58] : memref<128x384xf32, #tpu.memory_space<vmem>>, vector<128x384xf32>
    %cst_59 = arith.constant dense<0.000000e+00> : vector<8x384xf32>
    %215 = tpu.matmul %207, %214, %cst_59 {dimension_numbers = #tpu.dot_dimension_numbers<[1], [0], [0], [1], [0, 0, 1, 1], [], []>} : vector<8x128xf32>, vector<128x384xf32>, vector<8x384xf32> -> vector<8x384xf32>
    %216 = vector.extract_strided_slice %215 {offsets = [0, 0], sizes = [8, 128], strides = [1, 1]} : vector<8x384xf32> to vector<8x128xf32>
    %217 = arith.addf %211, %216 : vector<8x128xf32>
    %218 = arith.negf %217 : vector<8x128xf32>
    %219 = math.exp %218 : vector<8x128xf32>
    %cst_60 = arith.constant 1.000000e+00 : f32
    %220 = vector.broadcast %cst_60 : f32 to vector<8x128xf32>
    %221 = arith.addf %220, %219 : vector<8x128xf32>
    %222 = arith.divf %220, %221 : vector<8x128xf32>
    %223 = vector.extract_strided_slice %215 {offsets = [0, 128], sizes = [8, 128], strides = [1, 1]} : vector<8x384xf32> to vector<8x128xf32>
    %224 = arith.addf %212, %223 : vector<8x128xf32>
    %225 = arith.negf %224 : vector<8x128xf32>
    %226 = math.exp %225 : vector<8x128xf32>
    %cst_61 = arith.constant 1.000000e+00 : f32
    %227 = vector.broadcast %cst_61 : f32 to vector<8x128xf32>
    %228 = arith.addf %227, %226 : vector<8x128xf32>
    %229 = arith.divf %227, %228 : vector<8x128xf32>
    %230 = vector.extract_strided_slice %215 {offsets = [0, 256], sizes = [8, 128], strides = [1, 1]} : vector<8x384xf32> to vector<8x128xf32>
    %231 = vector.broadcast %0 : vector<1x128xf32> to vector<8x128xf32>
    %232 = arith.addf %230, %231 : vector<8x128xf32>
    %233 = arith.mulf %222, %232 : vector<8x128xf32>
    %234 = arith.addf %213, %233 : vector<8x128xf32>
    %235 = math.tanh %234 : vector<8x128xf32>
    %236 = arith.subf %207, %235 : vector<8x128xf32>
    %237 = arith.mulf %229, %236 : vector<8x128xf32>
    %238 = arith.addf %235, %237 : vector<8x128xf32>
    %c56 = arith.constant 56 : index
    %c0_62 = arith.constant 0 : index
    %239 = vector.load %arg12[%c56, %c0_62] : memref<64x128xf32, #tpu.memory_space<vmem>>, vector<8x128xf32>
    tpu.vector_store %arg12[%c56, %c0_62], %238 {strides = array<i32>} : memref<64x128xf32, #tpu.memory_space<vmem>>, vector<8x128xf32>,
    %c0_63 = arith.constant 0 : index
    %c0_64 = arith.constant 0 : index
    %240 = vector.load %arg12[%c0_63, %c0_64] : memref<64x128xf32, #tpu.memory_space<vmem>>, vector<64x128xf32>
    %c0_65 = arith.constant 0 : index
    %c0_66 = arith.constant 0 : index
    %241 = vector.load %arg4[%c0_65, %c0_66] : memref<128x384xf32, #tpu.memory_space<vmem>>, vector<128x384xf32>
    %cst_67 = arith.constant dense<0.000000e+00> : vector<64x384xf32>
    %242 = tpu.matmul %240, %241, %cst_67 {dimension_numbers = #tpu.dot_dimension_numbers<[1], [0], [0], [1], [0, 0, 1, 1], [], []>} : vector<64x128xf32>, vector<128x384xf32>, vector<64x384xf32> -> vector<64x384xf32>
    %c0_68 = arith.constant 0 : index
    %c0_69 = arith.constant 0 : index
    %243 = vector.load %arg5[%c0_68, %c0_69] : memref<1x384xf32, #tpu.memory_space<vmem>>, vector<1x384xf32>
    %244 = vector.broadcast %243 : vector<1x384xf32> to vector<64x384xf32>
    %245 = arith.addf %242, %244 : vector<64x384xf32>
    %c0_70 = arith.constant 0 : index
    %c0_71 = arith.constant 0 : index
    %246 = vector.load %arg11[%c0_70, %c0_71] : memref<64x384xf32, #tpu.memory_space<vmem>>, vector<64x384xf32>
    tpu.vector_store %arg11[%c0_70, %c0_71], %245 {strides = array<i32>} : memref<64x384xf32, #tpu.memory_space<vmem>>, vector<64x384xf32>,
    %c0_72 = arith.constant 0 : index
    %c0_73 = arith.constant 0 : index
    %247 = vector.load %arg7[%c0_72, %c0_73] : memref<1x128xf32, #tpu.memory_space<vmem>>, vector<1x128xf32>
    %c0_74 = arith.constant 0 : index
    %c0_75 = arith.constant 0 : index
    %248 = vector.load %arg11[%c0_74, %c0_75] : memref<64x384xf32, #tpu.memory_space<vmem>>, vector<8x384xf32>
    %249 = vector.extract_strided_slice %248 {offsets = [0, 0], sizes = [8, 128], strides = [1, 1]} : vector<8x384xf32> to vector<8x128xf32>
    %250 = vector.extract_strided_slice %248 {offsets = [0, 128], sizes = [8, 128], strides = [1, 1]} : vector<8x384xf32> to vector<8x128xf32>
    %251 = vector.extract_strided_slice %248 {offsets = [0, 256], sizes = [8, 128], strides = [1, 1]} : vector<8x384xf32> to vector<8x128xf32>
    %252 = arith.negf %249 : vector<8x128xf32>
    %253 = math.exp %252 : vector<8x128xf32>
    %cst_76 = arith.constant 1.000000e+00 : f32
    %254 = vector.broadcast %cst_76 : f32 to vector<8x128xf32>
    %255 = arith.addf %254, %253 : vector<8x128xf32>
    %256 = arith.divf %254, %255 : vector<8x128xf32>
    %257 = arith.negf %250 : vector<8x128xf32>
    %258 = math.exp %257 : vector<8x128xf32>
    %cst_77 = arith.constant 1.000000e+00 : f32
    %259 = vector.broadcast %cst_77 : f32 to vector<8x128xf32>
    %260 = arith.addf %259, %258 : vector<8x128xf32>
    %261 = arith.divf %259, %260 : vector<8x128xf32>
    %262 = vector.broadcast %247 : vector<1x128xf32> to vector<8x128xf32>
    %263 = arith.mulf %256, %262 : vector<8x128xf32>
    %264 = arith.addf %251, %263 : vector<8x128xf32>
    %265 = math.tanh %264 : vector<8x128xf32>
    %266 = arith.mulf %261, %265 : vector<8x128xf32>
    %267 = arith.subf %265, %266 : vector<8x128xf32>
    %c8_78 = arith.constant 8 : index
    %c0_79 = arith.constant 0 : index
    %268 = vector.load %arg11[%c8_78, %c0_79] : memref<64x384xf32, #tpu.memory_space<vmem>>, vector<8x384xf32>
    %269 = vector.extract_strided_slice %268 {offsets = [0, 0], sizes = [8, 128], strides = [1, 1]} : vector<8x384xf32> to vector<8x128xf32>
    %270 = vector.extract_strided_slice %268 {offsets = [0, 128], sizes = [8, 128], strides = [1, 1]} : vector<8x384xf32> to vector<8x128xf32>
    %271 = vector.extract_strided_slice %268 {offsets = [0, 256], sizes = [8, 128], strides = [1, 1]} : vector<8x384xf32> to vector<8x128xf32>
    %c0_80 = arith.constant 0 : index
    %c0_81 = arith.constant 0 : index
    %272 = vector.load %arg6[%c0_80, %c0_81] : memref<128x384xf32, #tpu.memory_space<vmem>>, vector<128x384xf32>
    %cst_82 = arith.constant dense<0.000000e+00> : vector<8x384xf32>
    %273 = tpu.matmul %267, %272, %cst_82 {dimension_numbers = #tpu.dot_dimension_numbers<[1], [0], [0], [1], [0, 0, 1, 1], [], []>} : vector<8x128xf32>, vector<128x384xf32>, vector<8x384xf32> -> vector<8x384xf32>
    %274 = vector.extract_strided_slice %273 {offsets = [0, 0], sizes = [8, 128], strides = [1, 1]} : vector<8x384xf32> to vector<8x128xf32>
    %275 = arith.addf %269, %274 : vector<8x128xf32>
    %276 = arith.negf %275 : vector<8x128xf32>
    %277 = math.exp %276 : vector<8x128xf32>
    %cst_83 = arith.constant 1.000000e+00 : f32
    %278 = vector.broadcast %cst_83 : f32 to vector<8x128xf32>
    %279 = arith.addf %278, %277 : vector<8x128xf32>
    %280 = arith.divf %278, %279 : vector<8x128xf32>
    %281 = vector.extract_strided_slice %273 {offsets = [0, 128], sizes = [8, 128], strides = [1, 1]} : vector<8x384xf32> to vector<8x128xf32>
    %282 = arith.addf %270, %281 : vector<8x128xf32>
    %283 = arith.negf %282 : vector<8x128xf32>
    %284 = math.exp %283 : vector<8x128xf32>
    %cst_84 = arith.constant 1.000000e+00 : f32
    %285 = vector.broadcast %cst_84 : f32 to vector<8x128xf32>
    %286 = arith.addf %285, %284 : vector<8x128xf32>
    %287 = arith.divf %285, %286 : vector<8x128xf32>
    %288 = vector.extract_strided_slice %273 {offsets = [0, 256], sizes = [8, 128], strides = [1, 1]} : vector<8x384xf32> to vector<8x128xf32>
    %289 = vector.broadcast %247 : vector<1x128xf32> to vector<8x128xf32>
    %290 = arith.addf %288, %289 : vector<8x128xf32>
    %291 = arith.mulf %280, %290 : vector<8x128xf32>
    %292 = arith.addf %271, %291 : vector<8x128xf32>
    %293 = math.tanh %292 : vector<8x128xf32>
    %294 = arith.subf %267, %293 : vector<8x128xf32>
    %295 = arith.mulf %287, %294 : vector<8x128xf32>
    %296 = arith.addf %293, %295 : vector<8x128xf32>
    %c16_85 = arith.constant 16 : index
    %c0_86 = arith.constant 0 : index
    %297 = vector.load %arg11[%c16_85, %c0_86] : memref<64x384xf32, #tpu.memory_space<vmem>>, vector<8x384xf32>
    %298 = vector.extract_strided_slice %297 {offsets = [0, 0], sizes = [8, 128], strides = [1, 1]} : vector<8x384xf32> to vector<8x128xf32>
    %299 = vector.extract_strided_slice %297 {offsets = [0, 128], sizes = [8, 128], strides = [1, 1]} : vector<8x384xf32> to vector<8x128xf32>
    %300 = vector.extract_strided_slice %297 {offsets = [0, 256], sizes = [8, 128], strides = [1, 1]} : vector<8x384xf32> to vector<8x128xf32>
    %c0_87 = arith.constant 0 : index
    %c0_88 = arith.constant 0 : index
    %301 = vector.load %arg6[%c0_87, %c0_88] : memref<128x384xf32, #tpu.memory_space<vmem>>, vector<128x384xf32>
    %cst_89 = arith.constant dense<0.000000e+00> : vector<8x384xf32>
    %302 = tpu.matmul %296, %301, %cst_89 {dimension_numbers = #tpu.dot_dimension_numbers<[1], [0], [0], [1], [0, 0, 1, 1], [], []>} : vector<8x128xf32>, vector<128x384xf32>, vector<8x384xf32> -> vector<8x384xf32>
    %303 = vector.extract_strided_slice %302 {offsets = [0, 0], sizes = [8, 128], strides = [1, 1]} : vector<8x384xf32> to vector<8x128xf32>
    %304 = arith.addf %298, %303 : vector<8x128xf32>
    %305 = arith.negf %304 : vector<8x128xf32>
    %306 = math.exp %305 : vector<8x128xf32>
    %cst_90 = arith.constant 1.000000e+00 : f32
    %307 = vector.broadcast %cst_90 : f32 to vector<8x128xf32>
    %308 = arith.addf %307, %306 : vector<8x128xf32>
    %309 = arith.divf %307, %308 : vector<8x128xf32>
    %310 = vector.extract_strided_slice %302 {offsets = [0, 128], sizes = [8, 128], strides = [1, 1]} : vector<8x384xf32> to vector<8x128xf32>
    %311 = arith.addf %299, %310 : vector<8x128xf32>
    %312 = arith.negf %311 : vector<8x128xf32>
    %313 = math.exp %312 : vector<8x128xf32>
    %cst_91 = arith.constant 1.000000e+00 : f32
    %314 = vector.broadcast %cst_91 : f32 to vector<8x128xf32>
    %315 = arith.addf %314, %313 : vector<8x128xf32>
    %316 = arith.divf %314, %315 : vector<8x128xf32>
    %317 = vector.extract_strided_slice %302 {offsets = [0, 256], sizes = [8, 128], strides = [1, 1]} : vector<8x384xf32> to vector<8x128xf32>
    %318 = vector.broadcast %247 : vector<1x128xf32> to vector<8x128xf32>
    %319 = arith.addf %317, %318 : vector<8x128xf32>
    %320 = arith.mulf %309, %319 : vector<8x128xf32>
    %321 = arith.addf %300, %320 : vector<8x128xf32>
    %322 = math.tanh %321 : vector<8x128xf32>
    %323 = arith.subf %296, %322 : vector<8x128xf32>
    %324 = arith.mulf %316, %323 : vector<8x128xf32>
    %325 = arith.addf %322, %324 : vector<8x128xf32>
    %c24_92 = arith.constant 24 : index
    %c0_93 = arith.constant 0 : index
    %326 = vector.load %arg11[%c24_92, %c0_93] : memref<64x384xf32, #tpu.memory_space<vmem>>, vector<8x384xf32>
    %327 = vector.extract_strided_slice %326 {offsets = [0, 0], sizes = [8, 128], strides = [1, 1]} : vector<8x384xf32> to vector<8x128xf32>
    %328 = vector.extract_strided_slice %326 {offsets = [0, 128], sizes = [8, 128], strides = [1, 1]} : vector<8x384xf32> to vector<8x128xf32>
    %329 = vector.extract_strided_slice %326 {offsets = [0, 256], sizes = [8, 128], strides = [1, 1]} : vector<8x384xf32> to vector<8x128xf32>
    %c0_94 = arith.constant 0 : index
    %c0_95 = arith.constant 0 : index
    %330 = vector.load %arg6[%c0_94, %c0_95] : memref<128x384xf32, #tpu.memory_space<vmem>>, vector<128x384xf32>
    %cst_96 = arith.constant dense<0.000000e+00> : vector<8x384xf32>
    %331 = tpu.matmul %325, %330, %cst_96 {dimension_numbers = #tpu.dot_dimension_numbers<[1], [0], [0], [1], [0, 0, 1, 1], [], []>} : vector<8x128xf32>, vector<128x384xf32>, vector<8x384xf32> -> vector<8x384xf32>
    %332 = vector.extract_strided_slice %331 {offsets = [0, 0], sizes = [8, 128], strides = [1, 1]} : vector<8x384xf32> to vector<8x128xf32>
    %333 = arith.addf %327, %332 : vector<8x128xf32>
    %334 = arith.negf %333 : vector<8x128xf32>
    %335 = math.exp %334 : vector<8x128xf32>
    %cst_97 = arith.constant 1.000000e+00 : f32
    %336 = vector.broadcast %cst_97 : f32 to vector<8x128xf32>
    %337 = arith.addf %336, %335 : vector<8x128xf32>
    %338 = arith.divf %336, %337 : vector<8x128xf32>
    %339 = vector.extract_strided_slice %331 {offsets = [0, 128], sizes = [8, 128], strides = [1, 1]} : vector<8x384xf32> to vector<8x128xf32>
    %340 = arith.addf %328, %339 : vector<8x128xf32>
    %341 = arith.negf %340 : vector<8x128xf32>
    %342 = math.exp %341 : vector<8x128xf32>
    %cst_98 = arith.constant 1.000000e+00 : f32
    %343 = vector.broadcast %cst_98 : f32 to vector<8x128xf32>
    %344 = arith.addf %343, %342 : vector<8x128xf32>
    %345 = arith.divf %343, %344 : vector<8x128xf32>
    %346 = vector.extract_strided_slice %331 {offsets = [0, 256], sizes = [8, 128], strides = [1, 1]} : vector<8x384xf32> to vector<8x128xf32>
    %347 = vector.broadcast %247 : vector<1x128xf32> to vector<8x128xf32>
    %348 = arith.addf %346, %347 : vector<8x128xf32>
    %349 = arith.mulf %338, %348 : vector<8x128xf32>
    %350 = arith.addf %329, %349 : vector<8x128xf32>
    %351 = math.tanh %350 : vector<8x128xf32>
    %352 = arith.subf %325, %351 : vector<8x128xf32>
    %353 = arith.mulf %345, %352 : vector<8x128xf32>
    %354 = arith.addf %351, %353 : vector<8x128xf32>
    %c32_99 = arith.constant 32 : index
    %c0_100 = arith.constant 0 : index
    %355 = vector.load %arg11[%c32_99, %c0_100] : memref<64x384xf32, #tpu.memory_space<vmem>>, vector<8x384xf32>
    %356 = vector.extract_strided_slice %355 {offsets = [0, 0], sizes = [8, 128], strides = [1, 1]} : vector<8x384xf32> to vector<8x128xf32>
    %357 = vector.extract_strided_slice %355 {offsets = [0, 128], sizes = [8, 128], strides = [1, 1]} : vector<8x384xf32> to vector<8x128xf32>
    %358 = vector.extract_strided_slice %355 {offsets = [0, 256], sizes = [8, 128], strides = [1, 1]} : vector<8x384xf32> to vector<8x128xf32>
    %c0_101 = arith.constant 0 : index
    %c0_102 = arith.constant 0 : index
    %359 = vector.load %arg6[%c0_101, %c0_102] : memref<128x384xf32, #tpu.memory_space<vmem>>, vector<128x384xf32>
    %cst_103 = arith.constant dense<0.000000e+00> : vector<8x384xf32>
    %360 = tpu.matmul %354, %359, %cst_103 {dimension_numbers = #tpu.dot_dimension_numbers<[1], [0], [0], [1], [0, 0, 1, 1], [], []>} : vector<8x128xf32>, vector<128x384xf32>, vector<8x384xf32> -> vector<8x384xf32>
    %361 = vector.extract_strided_slice %360 {offsets = [0, 0], sizes = [8, 128], strides = [1, 1]} : vector<8x384xf32> to vector<8x128xf32>
    %362 = arith.addf %356, %361 : vector<8x128xf32>
    %363 = arith.negf %362 : vector<8x128xf32>
    %364 = math.exp %363 : vector<8x128xf32>
    %cst_104 = arith.constant 1.000000e+00 : f32
    %365 = vector.broadcast %cst_104 : f32 to vector<8x128xf32>
    %366 = arith.addf %365, %364 : vector<8x128xf32>
    %367 = arith.divf %365, %366 : vector<8x128xf32>
    %368 = vector.extract_strided_slice %360 {offsets = [0, 128], sizes = [8, 128], strides = [1, 1]} : vector<8x384xf32> to vector<8x128xf32>
    %369 = arith.addf %357, %368 : vector<8x128xf32>
    %370 = arith.negf %369 : vector<8x128xf32>
    %371 = math.exp %370 : vector<8x128xf32>
    %cst_105 = arith.constant 1.000000e+00 : f32
    %372 = vector.broadcast %cst_105 : f32 to vector<8x128xf32>
    %373 = arith.addf %372, %371 : vector<8x128xf32>
    %374 = arith.divf %372, %373 : vector<8x128xf32>
    %375 = vector.extract_strided_slice %360 {offsets = [0, 256], sizes = [8, 128], strides = [1, 1]} : vector<8x384xf32> to vector<8x128xf32>
    %376 = vector.broadcast %247 : vector<1x128xf32> to vector<8x128xf32>
    %377 = arith.addf %375, %376 : vector<8x128xf32>
    %378 = arith.mulf %367, %377 : vector<8x128xf32>
    %379 = arith.addf %358, %378 : vector<8x128xf32>
    %380 = math.tanh %379 : vector<8x128xf32>
    %381 = arith.subf %354, %380 : vector<8x128xf32>
    %382 = arith.mulf %374, %381 : vector<8x128xf32>
    %383 = arith.addf %380, %382 : vector<8x128xf32>
    %c40_106 = arith.constant 40 : index
    %c0_107 = arith.constant 0 : index
    %384 = vector.load %arg11[%c40_106, %c0_107] : memref<64x384xf32, #tpu.memory_space<vmem>>, vector<8x384xf32>
    %385 = vector.extract_strided_slice %384 {offsets = [0, 0], sizes = [8, 128], strides = [1, 1]} : vector<8x384xf32> to vector<8x128xf32>
    %386 = vector.extract_strided_slice %384 {offsets = [0, 128], sizes = [8, 128], strides = [1, 1]} : vector<8x384xf32> to vector<8x128xf32>
    %387 = vector.extract_strided_slice %384 {offsets = [0, 256], sizes = [8, 128], strides = [1, 1]} : vector<8x384xf32> to vector<8x128xf32>
    %c0_108 = arith.constant 0 : index
    %c0_109 = arith.constant 0 : index
    %388 = vector.load %arg6[%c0_108, %c0_109] : memref<128x384xf32, #tpu.memory_space<vmem>>, vector<128x384xf32>
    %cst_110 = arith.constant dense<0.000000e+00> : vector<8x384xf32>
    %389 = tpu.matmul %383, %388, %cst_110 {dimension_numbers = #tpu.dot_dimension_numbers<[1], [0], [0], [1], [0, 0, 1, 1], [], []>} : vector<8x128xf32>, vector<128x384xf32>, vector<8x384xf32> -> vector<8x384xf32>
    %390 = vector.extract_strided_slice %389 {offsets = [0, 0], sizes = [8, 128], strides = [1, 1]} : vector<8x384xf32> to vector<8x128xf32>
    %391 = arith.addf %385, %390 : vector<8x128xf32>
    %392 = arith.negf %391 : vector<8x128xf32>
    %393 = math.exp %392 : vector<8x128xf32>
    %cst_111 = arith.constant 1.000000e+00 : f32
    %394 = vector.broadcast %cst_111 : f32 to vector<8x128xf32>
    %395 = arith.addf %394, %393 : vector<8x128xf32>
    %396 = arith.divf %394, %395 : vector<8x128xf32>
    %397 = vector.extract_strided_slice %389 {offsets = [0, 128], sizes = [8, 128], strides = [1, 1]} : vector<8x384xf32> to vector<8x128xf32>
    %398 = arith.addf %386, %397 : vector<8x128xf32>
    %399 = arith.negf %398 : vector<8x128xf32>
    %400 = math.exp %399 : vector<8x128xf32>
    %cst_112 = arith.constant 1.000000e+00 : f32
    %401 = vector.broadcast %cst_112 : f32 to vector<8x128xf32>
    %402 = arith.addf %401, %400 : vector<8x128xf32>
    %403 = arith.divf %401, %402 : vector<8x128xf32>
    %404 = vector.extract_strided_slice %389 {offsets = [0, 256], sizes = [8, 128], strides = [1, 1]} : vector<8x384xf32> to vector<8x128xf32>
    %405 = vector.broadcast %247 : vector<1x128xf32> to vector<8x128xf32>
    %406 = arith.addf %404, %405 : vector<8x128xf32>
    %407 = arith.mulf %396, %406 : vector<8x128xf32>
    %408 = arith.addf %387, %407 : vector<8x128xf32>
    %409 = math.tanh %408 : vector<8x128xf32>
    %410 = arith.subf %383, %409 : vector<8x128xf32>
    %411 = arith.mulf %403, %410 : vector<8x128xf32>
    %412 = arith.addf %409, %411 : vector<8x128xf32>
    %c48_113 = arith.constant 48 : index
    %c0_114 = arith.constant 0 : index
    %413 = vector.load %arg11[%c48_113, %c0_114] : memref<64x384xf32, #tpu.memory_space<vmem>>, vector<8x384xf32>
    %414 = vector.extract_strided_slice %413 {offsets = [0, 0], sizes = [8, 128], strides = [1, 1]} : vector<8x384xf32> to vector<8x128xf32>
    %415 = vector.extract_strided_slice %413 {offsets = [0, 128], sizes = [8, 128], strides = [1, 1]} : vector<8x384xf32> to vector<8x128xf32>
    %416 = vector.extract_strided_slice %413 {offsets = [0, 256], sizes = [8, 128], strides = [1, 1]} : vector<8x384xf32> to vector<8x128xf32>
    %c0_115 = arith.constant 0 : index
    %c0_116 = arith.constant 0 : index
    %417 = vector.load %arg6[%c0_115, %c0_116] : memref<128x384xf32, #tpu.memory_space<vmem>>, vector<128x384xf32>
    %cst_117 = arith.constant dense<0.000000e+00> : vector<8x384xf32>
    %418 = tpu.matmul %412, %417, %cst_117 {dimension_numbers = #tpu.dot_dimension_numbers<[1], [0], [0], [1], [0, 0, 1, 1], [], []>} : vector<8x128xf32>, vector<128x384xf32>, vector<8x384xf32> -> vector<8x384xf32>
    %419 = vector.extract_strided_slice %418 {offsets = [0, 0], sizes = [8, 128], strides = [1, 1]} : vector<8x384xf32> to vector<8x128xf32>
    %420 = arith.addf %414, %419 : vector<8x128xf32>
    %421 = arith.negf %420 : vector<8x128xf32>
    %422 = math.exp %421 : vector<8x128xf32>
    %cst_118 = arith.constant 1.000000e+00 : f32
    %423 = vector.broadcast %cst_118 : f32 to vector<8x128xf32>
    %424 = arith.addf %423, %422 : vector<8x128xf32>
    %425 = arith.divf %423, %424 : vector<8x128xf32>
    %426 = vector.extract_strided_slice %418 {offsets = [0, 128], sizes = [8, 128], strides = [1, 1]} : vector<8x384xf32> to vector<8x128xf32>
    %427 = arith.addf %415, %426 : vector<8x128xf32>
    %428 = arith.negf %427 : vector<8x128xf32>
    %429 = math.exp %428 : vector<8x128xf32>
    %cst_119 = arith.constant 1.000000e+00 : f32
    %430 = vector.broadcast %cst_119 : f32 to vector<8x128xf32>
    %431 = arith.addf %430, %429 : vector<8x128xf32>
    %432 = arith.divf %430, %431 : vector<8x128xf32>
    %433 = vector.extract_strided_slice %418 {offsets = [0, 256], sizes = [8, 128], strides = [1, 1]} : vector<8x384xf32> to vector<8x128xf32>
    %434 = vector.broadcast %247 : vector<1x128xf32> to vector<8x128xf32>
    %435 = arith.addf %433, %434 : vector<8x128xf32>
    %436 = arith.mulf %425, %435 : vector<8x128xf32>
    %437 = arith.addf %416, %436 : vector<8x128xf32>
    %438 = math.tanh %437 : vector<8x128xf32>
    %439 = arith.subf %412, %438 : vector<8x128xf32>
    %440 = arith.mulf %432, %439 : vector<8x128xf32>
    %441 = arith.addf %438, %440 : vector<8x128xf32>
    %c56_120 = arith.constant 56 : index
    %c0_121 = arith.constant 0 : index
    %442 = vector.load %arg11[%c56_120, %c0_121] : memref<64x384xf32, #tpu.memory_space<vmem>>, vector<8x384xf32>
    %443 = vector.extract_strided_slice %442 {offsets = [0, 0], sizes = [8, 128], strides = [1, 1]} : vector<8x384xf32> to vector<8x128xf32>
    %444 = vector.extract_strided_slice %442 {offsets = [0, 128], sizes = [8, 128], strides = [1, 1]} : vector<8x384xf32> to vector<8x128xf32>
    %445 = vector.extract_strided_slice %442 {offsets = [0, 256], sizes = [8, 128], strides = [1, 1]} : vector<8x384xf32> to vector<8x128xf32>
    %c0_122 = arith.constant 0 : index
    %c0_123 = arith.constant 0 : index
    %446 = vector.load %arg6[%c0_122, %c0_123] : memref<128x384xf32, #tpu.memory_space<vmem>>, vector<128x384xf32>
    %cst_124 = arith.constant dense<0.000000e+00> : vector<8x384xf32>
    %447 = tpu.matmul %441, %446, %cst_124 {dimension_numbers = #tpu.dot_dimension_numbers<[1], [0], [0], [1], [0, 0, 1, 1], [], []>} : vector<8x128xf32>, vector<128x384xf32>, vector<8x384xf32> -> vector<8x384xf32>
    %448 = vector.extract_strided_slice %447 {offsets = [0, 0], sizes = [8, 128], strides = [1, 1]} : vector<8x384xf32> to vector<8x128xf32>
    %449 = arith.addf %443, %448 : vector<8x128xf32>
    %450 = arith.negf %449 : vector<8x128xf32>
    %451 = math.exp %450 : vector<8x128xf32>
    %cst_125 = arith.constant 1.000000e+00 : f32
    %452 = vector.broadcast %cst_125 : f32 to vector<8x128xf32>
    %453 = arith.addf %452, %451 : vector<8x128xf32>
    %454 = arith.divf %452, %453 : vector<8x128xf32>
    %455 = vector.extract_strided_slice %447 {offsets = [0, 128], sizes = [8, 128], strides = [1, 1]} : vector<8x384xf32> to vector<8x128xf32>
    %456 = arith.addf %444, %455 : vector<8x128xf32>
    %457 = arith.negf %456 : vector<8x128xf32>
    %458 = math.exp %457 : vector<8x128xf32>
    %cst_126 = arith.constant 1.000000e+00 : f32
    %459 = vector.broadcast %cst_126 : f32 to vector<8x128xf32>
    %460 = arith.addf %459, %458 : vector<8x128xf32>
    %461 = arith.divf %459, %460 : vector<8x128xf32>
    %462 = vector.extract_strided_slice %447 {offsets = [0, 256], sizes = [8, 128], strides = [1, 1]} : vector<8x384xf32> to vector<8x128xf32>
    %463 = vector.broadcast %247 : vector<1x128xf32> to vector<8x128xf32>
    %464 = arith.addf %462, %463 : vector<8x128xf32>
    %465 = arith.mulf %454, %464 : vector<8x128xf32>
    %466 = arith.addf %445, %465 : vector<8x128xf32>
    %467 = math.tanh %466 : vector<8x128xf32>
    %468 = arith.subf %441, %467 : vector<8x128xf32>
    %469 = arith.mulf %461, %468 : vector<8x128xf32>
    %470 = arith.addf %467, %469 : vector<8x128xf32>
    %c0_127 = arith.constant 0 : index
    %c0_128 = arith.constant 0 : index
    %471 = vector.load %arg8[%c0_127, %c0_128] : memref<128x128xf32, #tpu.memory_space<vmem>>, vector<128x128xf32>
    %cst_129 = arith.constant dense<0.000000e+00> : vector<8x128xf32>
    %472 = tpu.matmul %470, %471, %cst_129 {dimension_numbers = #tpu.dot_dimension_numbers<[1], [0], [0], [1], [0, 0, 1, 1], [], []>} : vector<8x128xf32>, vector<128x128xf32>, vector<8x128xf32> -> vector<8x128xf32>
    %c0_130 = arith.constant 0 : index
    %c0_131 = arith.constant 0 : index
    %473 = vector.load %arg9[%c0_130, %c0_131] : memref<1x128xf32, #tpu.memory_space<vmem>>, vector<1x128xf32>
    %474 = vector.broadcast %473 : vector<1x128xf32> to vector<8x128xf32>
    %475 = arith.addf %472, %474 : vector<8x128xf32>
    %476 = math.tanh %475 : vector<8x128xf32>
    %c0_132 = arith.constant 0 : index
    %c0_133 = arith.constant 0 : index
    %477 = vector.load %arg10[%c0_132, %c0_133] : memref<8x128xf32, #tpu.memory_space<vmem>>, vector<8x128xf32>
    tpu.vector_store %arg10[%c0_132, %c0_133], %476 {strides = array<i32>} : memref<8x128xf32, #tpu.memory_space<vmem>>, vector<8x128xf32>,
    return
  }
  func.func @transform_0(%arg0: i32) -> (i32, i32, i32) {
    %c0_i32 = arith.constant 0 : i32
    %c0_i32_0 = arith.constant 0 : i32
    %c0_i32_1 = arith.constant 0 : i32
    return %c0_i32, %arg0, %c0_i32_0 : i32, i32, i32
  }
  func.func @transform_1(%arg0: i32) -> (i32, i32) {
    %c0_i32 = arith.constant 0 : i32
    %c0_i32_0 = arith.constant 0 : i32
    %c0_i32_1 = arith.constant 0 : i32
    return %c0_i32, %c0_i32_0 : i32, i32
  }
  func.func @transform_2(%arg0: i32) -> (i32, i32) {
    %c0_i32 = arith.constant 0 : i32
    %c0_i32_0 = arith.constant 0 : i32
    %c0_i32_1 = arith.constant 0 : i32
    return %c0_i32, %c0_i32_0 : i32, i32
  }
  func.func @transform_3(%arg0: i32) -> (i32, i32) {
    %c0_i32 = arith.constant 0 : i32
    %c0_i32_0 = arith.constant 0 : i32
    %c0_i32_1 = arith.constant 0 : i32
    return %c0_i32, %c0_i32_0 : i32, i32
  }
  func.func @transform_4(%arg0: i32) -> (i32, i32) {
    %c0_i32 = arith.constant 0 : i32
    %c0_i32_0 = arith.constant 0 : i32
    %c0_i32_1 = arith.constant 0 : i32
    return %c0_i32, %c0_i32_0 : i32, i32
  }
  func.func @transform_5(%arg0: i32) -> (i32, i32) {
    %c0_i32 = arith.constant 0 : i32
    %c0_i32_0 = arith.constant 0 : i32
    %c0_i32_1 = arith.constant 0 : i32
    return %c0_i32, %c0_i32_0 : i32, i32
  }
  func.func @transform_6(%arg0: i32) -> (i32, i32) {
    %c0_i32 = arith.constant 0 : i32
    %c0_i32_0 = arith.constant 0 : i32
    %c0_i32_1 = arith.constant 0 : i32
    return %c0_i32, %c0_i32_0 : i32, i32
  }
  func.func @transform_7(%arg0: i32) -> (i32, i32) {
    %c0_i32 = arith.constant 0 : i32
    %c0_i32_0 = arith.constant 0 : i32
    %c0_i32_1 = arith.constant 0 : i32
    return %c0_i32, %c0_i32_0 : i32, i32
  }
  func.func @transform_8(%arg0: i32) -> (i32, i32) {
    %c0_i32 = arith.constant 0 : i32
    %c0_i32_0 = arith.constant 0 : i32
    %c0_i32_1 = arith.constant 0 : i32
    return %c0_i32, %c0_i32_0 : i32, i32
  }
  func.func @transform_9(%arg0: i32) -> (i32, i32) {
    %c0_i32 = arith.constant 0 : i32
    %c0_i32_0 = arith.constant 0 : i32
    return %arg0, %c0_i32 : i32, i32
  }
}

</mosaic_0001>

<llo_original>
// kernel: custom_gru_model_forward.1
$region0: #{custom_gru_model_forward.1}
  #allocation0 [shape = 'u32[]', space=smem, size = 0x4, offset = 0x4, fixed_abs, tag = 'smem constant byte address 0x4 - core index']
  #allocation1 [shape = 'u32[72,128]{1,0:T(1,128)}', space=vmem, size = 0x9000, scoped, tag = 'internal scratch']
  #allocation2 [shape = 'f32[64,384]{1,0:T(8,128)}', space=vmem, size = 0x18000, scoped, tag = 'scratch operand']
  #allocation3 [shape = 'f32[64,128]{1,0:T(8,128)}', space=vmem, size = 0x8000, scoped, tag = 'scratch operand']
  %s0 = inlined_call_operand.vmem [shape: f32[8,8,384], index: 0, kind: input, shape index: {}]
  %s1 = inlined_call_operand.vmem [shape: f32[128,384], index: 1, kind: input, shape index: {}]
  %s2 = inlined_call_operand.vmem [shape: f32[1,128], index: 2, kind: input, shape index: {}]
  %s3 = inlined_call_operand.hbm [shape: f32[128,384], index: 3, kind: input, shape index: {}]
  %s4 = inlined_call_operand.vmem [shape: f32[1,384], index: 4, kind: input, shape index: {}]
  %s5 = inlined_call_operand.hbm [shape: f32[128,384], index: 5, kind: input, shape index: {}]
  %s6 = inlined_call_operand.vmem [shape: f32[1,128], index: 6, kind: input, shape index: {}]
  %s7 = inlined_call_operand.vmem [shape: f32[128,128], index: 7, kind: input, shape index: {}]
  %s8 = inlined_call_operand.vmem [shape: f32[1,128], index: 8, kind: input, shape index: {}]
  %s9 = inlined_call_operand.vmem [shape: f32[8,128], index: 9, kind: output, shape index: {}]
  %s10 = sld [smem:[#allocation0]]
  $region54: #{custom_gru_model_forward.1} parent=0
    _
  %s12 = ssub.s32 1, %s10
  %s13 = scalar_select 0, %s12, %s10
  $region1: #{custom_gru_model_forward.1} parent=0
    #allocation4 [shape = 'u8[196608]{0}', space=vmem, size = 0x30000, scoped, tag = 'input window, operand 3, single buffered']
    #allocation5 [shape = 's32[1]{0}', space=sflag, size = 0x4, scoped, tag = 'scoped memory for custom_gru_model_forward.1']
    #allocation6 [shape = 'u8[196608]{0}', space=vmem, size = 0x30000, scoped, tag = 'input window, operand 5, single buffered']
    #allocation7 [shape = 's32[1]{0}', space=sflag, size = 0x4, scoped, tag = 'scoped memory for custom_gru_model_forward.1']
    %14 = vsyncpa [#allocation5], 0
    %15 = vsyncpa [#allocation7], 0
    // Predicated region
    $region2: #{custom_gru_model_forward.1} parent=1 // pred_check
      _
    $region3: #{custom_gru_model_forward.1} parent=1 // pred_check_branch
      %17 = sbr.rel (0) target = $region5
    $region4: #{custom_gru_model_forward.1} parent=1 // pred_region
      _
    $region5: #{custom_gru_model_forward.1} parent=1 // pred_fallthru
      _
    // Predicated region
    $region6: #{custom_gru_model_forward.1} parent=1 // pred_check
      _
    $region7: #{custom_gru_model_forward.1} parent=1 // pred_check_branch
      %19 = sbr.rel (0) target = $region9
    $region8: #{custom_gru_model_forward.1} parent=1 // pred_region
      _
    $region9: #{custom_gru_model_forward.1} parent=1 // pred_fallthru
      _
    // Predicated region
    $region10: #{custom_gru_model_forward.1} parent=1 // pred_check
      _
    $region11: #{custom_gru_model_forward.1} parent=1 // pred_check_branch
      %21 = sbr.rel (0) target = $region13
    $region12: #{custom_gru_model_forward.1} parent=1 // pred_region
      _
    $region13: #{custom_gru_model_forward.1} parent=1 // pred_fallthru
      _
    // Predicated region
    $region14: #{custom_gru_model_forward.1} parent=1 // pred_check
      _
    $region15: #{custom_gru_model_forward.1} parent=1 // pred_check_branch
      %23 = sbr.rel (0) target = $region17
    $region16: #{custom_gru_model_forward.1} parent=1 // pred_region
      %25 = vsyncadd [#allocation5], 0
      %s26 = sshll.u32 %s3, 4
      %s27 = int_to_ptr.hbm [resolvable:$true] %s26
      %s28 = sshll.u32 [#allocation4], 4
      %s29 = int_to_ptr.vmem [resolvable:$true] %s28
      %34 = dma.hbm_to_vmem [thread:$0]  %s27, 6144, %s29, [#allocation5], 384, 384, 24
    $region17: #{custom_gru_model_forward.1} parent=1 // pred_fallthru
      _
    // Predicated region
    $region18: #{custom_gru_model_forward.1} parent=1 // pred_check
      _
    $region19: #{custom_gru_model_forward.1} parent=1 // pred_check_branch
      %36 = sbr.rel (0) target = $region21
    $region20: #{custom_gru_model_forward.1} parent=1 // pred_region
      _
    $region21: #{custom_gru_model_forward.1} parent=1 // pred_fallthru
      _
    // Predicated region
    $region22: #{custom_gru_model_forward.1} parent=1 // pred_check
      _
    $region23: #{custom_gru_model_forward.1} parent=1 // pred_check_branch
      %38 = sbr.rel (0) target = $region25
    $region24: #{custom_gru_model_forward.1} parent=1 // pred_region
      %40 = vsyncadd [#allocation7], 0
      %s41 = sshll.u32 %s5, 4
      %s42 = int_to_ptr.hbm [resolvable:$true] %s41
      %s43 = sshll.u32 [#allocation6], 4
      %s44 = int_to_ptr.vmem [resolvable:$true] %s43
      %49 = dma.hbm_to_vmem [thread:$0]  %s42, 6144, %s44, [#allocation7], 384, 384, 24
    $region25: #{custom_gru_model_forward.1} parent=1 // pred_fallthru
      _
    // Predicated region
    $region26: #{custom_gru_model_forward.1} parent=1 // pred_check
      _
    $region27: #{custom_gru_model_forward.1} parent=1 // pred_check_branch
      %51 = sbr.rel (0) target = $region29
    $region28: #{custom_gru_model_forward.1} parent=1 // pred_region
      _
    $region29: #{custom_gru_model_forward.1} parent=1 // pred_fallthru
      _
    // Predicated region
    $region30: #{custom_gru_model_forward.1} parent=1 // pred_check
      _
    $region31: #{custom_gru_model_forward.1} parent=1 // pred_check_branch
      %53 = sbr.rel (0) target = $region33
    $region32: #{custom_gru_model_forward.1} parent=1 // pred_region
      _
    $region33: #{custom_gru_model_forward.1} parent=1 // pred_fallthru
      _
    // Predicated region
    $region34: #{custom_gru_model_forward.1} parent=1 // pred_check
      _
    $region35: #{custom_gru_model_forward.1} parent=1 // pred_check_branch
      %55 = sbr.rel (0) target = $region37
    $region36: #{custom_gru_model_forward.1} parent=1 // pred_region
      _
    $region37: #{custom_gru_model_forward.1} parent=1 // pred_fallthru
      _
    // Predicated region
    $region38: #{custom_gru_model_forward.1} parent=1 // pred_check
      _
    $region39: #{custom_gru_model_forward.1} parent=1 // pred_check_branch
      %57 = sbr.rel (0) target = $region41
    $region40: #{custom_gru_model_forward.1} parent=1 // pred_region
      %59 = dma.done [#allocation5], 6144
    $region41: #{custom_gru_model_forward.1} parent=1 // pred_fallthru
      _
    // Predicated region
    $region42: #{custom_gru_model_forward.1} parent=1 // pred_check
      _
    $region43: #{custom_gru_model_forward.1} parent=1 // pred_check_branch
      %61 = sbr.rel (0) target = $region45
    $region44: #{custom_gru_model_forward.1} parent=1 // pred_region
      %63 = dma.done [#allocation7], 6144
    $region45: #{custom_gru_model_forward.1} parent=1 // pred_fallthru
      _
    %v64 = vld [vmem:[%s2] sm:$0x1]
    %v65 = vld [vmem:[%s0] sm:$0xff]
    %v66 = vld [vmem:[%s0 + $0x8] sm:$0xff]
    %v67 = vld [vmem:[%s0 + $0x10] sm:$0xff]
    %v68 = vxor.u32 %v65, 2147483648
    %v69 = vmul.f32 %v68, 1.442695
    %v70 = vpow.pop %v69
    %v71 = vadd.f32 %v70, 1.0
    %v72 = vrcp.pop %v71
    %v73 = vmul.f32 %v71, %v72
    %v74 = vsub.f32 1.0, %v73
    %v75 = vmul.f32 %v72, %v74
    %v76 = vadd.f32 %v72, %v75
    %vm77 = vweird.f32 %v71
    %vm78 = vweird.f32 %v72
    %vm79 = vmor %vm77, %vm78
    %v80 = vsel %vm79, %v72, %v76
    %v81 = vand.u32 2147483647, %v71
    %vm82 = vcmp.eq.f32.partialorder %v81, 8.507059e+37
    %v83 = vand.u32 %v71, 2147483648
    %v84 = vor.u32 1.1754944e-38, %v83
    %v85 = vsel %vm82, %v84, %v80
    %v86 = vmul.f32 1.0, %v85
    %v87 = vxor.u32 %v66, 2147483648
    %v88 = vmul.f32 %v87, 1.442695
    %v89 = vpow.pop %v88
    %v90 = vadd.f32 %v89, 1.0
    %v91 = vrcp.pop %v90
    %v92 = vmul.f32 %v90, %v91
    %v93 = vsub.f32 1.0, %v92
    %v94 = vmul.f32 %v91, %v93
    %v95 = vadd.f32 %v91, %v94
    %vm96 = vweird.f32 %v90
    %vm97 = vweird.f32 %v91
    %vm98 = vmor %vm96, %vm97
    %v99 = vsel %vm98, %v91, %v95
    %v100 = vand.u32 2147483647, %v90
    %vm101 = vcmp.eq.f32.partialorder %v100, 8.507059e+37
    %v102 = vand.u32 %v90, 2147483648
    %v103 = vor.u32 1.1754944e-38, %v102
    %v104 = vsel %vm101, %v103, %v99
    %v105 = vmul.f32 1.0, %v104
    %v107 = vperm.slane %v64, 0
    %v109 = vmul.f32 %v86, %v107
    %v110 = vadd.f32 %v67, %v109
    %v111 = vtanh.pop %v110
    %v112 = vmul.f32 %v105, %v111
    %v113 = vsub.f32 %v111, %v112
    %114 = vst [vmem:[#allocation3] sm:$0xff] %v113
    %s115 = scalar_lea.vmem %s0, 24
    %v116 = vld [vmem:[%s115] sm:$0xff]
    %v117 = vld [vmem:[%s115 + $0x8] sm:$0xff]
    %v118 = vld [vmem:[%s115 + $0x10] sm:$0xff]
    %v119 = vld [vmem:[%s1] sm:$0xff]
    %v120 = vld [vmem:[%s1 + $0x8] sm:$0xff]
    %v121 = vld [vmem:[%s1 + $0x10] sm:$0xff]
    %v122 = vld [vmem:[%s1 + $0x18] sm:$0xff]
    %v123 = vld [vmem:[%s1 + $0x20] sm:$0xff]
    %v124 = vld [vmem:[%s1 + $0x28] sm:$0xff]
    %v125 = vld [vmem:[%s1 + $0x30] sm:$0xff]
    %v126 = vld [vmem:[%s1 + $0x38] sm:$0xff]
    %v127 = vld [vmem:[%s1 + $0x40] sm:$0xff]
    %v128 = vld [vmem:[%s1 + $0x48] sm:$0xff]
    %v129 = vld [vmem:[%s1 + $0x50] sm:$0xff]
    %v130 = vld [vmem:[%s1 + $0x58] sm:$0xff]
    %v131 = vld [vmem:[%s1 + $0x60] sm:$0xff]
    %v132 = vld [vmem:[%s1 + $0x68] sm:$0xff]
    %v133 = vld [vmem:[%s1 + $0x70] sm:$0xff]
    %v134 = vld [vmem:[%s1 + $0x78] sm:$0xff]
    %v135 = vld [vmem:[%s1 + $0x80] sm:$0xff]
    %v136 = vld [vmem:[%s1 + $0x88] sm:$0xff]
    %v137 = vld [vmem:[%s1 + $0x90] sm:$0xff]
    %v138 = vld [vmem:[%s1 + $0x98] sm:$0xff]
    %v139 = vld [vmem:[%s1 + $0xa0] sm:$0xff]
    %v140 = vld [vmem:[%s1 + $0xa8] sm:$0xff]
    %v141 = vld [vmem:[%s1 + $0xb0] sm:$0xff]
    %v142 = vld [vmem:[%s1 + $0xb8] sm:$0xff]
    %v143 = vld [vmem:[%s1 + $0xc0] sm:$0xff]
    %v144 = vld [vmem:[%s1 + $0xc8] sm:$0xff]
    %v145 = vld [vmem:[%s1 + $0xd0] sm:$0xff]
    %v146 = vld [vmem:[%s1 + $0xd8] sm:$0xff]
    %v147 = vld [vmem:[%s1 + $0xe0] sm:$0xff]
    %v148 = vld [vmem:[%s1 + $0xe8] sm:$0xff]
    %v149 = vld [vmem:[%s1 + $0xf0] sm:$0xff]
    %v150 = vld [vmem:[%s1 + $0xf8] sm:$0xff]
    %v151 = vld [vmem:[%s1 + $0x100] sm:$0xff]
    %v152 = vld [vmem:[%s1 + $0x108] sm:$0xff]
    %v153 = vld [vmem:[%s1 + $0x110] sm:$0xff]
    %v154 = vld [vmem:[%s1 + $0x118] sm:$0xff]
    %v155 = vld [vmem:[%s1 + $0x120] sm:$0xff]
    %v156 = vld [vmem:[%s1 + $0x128] sm:$0xff]
    %v157 = vld [vmem:[%s1 + $0x130] sm:$0xff]
    %v158 = vld [vmem:[%s1 + $0x138] sm:$0xff]
    %v159 = vld [vmem:[%s1 + $0x140] sm:$0xff]
    %v160 = vld [vmem:[%s1 + $0x148] sm:$0xff]
    %v161 = vld [vmem:[%s1 + $0x150] sm:$0xff]
    %v162 = vld [vmem:[%s1 + $0x158] sm:$0xff]
    %v163 = vld [vmem:[%s1 + $0x160] sm:$0xff]
    %v164 = vld [vmem:[%s1 + $0x168] sm:$0xff]
    %v165 = vld [vmem:[%s1 + $0x170] sm:$0xff]
    %v166 = vld [vmem:[%s1 + $0x178] sm:$0xff]
    %167 = vmatpush.msra.mxu0 %v164
    %168 = vmatpush.msra.mxu0 %v161
    %169 = vmatpush.msra.mxu0 %v158
    %170 = vmatpush.msra.mxu0 %v155
    %171 = vmatpush.msra.mxu0 %v152
    %172 = vmatpush.msra.mxu0 %v149
    %173 = vmatpush.msra.mxu0 %v146
    %174 = vmatpush.msra.mxu0 %v143
    %175 = vmatpush.msra.mxu0 %v140
    %176 = vmatpush.msra.mxu0 %v137
    %177 = vmatpush.msra.mxu0 %v134
    %178 = vmatpush.msra.mxu0 %v131
    %179 = vmatpush.msra.mxu0 %v128
    %180 = vmatpush.msra.mxu0 %v125
    %181 = vmatpush.msra.mxu0 %v122
    %182 = vmatpush.msra.mxu0 %v119
    %183 = vmatmul.f32.gmra.mxu0 %v113
    %v184 = vpop.f32.mrf.mxu0
    %v185 = vadd.f32 0.0, %v184
    %186 = vdwg.mxu0
    %187 = vmatpush.msra.mxu0 %v165
    %188 = vmatpush.msra.mxu0 %v162
    %189 = vmatpush.msra.mxu0 %v159
    %190 = vmatpush.msra.mxu0 %v156
    %191 = vmatpush.msra.mxu0 %v153
    %192 = vmatpush.msra.mxu0 %v150
    %193 = vmatpush.msra.mxu0 %v147
    %194 = vmatpush.msra.mxu0 %v144
    %195 = vmatpush.msra.mxu0 %v141
    %196 = vmatpush.msra.mxu0 %v138
    %197 = vmatpush.msra.mxu0 %v135
    %198 = vmatpush.msra.mxu0 %v132
    %199 = vmatpush.msra.mxu0 %v129
    %200 = vmatpush.msra.mxu0 %v126
    %201 = vmatpush.msra.mxu0 %v123
    %202 = vmatpush.msra.mxu0 %v120
    %203 = vmatmul.f32.gmra.mxu0 %v113
    %v204 = vpop.f32.mrf.mxu0
    %v205 = vadd.f32 0.0, %v204
    %206 = vdwg.mxu0
    %207 = vmatpush.msra.mxu0 %v166
    %208 = vmatpush.msra.mxu0 %v163
    %209 = vmatpush.msra.mxu0 %v160
    %210 = vmatpush.msra.mxu0 %v157
    %211 = vmatpush.msra.mxu0 %v154
    %212 = vmatpush.msra.mxu0 %v151
    %213 = vmatpush.msra.mxu0 %v148
    %214 = vmatpush.msra.mxu0 %v145
    %215 = vmatpush.msra.mxu0 %v142
    %216 = vmatpush.msra.mxu0 %v139
    %217 = vmatpush.msra.mxu0 %v136
    %218 = vmatpush.msra.mxu0 %v133
    %219 = vmatpush.msra.mxu0 %v130
    %220 = vmatpush.msra.mxu0 %v127
    %221 = vmatpush.msra.mxu0 %v124
    %222 = vmatpush.msra.mxu0 %v121
    %223 = vmatmul.f32.gmra.mxu0 %v113
    %v224 = vpop.f32.mrf.mxu0
    %v225 = vadd.f32 0.0, %v224
    %226 = vdwg.mxu0
    %v227 = vadd.f32 %v116, %v185
    %v228 = vxor.u32 %v227, 2147483648
    %v229 = vmul.f32 %v228, 1.442695
    %v230 = vpow.pop %v229
    %v231 = vadd.f32 %v230, 1.0
    %v232 = vrcp.pop %v231
    %v233 = vmul.f32 %v231, %v232
    %v234 = vsub.f32 1.0, %v233
    %v235 = vmul.f32 %v232, %v234
    %v236 = vadd.f32 %v232, %v235
    %vm237 = vweird.f32 %v231
    %vm238 = vweird.f32 %v232
    %vm239 = vmor %vm237, %vm238
    %v240 = vsel %vm239, %v232, %v236
    %v241 = vand.u32 2147483647, %v231
    %vm242 = vcmp.eq.f32.partialorder %v241, 8.507059e+37
    %v243 = vand.u32 %v231, 2147483648
    %v244 = vor.u32 1.1754944e-38, %v243
    %v245 = vsel %vm242, %v244, %v240
    %v246 = vmul.f32 1.0, %v245
    %v247 = vadd.f32 %v117, %v205
    %v248 = vxor.u32 %v247, 2147483648
    %v249 = vmul.f32 %v248, 1.442695
    %v250 = vpow.pop %v249
    %v251 = vadd.f32 %v250, 1.0
    %v252 = vrcp.pop %v251
    %v253 = vmul.f32 %v251, %v252
    %v254 = vsub.f32 1.0, %v253
    %v255 = vmul.f32 %v252, %v254
    %v256 = vadd.f32 %v252, %v255
    %vm257 = vweird.f32 %v251
    %vm258 = vweird.f32 %v252
    %vm259 = vmor %vm257, %vm258
    %v260 = vsel %vm259, %v252, %v256
    %v261 = vand.u32 2147483647, %v251
    %vm262 = vcmp.eq.f32.partialorder %v261, 8.507059e+37
    %v263 = vand.u32 %v251, 2147483648
    %v264 = vor.u32 1.1754944e-38, %v263
    %v265 = vsel %vm262, %v264, %v260
    %v266 = vmul.f32 1.0, %v265
    %v267 = vadd.f32 %v225, %v107
    %v268 = vmul.f32 %v246, %v267
    %v269 = vadd.f32 %v118, %v268
    %v270 = vtanh.pop %v269
    %v271 = vsub.f32 %v113, %v270
    %v272 = vmul.f32 %v266, %v271
    %v273 = vadd.f32 %v270, %v272
    %274 = vst [vmem:[#allocation3 + $0x8] sm:$0xff] %v273
    %s275 = scalar_lea.vmem %s0, 48
    %v276 = vld [vmem:[%s275] sm:$0xff]
    %v277 = vld [vmem:[%s275 + $0x8] sm:$0xff]
    %v278 = vld [vmem:[%s275 + $0x10] sm:$0xff]
    %v279 = vld [vmem:[%s1] sm:$0xff]
    %v280 = vld [vmem:[%s1 + $0x8] sm:$0xff]
    %v281 = vld [vmem:[%s1 + $0x10] sm:$0xff]
    %v282 = vld [vmem:[%s1 + $0x18] sm:$0xff]
    %v283 = vld [vmem:[%s1 + $0x20] sm:$0xff]
    %v284 = vld [vmem:[%s1 + $0x28] sm:$0xff]
    %v285 = vld [vmem:[%s1 + $0x30] sm:$0xff]
    %v286 = vld [vmem:[%s1 + $0x38] sm:$0xff]
    %v287 = vld [vmem:[%s1 + $0x40] sm:$0xff]
    %v288 = vld [vmem:[%s1 + $0x48] sm:$0xff]
    %v289 = vld [vmem:[%s1 + $0x50] sm:$0xff]
    %v290 = vld [vmem:[%s1 + $0x58] sm:$0xff]
    %v291 = vld [vmem:[%s1 + $0x60] sm:$0xff]
    %v292 = vld [vmem:[%s1 + $0x68] sm:$0xff]
    %v293 = vld [vmem:[%s1 + $0x70] sm:$0xff]
    %v294 = vld [vmem:[%s1 + $0x78] sm:$0xff]
    %v295 = vld [vmem:[%s1 + $0x80] sm:$0xff]
    %v296 = vld [vmem:[%s1 + $0x88] sm:$0xff]
    %v297 = vld [vmem:[%s1 + $0x90] sm:$0xff]
    %v298 = vld [vmem:[%s1 + $0x98] sm:$0xff]
    %v299 = vld [vmem:[%s1 + $0xa0] sm:$0xff]
    %v300 = vld [vmem:[%s1 + $0xa8] sm:$0xff]
    %v301 = vld [vmem:[%s1 + $0xb0] sm:$0xff]
    %v302 = vld [vmem:[%s1 + $0xb8] sm:$0xff]
    %v303 = vld [vmem:[%s1 + $0xc0] sm:$0xff]
    %v304 = vld [vmem:[%s1 + $0xc8] sm:$0xff]
    %v305 = vld [vmem:[%s1 + $0xd0] sm:$0xff]
    %v306 = vld [vmem:[%s1 + $0xd8] sm:$0xff]
    %v307 = vld [vmem:[%s1 + $0xe0] sm:$0xff]
    %v308 = vld [vmem:[%s1 + $0xe8] sm:$0xff]
    %v309 = vld [vmem:[%s1 + $0xf0] sm:$0xff]
    %v310 = vld [vmem:[%s1 + $0xf8] sm:$0xff]
    %v311 = vld [vmem:[%s1 + $0x100] sm:$0xff]
    %v312 = vld [vmem:[%s1 + $0x108] sm:$0xff]
    %v313 = vld [vmem:[%s1 + $0x110] sm:$0xff]
    %v314 = vld [vmem:[%s1 + $0x118] sm:$0xff]
    %v315 = vld [vmem:[%s1 + $0x120] sm:$0xff]
    %v316 = vld [vmem:[%s1 + $0x128] sm:$0xff]
    %v317 = vld [vmem:[%s1 + $0x130] sm:$0xff]
    %v318 = vld [vmem:[%s1 + $0x138] sm:$0xff]
    %v319 = vld [vmem:[%s1 + $0x140] sm:$0xff]
    %v320 = vld [vmem:[%s1 + $0x148] sm:$0xff]
    %v321 = vld [vmem:[%s1 + $0x150] sm:$0xff]
    %v322 = vld [vmem:[%s1 + $0x158] sm:$0xff]
    %v323 = vld [vmem:[%s1 + $0x160] sm:$0xff]
    %v324 = vld [vmem:[%s1 + $0x168] sm:$0xff]
    %v325 = vld [vmem:[%s1 + $0x170] sm:$0xff]
    %v326 = vld [vmem:[%s1 + $0x178] sm:$0xff]
    %327 = vmatpush.msra.mxu0 %v324
    %328 = vmatpush.msra.mxu0 %v321
    %329 = vmatpush.msra.mxu0 %v318
    %330 = vmatpush.msra.mxu0 %v315
    %331 = vmatpush.msra.mxu0 %v312
    %332 = vmatpush.msra.mxu0 %v309
    %333 = vmatpush.msra.mxu0 %v306
    %334 = vmatpush.msra.mxu0 %v303
    %335 = vmatpush.msra.mxu0 %v300
    %336 = vmatpush.msra.mxu0 %v297
    %337 = vmatpush.msra.mxu0 %v294
    %338 = vmatpush.msra.mxu0 %v291
    %339 = vmatpush.msra.mxu0 %v288
    %340 = vmatpush.msra.mxu0 %v285
    %341 = vmatpush.msra.mxu0 %v282
    %342 = vmatpush.msra.mxu0 %v279
    %343 = vmatmul.f32.gmra.mxu0 %v273
    %v344 = vpop.f32.mrf.mxu0
    %v345 = vadd.f32 0.0, %v344
    %346 = vdwg.mxu0
    %347 = vmatpush.msra.mxu0 %v325
    %348 = vmatpush.msra.mxu0 %v322
    %349 = vmatpush.msra.mxu0 %v319
    %350 = vmatpush.msra.mxu0 %v316
    %351 = vmatpush.msra.mxu0 %v313
    %352 = vmatpush.msra.mxu0 %v310
    %353 = vmatpush.msra.mxu0 %v307
    %354 = vmatpush.msra.mxu0 %v304
    %355 = vmatpush.msra.mxu0 %v301
    %356 = vmatpush.msra.mxu0 %v298
    %357 = vmatpush.msra.mxu0 %v295
    %358 = vmatpush.msra.mxu0 %v292
    %359 = vmatpush.msra.mxu0 %v289
    %360 = vmatpush.msra.mxu0 %v286
    %361 = vmatpush.msra.mxu0 %v283
    %362 = vmatpush.msra.mxu0 %v280
    %363 = vmatmul.f32.gmra.mxu0 %v273
    %v364 = vpop.f32.mrf.mxu0
    %v365 = vadd.f32 0.0, %v364
    %366 = vdwg.mxu0
    %367 = vmatpush.msra.mxu0 %v326
    %368 = vmatpush.msra.mxu0 %v323
    %369 = vmatpush.msra.mxu0 %v320
    %370 = vmatpush.msra.mxu0 %v317
    %371 = vmatpush.msra.mxu0 %v314
    %372 = vmatpush.msra.mxu0 %v311
    %373 = vmatpush.msra.mxu0 %v308
    %374 = vmatpush.msra.mxu0 %v305
    %375 = vmatpush.msra.mxu0 %v302
    %376 = vmatpush.msra.mxu0 %v299
    %377 = vmatpush.msra.mxu0 %v296
    %378 = vmatpush.msra.mxu0 %v293
    %379 = vmatpush.msra.mxu0 %v290
    %380 = vmatpush.msra.mxu0 %v287
    %381 = vmatpush.msra.mxu0 %v284
    %382 = vmatpush.msra.mxu0 %v281
    %383 = vmatmul.f32.gmra.mxu0 %v273
    %v384 = vpop.f32.mrf.mxu0
    %v385 = vadd.f32 0.0, %v384
    %386 = vdwg.mxu0
    %v387 = vadd.f32 %v276, %v345
    %v388 = vxor.u32 %v387, 2147483648
    %v389 = vmul.f32 %v388, 1.442695
    %v390 = vpow.pop %v389
    %v391 = vadd.f32 %v390, 1.0
    %v392 = vrcp.pop %v391
    %v393 = vmul.f32 %v391, %v392
    %v394 = vsub.f32 1.0, %v393
    %v395 = vmul.f32 %v392, %v394
    %v396 = vadd.f32 %v392, %v395
    %vm397 = vweird.f32 %v391
    %vm398 = vweird.f32 %v392
    %vm399 = vmor %vm397, %vm398
    %v400 = vsel %vm399, %v392, %v396
    %v401 = vand.u32 2147483647, %v391
    %vm402 = vcmp.eq.f32.partialorder %v401, 8.507059e+37
    %v403 = vand.u32 %v391, 2147483648
    %v404 = vor.u32 1.1754944e-38, %v403
    %v405 = vsel %vm402, %v404, %v400
    %v406 = vmul.f32 1.0, %v405
    %v407 = vadd.f32 %v277, %v365
    %v408 = vxor.u32 %v407, 2147483648
    %v409 = vmul.f32 %v408, 1.442695
    %v410 = vpow.pop %v409
    %v411 = vadd.f32 %v410, 1.0
    %v412 = vrcp.pop %v411
    %v413 = vmul.f32 %v411, %v412
    %v414 = vsub.f32 1.0, %v413
    %v415 = vmul.f32 %v412, %v414
    %v416 = vadd.f32 %v412, %v415
    %vm417 = vweird.f32 %v411
    %vm418 = vweird.f32 %v412
    %vm419 = vmor %vm417, %vm418
    %v420 = vsel %vm419, %v412, %v416
    %v421 = vand.u32 2147483647, %v411
    %vm422 = vcmp.eq.f32.partialorder %v421, 8.507059e+37
    %v423 = vand.u32 %v411, 2147483648
    %v424 = vor.u32 1.1754944e-38, %v423
    %v425 = vsel %vm422, %v424, %v420
    %v426 = vmul.f32 1.0, %v425
    %v427 = vadd.f32 %v385, %v107
    %v428 = vmul.f32 %v406, %v427
    %v429 = vadd.f32 %v278, %v428
    %v430 = vtanh.pop %v429
    %v431 = vsub.f32 %v273, %v430
    %v432 = vmul.f32 %v426, %v431
    %v433 = vadd.f32 %v430, %v432
    %434 = vst [vmem:[#allocation3 + $0x10] sm:$0xff] %v433
    %s435 = scalar_lea.vmem %s0, 72
    %v436 = vld [vmem:[%s435] sm:$0xff]
    %v437 = vld [vmem:[%s435 + $0x8] sm:$0xff]
    %v438 = vld [vmem:[%s435 + $0x10] sm:$0xff]
    %v439 = vld [vmem:[%s1] sm:$0xff]
    %v440 = vld [vmem:[%s1 + $0x8] sm:$0xff]
    %v441 = vld [vmem:[%s1 + $0x10] sm:$0xff]
    %v442 = vld [vmem:[%s1 + $0x18] sm:$0xff]
    %v443 = vld [vmem:[%s1 + $0x20] sm:$0xff]
    %v444 = vld [vmem:[%s1 + $0x28] sm:$0xff]
    %v445 = vld [vmem:[%s1 + $0x30] sm:$0xff]
    %v446 = vld [vmem:[%s1 + $0x38] sm:$0xff]
    %v447 = vld [vmem:[%s1 + $0x40] sm:$0xff]
    %v448 = vld [vmem:[%s1 + $0x48] sm:$0xff]
    %v449 = vld [vmem:[%s1 + $0x50] sm:$0xff]
    %v450 = vld [vmem:[%s1 + $0x58] sm:$0xff]
    %v451 = vld [vmem:[%s1 + $0x60] sm:$0xff]
    %v452 = vld [vmem:[%s1 + $0x68] sm:$0xff]
    %v453 = vld [vmem:[%s1 + $0x70] sm:$0xff]
    %v454 = vld [vmem:[%s1 + $0x78] sm:$0xff]
    %v455 = vld [vmem:[%s1 + $0x80] sm:$0xff]
    %v456 = vld [vmem:[%s1 + $0x88] sm:$0xff]
    %v457 = vld [vmem:[%s1 + $0x90] sm:$0xff]
    %v458 = vld [vmem:[%s1 + $0x98] sm:$0xff]
    %v459 = vld [vmem:[%s1 + $0xa0] sm:$0xff]
    %v460 = vld [vmem:[%s1 + $0xa8] sm:$0xff]
    %v461 = vld [vmem:[%s1 + $0xb0] sm:$0xff]
    %v462 = vld [vmem:[%s1 + $0xb8] sm:$0xff]
    %v463 = vld [vmem:[%s1 + $0xc0] sm:$0xff]
    %v464 = vld [vmem:[%s1 + $0xc8] sm:$0xff]
    %v465 = vld [vmem:[%s1 + $0xd0] sm:$0xff]
    %v466 = vld [vmem:[%s1 + $0xd8] sm:$0xff]
    %v467 = vld [vmem:[%s1 + $0xe0] sm:$0xff]
    %v468 = vld [vmem:[%s1 + $0xe8] sm:$0xff]
    %v469 = vld [vmem:[%s1 + $0xf0] sm:$0xff]
    %v470 = vld [vmem:[%s1 + $0xf8] sm:$0xff]
    %v471 = vld [vmem:[%s1 + $0x100] sm:$0xff]
    %v472 = vld [vmem:[%s1 + $0x108] sm:$0xff]
    %v473 = vld [vmem:[%s1 + $0x110] sm:$0xff]
    %v474 = vld [vmem:[%s1 + $0x118] sm:$0xff]
    %v475 = vld [vmem:[%s1 + $0x120] sm:$0xff]
    %v476 = vld [vmem:[%s1 + $0x128] sm:$0xff]
    %v477 = vld [vmem:[%s1 + $0x130] sm:$0xff]
    %v478 = vld [vmem:[%s1 + $0x138] sm:$0xff]
    %v479 = vld [vmem:[%s1 + $0x140] sm:$0xff]
    %v480 = vld [vmem:[%s1 + $0x148] sm:$0xff]
    %v481 = vld [vmem:[%s1 + $0x150] sm:$0xff]
    %v482 = vld [vmem:[%s1 + $0x158] sm:$0xff]
    %v483 = vld [vmem:[%s1 + $0x160] sm:$0xff]
    %v484 = vld [vmem:[%s1 + $0x168] sm:$0xff]
    %v485 = vld [vmem:[%s1 + $0x170] sm:$0xff]
    %v486 = vld [vmem:[%s1 + $0x178] sm:$0xff]
    %487 = vmatpush.msra.mxu0 %v484
    %488 = vmatpush.msra.mxu0 %v481
    %489 = vmatpush.msra.mxu0 %v478
    %490 = vmatpush.msra.mxu0 %v475
    %491 = vmatpush.msra.mxu0 %v472
    %492 = vmatpush.msra.mxu0 %v469
    %493 = vmatpush.msra.mxu0 %v466
    %494 = vmatpush.msra.mxu0 %v463
    %495 = vmatpush.msra.mxu0 %v460
    %496 = vmatpush.msra.mxu0 %v457
    %497 = vmatpush.msra.mxu0 %v454
    %498 = vmatpush.msra.mxu0 %v451
    %499 = vmatpush.msra.mxu0 %v448
    %500 = vmatpush.msra.mxu0 %v445
    %501 = vmatpush.msra.mxu0 %v442
    %502 = vmatpush.msra.mxu0 %v439
    %503 = vmatmul.f32.gmra.mxu0 %v433
    %v504 = vpop.f32.mrf.mxu0
    %v505 = vadd.f32 0.0, %v504
    %506 = vdwg.mxu0
    %507 = vmatpush.msra.mxu0 %v485
    %508 = vmatpush.msra.mxu0 %v482
    %509 = vmatpush.msra.mxu0 %v479
    %510 = vmatpush.msra.mxu0 %v476
    %511 = vmatpush.msra.mxu0 %v473
    %512 = vmatpush.msra.mxu0 %v470
    %513 = vmatpush.msra.mxu0 %v467
    %514 = vmatpush.msra.mxu0 %v464
    %515 = vmatpush.msra.mxu0 %v461
    %516 = vmatpush.msra.mxu0 %v458
    %517 = vmatpush.msra.mxu0 %v455
    %518 = vmatpush.msra.mxu0 %v452
    %519 = vmatpush.msra.mxu0 %v449
    %520 = vmatpush.msra.mxu0 %v446
    %521 = vmatpush.msra.mxu0 %v443
    %522 = vmatpush.msra.mxu0 %v440
    %523 = vmatmul.f32.gmra.mxu0 %v433
    %v524 = vpop.f32.mrf.mxu0
    %v525 = vadd.f32 0.0, %v524
    %526 = vdwg.mxu0
    %527 = vmatpush.msra.mxu0 %v486
    %528 = vmatpush.msra.mxu0 %v483
    %529 = vmatpush.msra.mxu0 %v480
    %530 = vmatpush.msra.mxu0 %v477
    %531 = vmatpush.msra.mxu0 %v474
    %532 = vmatpush.msra.mxu0 %v471
    %533 = vmatpush.msra.mxu0 %v468
    %534 = vmatpush.msra.mxu0 %v465
    %535 = vmatpush.msra.mxu0 %v462
    %536 = vmatpush.msra.mxu0 %v459
    %537 = vmatpush.msra.mxu0 %v456
    %538 = vmatpush.msra.mxu0 %v453
    %539 = vmatpush.msra.mxu0 %v450
    %540 = vmatpush.msra.mxu0 %v447
    %541 = vmatpush.msra.mxu0 %v444
    %542 = vmatpush.msra.mxu0 %v441
    %543 = vmatmul.f32.gmra.mxu0 %v433
    %v544 = vpop.f32.mrf.mxu0
    %v545 = vadd.f32 0.0, %v544
    %546 = vdwg.mxu0
    %v547 = vadd.f32 %v436, %v505
    %v548 = vxor.u32 %v547, 2147483648
    %v549 = vmul.f32 %v548, 1.442695
    %v550 = vpow.pop %v549
    %v551 = vadd.f32 %v550, 1.0
    %v552 = vrcp.pop %v551
    %v553 = vmul.f32 %v551, %v552
    %v554 = vsub.f32 1.0, %v553
    %v555 = vmul.f32 %v552, %v554
    %v556 = vadd.f32 %v552, %v555
    %vm557 = vweird.f32 %v551
    %vm558 = vweird.f32 %v552
    %vm559 = vmor %vm557, %vm558
    %v560 = vsel %vm559, %v552, %v556
    %v561 = vand.u32 2147483647, %v551
    %vm562 = vcmp.eq.f32.partialorder %v561, 8.507059e+37
    %v563 = vand.u32 %v551, 2147483648
    %v564 = vor.u32 1.1754944e-38, %v563
    %v565 = vsel %vm562, %v564, %v560
    %v566 = vmul.f32 1.0, %v565
    %v567 = vadd.f32 %v437, %v525
    %v568 = vxor.u32 %v567, 2147483648
    %v569 = vmul.f32 %v568, 1.442695
    %v570 = vpow.pop %v569
    %v571 = vadd.f32 %v570, 1.0
    %v572 = vrcp.pop %v571
    %v573 = vmul.f32 %v571, %v572
    %v574 = vsub.f32 1.0, %v573
    %v575 = vmul.f32 %v572, %v574
    %v576 = vadd.f32 %v572, %v575
    %vm577 = vweird.f32 %v571
    %vm578 = vweird.f32 %v572
    %vm579 = vmor %vm577, %vm578
    %v580 = vsel %vm579, %v572, %v576
    %v581 = vand.u32 2147483647, %v571
    %vm582 = vcmp.eq.f32.partialorder %v581, 8.507059e+37
    %v583 = vand.u32 %v571, 2147483648
    %v584 = vor.u32 1.1754944e-38, %v583
    %v585 = vsel %vm582, %v584, %v580
    %v586 = vmul.f32 1.0, %v585
    %v587 = vadd.f32 %v545, %v107
    %v588 = vmul.f32 %v566, %v587
    %v589 = vadd.f32 %v438, %v588
    %v590 = vtanh.pop %v589
    %v591 = vsub.f32 %v433, %v590
    %v592 = vmul.f32 %v586, %v591
    %v593 = vadd.f32 %v590, %v592
    %594 = vst [vmem:[#allocation3 + $0x18] sm:$0xff] %v593
    %s595 = scalar_lea.vmem %s0, 96
    %v596 = vld [vmem:[%s595] sm:$0xff]
    %v597 = vld [vmem:[%s595 + $0x8] sm:$0xff]
    %v598 = vld [vmem:[%s595 + $0x10] sm:$0xff]
    %v599 = vld [vmem:[%s1] sm:$0xff]
    %v600 = vld [vmem:[%s1 + $0x8] sm:$0xff]
    %v601 = vld [vmem:[%s1 + $0x10] sm:$0xff]
    %v602 = vld [vmem:[%s1 + $0x18] sm:$0xff]
    %v603 = vld [vmem:[%s1 + $0x20] sm:$0xff]
    %v604 = vld [vmem:[%s1 + $0x28] sm:$0xff]
    %v605 = vld [vmem:[%s1 + $0x30] sm:$0xff]
    %v606 = vld [vmem:[%s1 + $0x38] sm:$0xff]
    %v607 = vld [vmem:[%s1 + $0x40] sm:$0xff]
    %v608 = vld [vmem:[%s1 + $0x48] sm:$0xff]
    %v609 = vld [vmem:[%s1 + $0x50] sm:$0xff]
    %v610 = vld [vmem:[%s1 + $0x58] sm:$0xff]
    %v611 = vld [vmem:[%s1 + $0x60] sm:$0xff]
    %v612 = vld [vmem:[%s1 + $0x68] sm:$0xff]
    %v613 = vld [vmem:[%s1 + $0x70] sm:$0xff]
    %v614 = vld [vmem:[%s1 + $0x78] sm:$0xff]
    %v615 = vld [vmem:[%s1 + $0x80] sm:$0xff]
    %v616 = vld [vmem:[%s1 + $0x88] sm:$0xff]
    %v617 = vld [vmem:[%s1 + $0x90] sm:$0xff]
    %v618 = vld [vmem:[%s1 + $0x98] sm:$0xff]
    %v619 = vld [vmem:[%s1 + $0xa0] sm:$0xff]
    %v620 = vld [vmem:[%s1 + $0xa8] sm:$0xff]
    %v621 = vld [vmem:[%s1 + $0xb0] sm:$0xff]
    %v622 = vld [vmem:[%s1 + $0xb8] sm:$0xff]
    %v623 = vld [vmem:[%s1 + $0xc0] sm:$0xff]
    %v624 = vld [vmem:[%s1 + $0xc8] sm:$0xff]
    %v625 = vld [vmem:[%s1 + $0xd0] sm:$0xff]
    %v626 = vld [vmem:[%s1 + $0xd8] sm:$0xff]
    %v627 = vld [vmem:[%s1 + $0xe0] sm:$0xff]
    %v628 = vld [vmem:[%s1 + $0xe8] sm:$0xff]
    %v629 = vld [vmem:[%s1 + $0xf0] sm:$0xff]
    %v630 = vld [vmem:[%s1 + $0xf8] sm:$0xff]
    %v631 = vld [vmem:[%s1 + $0x100] sm:$0xff]
    %v632 = vld [vmem:[%s1 + $0x108] sm:$0xff]
    %v633 = vld [vmem:[%s1 + $0x110] sm:$0xff]
    %v634 = vld [vmem:[%s1 + $0x118] sm:$0xff]
    %v635 = vld [vmem:[%s1 + $0x120] sm:$0xff]
    %v636 = vld [vmem:[%s1 + $0x128] sm:$0xff]
    %v637 = vld [vmem:[%s1 + $0x130] sm:$0xff]
    %v638 = vld [vmem:[%s1 + $0x138] sm:$0xff]
    %v639 = vld [vmem:[%s1 + $0x140] sm:$0xff]
    %v640 = vld [vmem:[%s1 + $0x148] sm:$0xff]
    %v641 = vld [vmem:[%s1 + $0x150] sm:$0xff]
    %v642 = vld [vmem:[%s1 + $0x158] sm:$0xff]
    %v643 = vld [vmem:[%s1 + $0x160] sm:$0xff]
    %v644 = vld [vmem:[%s1 + $0x168] sm:$0xff]
    %v645 = vld [vmem:[%s1 + $0x170] sm:$0xff]
    %v646 = vld [vmem:[%s1 + $0x178] sm:$0xff]
    %647 = vmatpush.msra.mxu0 %v644
    %648 = vmatpush.msra.mxu0 %v641
    %649 = vmatpush.msra.mxu0 %v638
    %650 = vmatpush.msra.mxu0 %v635
    %651 = vmatpush.msra.mxu0 %v632
    %652 = vmatpush.msra.mxu0 %v629
    %653 = vmatpush.msra.mxu0 %v626
    %654 = vmatpush.msra.mxu0 %v623
    %655 = vmatpush.msra.mxu0 %v620
    %656 = vmatpush.msra.mxu0 %v617
    %657 = vmatpush.msra.mxu0 %v614
    %658 = vmatpush.msra.mxu0 %v611
    %659 = vmatpush.msra.mxu0 %v608
    %660 = vmatpush.msra.mxu0 %v605
    %661 = vmatpush.msra.mxu0 %v602
    %662 = vmatpush.msra.mxu0 %v599
    %663 = vmatmul.f32.gmra.mxu0 %v593
    %v664 = vpop.f32.mrf.mxu0
    %v665 = vadd.f32 0.0, %v664
    %666 = vdwg.mxu0
    %667 = vmatpush.msra.mxu0 %v645
    %668 = vmatpush.msra.mxu0 %v642
    %669 = vmatpush.msra.mxu0 %v639
    %670 = vmatpush.msra.mxu0 %v636
    %671 = vmatpush.msra.mxu0 %v633
    %672 = vmatpush.msra.mxu0 %v630
    %673 = vmatpush.msra.mxu0 %v627
    %674 = vmatpush.msra.mxu0 %v624
    %675 = vmatpush.msra.mxu0 %v621
    %676 = vmatpush.msra.mxu0 %v618
    %677 = vmatpush.msra.mxu0 %v615
    %678 = vmatpush.msra.mxu0 %v612
    %679 = vmatpush.msra.mxu0 %v609
    %680 = vmatpush.msra.mxu0 %v606
    %681 = vmatpush.msra.mxu0 %v603
    %682 = vmatpush.msra.mxu0 %v600
    %683 = vmatmul.f32.gmra.mxu0 %v593
    %v684 = vpop.f32.mrf.mxu0
    %v685 = vadd.f32 0.0, %v684
    %686 = vdwg.mxu0
    %687 = vmatpush.msra.mxu0 %v646
    %688 = vmatpush.msra.mxu0 %v643
    %689 = vmatpush.msra.mxu0 %v640
    %690 = vmatpush.msra.mxu0 %v637
    %691 = vmatpush.msra.mxu0 %v634
    %692 = vmatpush.msra.mxu0 %v631
    %693 = vmatpush.msra.mxu0 %v628
    %694 = vmatpush.msra.mxu0 %v625
    %695 = vmatpush.msra.mxu0 %v622
    %696 = vmatpush.msra.mxu0 %v619
    %697 = vmatpush.msra.mxu0 %v616
    %698 = vmatpush.msra.mxu0 %v613
    %699 = vmatpush.msra.mxu0 %v610
    %700 = vmatpush.msra.mxu0 %v607
    %701 = vmatpush.msra.mxu0 %v604
    %702 = vmatpush.msra.mxu0 %v601
    %703 = vmatmul.f32.gmra.mxu0 %v593
    %v704 = vpop.f32.mrf.mxu0
    %v705 = vadd.f32 0.0, %v704
    %706 = vdwg.mxu0
    %v707 = vadd.f32 %v596, %v665
    %v708 = vxor.u32 %v707, 2147483648
    %v709 = vmul.f32 %v708, 1.442695
    %v710 = vpow.pop %v709
    %v711 = vadd.f32 %v710, 1.0
    %v712 = vrcp.pop %v711
    %v713 = vmul.f32 %v711, %v712
    %v714 = vsub.f32 1.0, %v713
    %v715 = vmul.f32 %v712, %v714
    %v716 = vadd.f32 %v712, %v715
    %vm717 = vweird.f32 %v711
    %vm718 = vweird.f32 %v712
    %vm719 = vmor %vm717, %vm718
    %v720 = vsel %vm719, %v712, %v716
    %v721 = vand.u32 2147483647, %v711
    %vm722 = vcmp.eq.f32.partialorder %v721, 8.507059e+37
    %v723 = vand.u32 %v711, 2147483648
    %v724 = vor.u32 1.1754944e-38, %v723
    %v725 = vsel %vm722, %v724, %v720
    %v726 = vmul.f32 1.0, %v725
    %v727 = vadd.f32 %v597, %v685
    %v728 = vxor.u32 %v727, 2147483648
    %v729 = vmul.f32 %v728, 1.442695
    %v730 = vpow.pop %v729
    %v731 = vadd.f32 %v730, 1.0
    %v732 = vrcp.pop %v731
    %v733 = vmul.f32 %v731, %v732
    %v734 = vsub.f32 1.0, %v733
    %v735 = vmul.f32 %v732, %v734
    %v736 = vadd.f32 %v732, %v735
    %vm737 = vweird.f32 %v731
    %vm738 = vweird.f32 %v732
    %vm739 = vmor %vm737, %vm738
    %v740 = vsel %vm739, %v732, %v736
    %v741 = vand.u32 2147483647, %v731
    %vm742 = vcmp.eq.f32.partialorder %v741, 8.507059e+37
    %v743 = vand.u32 %v731, 2147483648
    %v744 = vor.u32 1.1754944e-38, %v743
    %v745 = vsel %vm742, %v744, %v740
    %v746 = vmul.f32 1.0, %v745
    %v747 = vadd.f32 %v705, %v107
    %v748 = vmul.f32 %v726, %v747
    %v749 = vadd.f32 %v598, %v748
    %v750 = vtanh.pop %v749
    %v751 = vsub.f32 %v593, %v750
    %v752 = vmul.f32 %v746, %v751
    %v753 = vadd.f32 %v750, %v752
    %754 = vst [vmem:[#allocation3 + $0x20] sm:$0xff] %v753
    %s755 = scalar_lea.vmem %s0, 120
    %v756 = vld [vmem:[%s755] sm:$0xff]
    %v757 = vld [vmem:[%s755 + $0x8] sm:$0xff]
    %v758 = vld [vmem:[%s755 + $0x10] sm:$0xff]
    %v759 = vld [vmem:[%s1] sm:$0xff]
    %v760 = vld [vmem:[%s1 + $0x8] sm:$0xff]
    %v761 = vld [vmem:[%s1 + $0x10] sm:$0xff]
    %v762 = vld [vmem:[%s1 + $0x18] sm:$0xff]
    %v763 = vld [vmem:[%s1 + $0x20] sm:$0xff]
    %v764 = vld [vmem:[%s1 + $0x28] sm:$0xff]
    %v765 = vld [vmem:[%s1 + $0x30] sm:$0xff]
    %v766 = vld [vmem:[%s1 + $0x38] sm:$0xff]
    %v767 = vld [vmem:[%s1 + $0x40] sm:$0xff]
    %v768 = vld [vmem:[%s1 + $0x48] sm:$0xff]
    %v769 = vld [vmem:[%s1 + $0x50] sm:$0xff]
    %v770 = vld [vmem:[%s1 + $0x58] sm:$0xff]
    %v771 = vld [vmem:[%s1 + $0x60] sm:$0xff]
    %v772 = vld [vmem:[%s1 + $0x68] sm:$0xff]
    %v773 = vld [vmem:[%s1 + $0x70] sm:$0xff]
    %v774 = vld [vmem:[%s1 + $0x78] sm:$0xff]
    %v775 = vld [vmem:[%s1 + $0x80] sm:$0xff]
    %v776 = vld [vmem:[%s1 + $0x88] sm:$0xff]
    %v777 = vld [vmem:[%s1 + $0x90] sm:$0xff]
    %v778 = vld [vmem:[%s1 + $0x98] sm:$0xff]
    %v779 = vld [vmem:[%s1 + $0xa0] sm:$0xff]
    %v780 = vld [vmem:[%s1 + $0xa8] sm:$0xff]
    %v781 = vld [vmem:[%s1 + $0xb0] sm:$0xff]
    %v782 = vld [vmem:[%s1 + $0xb8] sm:$0xff]
    %v783 = vld [vmem:[%s1 + $0xc0] sm:$0xff]
    %v784 = vld [vmem:[%s1 + $0xc8] sm:$0xff]
    %v785 = vld [vmem:[%s1 + $0xd0] sm:$0xff]
    %v786 = vld [vmem:[%s1 + $0xd8] sm:$0xff]
    %v787 = vld [vmem:[%s1 + $0xe0] sm:$0xff]
    %v788 = vld [vmem:[%s1 + $0xe8] sm:$0xff]
    %v789 = vld [vmem:[%s1 + $0xf0] sm:$0xff]
    %v790 = vld [vmem:[%s1 + $0xf8] sm:$0xff]
    %v791 = vld [vmem:[%s1 + $0x100] sm:$0xff]
    %v792 = vld [vmem:[%s1 + $0x108] sm:$0xff]
    %v793 = vld [vmem:[%s1 + $0x110] sm:$0xff]
    %v794 = vld [vmem:[%s1 + $0x118] sm:$0xff]
    %v795 = vld [vmem:[%s1 + $0x120] sm:$0xff]
    %v796 = vld [vmem:[%s1 + $0x128] sm:$0xff]
    %v797 = vld [vmem:[%s1 + $0x130] sm:$0xff]
    %v798 = vld [vmem:[%s1 + $0x138] sm:$0xff]
    %v799 = vld [vmem:[%s1 + $0x140] sm:$0xff]
    %v800 = vld [vmem:[%s1 + $0x148] sm:$0xff]
    %v801 = vld [vmem:[%s1 + $0x150] sm:$0xff]
    %v802 = vld [vmem:[%s1 + $0x158] sm:$0xff]
    %v803 = vld [vmem:[%s1 + $0x160] sm:$0xff]
    %v804 = vld [vmem:[%s1 + $0x168] sm:$0xff]
    %v805 = vld [vmem:[%s1 + $0x170] sm:$0xff]
    %v806 = vld [vmem:[%s1 + $0x178] sm:$0xff]
    %807 = vmatpush.msra.mxu0 %v804
    %808 = vmatpush.msra.mxu0 %v801
    %809 = vmatpush.msra.mxu0 %v798
    %810 = vmatpush.msra.mxu0 %v795
    %811 = vmatpush.msra.mxu0 %v792
    %812 = vmatpush.msra.mxu0 %v789
    %813 = vmatpush.msra.mxu0 %v786
    %814 = vmatpush.msra.mxu0 %v783
    %815 = vmatpush.msra.mxu0 %v780
    %816 = vmatpush.msra.mxu0 %v777
    %817 = vmatpush.msra.mxu0 %v774
    %818 = vmatpush.msra.mxu0 %v771
    %819 = vmatpush.msra.mxu0 %v768
    %820 = vmatpush.msra.mxu0 %v765
    %821 = vmatpush.msra.mxu0 %v762
    %822 = vmatpush.msra.mxu0 %v759
    %823 = vmatmul.f32.gmra.mxu0 %v753
    %v824 = vpop.f32.mrf.mxu0
    %v825 = vadd.f32 0.0, %v824
    %826 = vdwg.mxu0
    %827 = vmatpush.msra.mxu0 %v805
    %828 = vmatpush.msra.mxu0 %v802
    %829 = vmatpush.msra.mxu0 %v799
    %830 = vmatpush.msra.mxu0 %v796
    %831 = vmatpush.msra.mxu0 %v793
    %832 = vmatpush.msra.mxu0 %v790
    %833 = vmatpush.msra.mxu0 %v787
    %834 = vmatpush.msra.mxu0 %v784
    %835 = vmatpush.msra.mxu0 %v781
    %836 = vmatpush.msra.mxu0 %v778
    %837 = vmatpush.msra.mxu0 %v775
    %838 = vmatpush.msra.mxu0 %v772
    %839 = vmatpush.msra.mxu0 %v769
    %840 = vmatpush.msra.mxu0 %v766
    %841 = vmatpush.msra.mxu0 %v763
    %842 = vmatpush.msra.mxu0 %v760
    %843 = vmatmul.f32.gmra.mxu0 %v753
    %v844 = vpop.f32.mrf.mxu0
    %v845 = vadd.f32 0.0, %v844
    %846 = vdwg.mxu0
    %847 = vmatpush.msra.mxu0 %v806
    %848 = vmatpush.msra.mxu0 %v803
    %849 = vmatpush.msra.mxu0 %v800
    %850 = vmatpush.msra.mxu0 %v797
    %851 = vmatpush.msra.mxu0 %v794
    %852 = vmatpush.msra.mxu0 %v791
    %853 = vmatpush.msra.mxu0 %v788
    %854 = vmatpush.msra.mxu0 %v785
    %855 = vmatpush.msra.mxu0 %v782
    %856 = vmatpush.msra.mxu0 %v779
    %857 = vmatpush.msra.mxu0 %v776
    %858 = vmatpush.msra.mxu0 %v773
    %859 = vmatpush.msra.mxu0 %v770
    %860 = vmatpush.msra.mxu0 %v767
    %861 = vmatpush.msra.mxu0 %v764
    %862 = vmatpush.msra.mxu0 %v761
    %863 = vmatmul.f32.gmra.mxu0 %v753
    %v864 = vpop.f32.mrf.mxu0
    %v865 = vadd.f32 0.0, %v864
    %866 = vdwg.mxu0
    %v867 = vadd.f32 %v756, %v825
    %v868 = vxor.u32 %v867, 2147483648
    %v869 = vmul.f32 %v868, 1.442695
    %v870 = vpow.pop %v869
    %v871 = vadd.f32 %v870, 1.0
    %v872 = vrcp.pop %v871
    %v873 = vmul.f32 %v871, %v872
    %v874 = vsub.f32 1.0, %v873
    %v875 = vmul.f32 %v872, %v874
    %v876 = vadd.f32 %v872, %v875
    %vm877 = vweird.f32 %v871
    %vm878 = vweird.f32 %v872
    %vm879 = vmor %vm877, %vm878
    %v880 = vsel %vm879, %v872, %v876
    %v881 = vand.u32 2147483647, %v871
    %vm882 = vcmp.eq.f32.partialorder %v881, 8.507059e+37
    %v883 = vand.u32 %v871, 2147483648
    %v884 = vor.u32 1.1754944e-38, %v883
    %v885 = vsel %vm882, %v884, %v880
    %v886 = vmul.f32 1.0, %v885
    %v887 = vadd.f32 %v757, %v845
    %v888 = vxor.u32 %v887, 2147483648
    %v889 = vmul.f32 %v888, 1.442695
    %v890 = vpow.pop %v889
    %v891 = vadd.f32 %v890, 1.0
    %v892 = vrcp.pop %v891
    %v893 = vmul.f32 %v891, %v892
    %v894 = vsub.f32 1.0, %v893
    %v895 = vmul.f32 %v892, %v894
    %v896 = vadd.f32 %v892, %v895
    %vm897 = vweird.f32 %v891
    %vm898 = vweird.f32 %v892
    %vm899 = vmor %vm897, %vm898
    %v900 = vsel %vm899, %v892, %v896
    %v901 = vand.u32 2147483647, %v891
    %vm902 = vcmp.eq.f32.partialorder %v901, 8.507059e+37
    %v903 = vand.u32 %v891, 2147483648
    %v904 = vor.u32 1.1754944e-38, %v903
    %v905 = vsel %vm902, %v904, %v900
    %v906 = vmul.f32 1.0, %v905
    %v907 = vadd.f32 %v865, %v107
    %v908 = vmul.f32 %v886, %v907
    %v909 = vadd.f32 %v758, %v908
    %v910 = vtanh.pop %v909
    %v911 = vsub.f32 %v753, %v910
    %v912 = vmul.f32 %v906, %v911
    %v913 = vadd.f32 %v910, %v912
    %914 = vst [vmem:[#allocation3 + $0x28] sm:$0xff] %v913
    %s915 = scalar_lea.vmem %s0, 144
    %v916 = vld [vmem:[%s915] sm:$0xff]
    %v917 = vld [vmem:[%s915 + $0x8] sm:$0xff]
    %v918 = vld [vmem:[%s915 + $0x10] sm:$0xff]
    %v919 = vld [vmem:[%s1] sm:$0xff]
    %v920 = vld [vmem:[%s1 + $0x8] sm:$0xff]
    %v921 = vld [vmem:[%s1 + $0x10] sm:$0xff]
    %v922 = vld [vmem:[%s1 + $0x18] sm:$0xff]
    %v923 = vld [vmem:[%s1 + $0x20] sm:$0xff]
    %v924 = vld [vmem:[%s1 + $0x28] sm:$0xff]
    %v925 = vld [vmem:[%s1 + $0x30] sm:$0xff]
    %v926 = vld [vmem:[%s1 + $0x38] sm:$0xff]
    %v927 = vld [vmem:[%s1 + $0x40] sm:$0xff]
    %v928 = vld [vmem:[%s1 + $0x48] sm:$0xff]
    %v929 = vld [vmem:[%s1 + $0x50] sm:$0xff]
    %v930 = vld [vmem:[%s1 + $0x58] sm:$0xff]
    %v931 = vld [vmem:[%s1 + $0x60] sm:$0xff]
    %v932 = vld [vmem:[%s1 + $0x68] sm:$0xff]
    %v933 = vld [vmem:[%s1 + $0x70] sm:$0xff]
    %v934 = vld [vmem:[%s1 + $0x78] sm:$0xff]
    %v935 = vld [vmem:[%s1 + $0x80] sm:$0xff]
    %v936 = vld [vmem:[%s1 + $0x88] sm:$0xff]
    %v937 = vld [vmem:[%s1 + $0x90] sm:$0xff]
    %v938 = vld [vmem:[%s1 + $0x98] sm:$0xff]
    %v939 = vld [vmem:[%s1 + $0xa0] sm:$0xff]
    %v940 = vld [vmem:[%s1 + $0xa8] sm:$0xff]
    %v941 = vld [vmem:[%s1 + $0xb0] sm:$0xff]
    %v942 = vld [vmem:[%s1 + $0xb8] sm:$0xff]
    %v943 = vld [vmem:[%s1 + $0xc0] sm:$0xff]
    %v944 = vld [vmem:[%s1 + $0xc8] sm:$0xff]
    %v945 = vld [vmem:[%s1 + $0xd0] sm:$0xff]
    %v946 = vld [vmem:[%s1 + $0xd8] sm:$0xff]
    %v947 = vld [vmem:[%s1 + $0xe0] sm:$0xff]
    %v948 = vld [vmem:[%s1 + $0xe8] sm:$0xff]
    %v949 = vld [vmem:[%s1 + $0xf0] sm:$0xff]
    %v950 = vld [vmem:[%s1 + $0xf8] sm:$0xff]
    %v951 = vld [vmem:[%s1 + $0x100] sm:$0xff]
    %v952 = vld [vmem:[%s1 + $0x108] sm:$0xff]
    %v953 = vld [vmem:[%s1 + $0x110] sm:$0xff]
    %v954 = vld [vmem:[%s1 + $0x118] sm:$0xff]
    %v955 = vld [vmem:[%s1 + $0x120] sm:$0xff]
    %v956 = vld [vmem:[%s1 + $0x128] sm:$0xff]
    %v957 = vld [vmem:[%s1 + $0x130] sm:$0xff]
    %v958 = vld [vmem:[%s1 + $0x138] sm:$0xff]
    %v959 = vld [vmem:[%s1 + $0x140] sm:$0xff]
    %v960 = vld [vmem:[%s1 + $0x148] sm:$0xff]
    %v961 = vld [vmem:[%s1 + $0x150] sm:$0xff]
    %v962 = vld [vmem:[%s1 + $0x158] sm:$0xff]
    %v963 = vld [vmem:[%s1 + $0x160] sm:$0xff]
    %v964 = vld [vmem:[%s1 + $0x168] sm:$0xff]
    %v965 = vld [vmem:[%s1 + $0x170] sm:$0xff]
    %v966 = vld [vmem:[%s1 + $0x178] sm:$0xff]
    %967 = vmatpush.msra.mxu0 %v964
    %968 = vmatpush.msra.mxu0 %v961
    %969 = vmatpush.msra.mxu0 %v958
    %970 = vmatpush.msra.mxu0 %v955
    %971 = vmatpush.msra.mxu0 %v952
    %972 = vmatpush.msra.mxu0 %v949
    %973 = vmatpush.msra.mxu0 %v946
    %974 = vmatpush.msra.mxu0 %v943
    %975 = vmatpush.msra.mxu0 %v940
    %976 = vmatpush.msra.mxu0 %v937
    %977 = vmatpush.msra.mxu0 %v934
    %978 = vmatpush.msra.mxu0 %v931
    %979 = vmatpush.msra.mxu0 %v928
    %980 = vmatpush.msra.mxu0 %v925
    %981 = vmatpush.msra.mxu0 %v922
    %982 = vmatpush.msra.mxu0 %v919
    %983 = vmatmul.f32.gmra.mxu0 %v913
    %v984 = vpop.f32.mrf.mxu0
    %v985 = vadd.f32 0.0, %v984
    %986 = vdwg.mxu0
    %987 = vmatpush.msra.mxu0 %v965
    %988 = vmatpush.msra.mxu0 %v962
    %989 = vmatpush.msra.mxu0 %v959
    %990 = vmatpush.msra.mxu0 %v956
    %991 = vmatpush.msra.mxu0 %v953
    %992 = vmatpush.msra.mxu0 %v950
    %993 = vmatpush.msra.mxu0 %v947
    %994 = vmatpush.msra.mxu0 %v944
    %995 = vmatpush.msra.mxu0 %v941
    %996 = vmatpush.msra.mxu0 %v938
    %997 = vmatpush.msra.mxu0 %v935
    %998 = vmatpush.msra.mxu0 %v932
    %999 = vmatpush.msra.mxu0 %v929
    %1000 = vmatpush.msra.mxu0 %v926
    %1001 = vmatpush.msra.mxu0 %v923
    %1002 = vmatpush.msra.mxu0 %v920
    %1003 = vmatmul.f32.gmra.mxu0 %v913
    %v1004 = vpop.f32.mrf.mxu0
    %v1005 = vadd.f32 0.0, %v1004
    %1006 = vdwg.mxu0
    %1007 = vmatpush.msra.mxu0 %v966
    %1008 = vmatpush.msra.mxu0 %v963
    %1009 = vmatpush.msra.mxu0 %v960
    %1010 = vmatpush.msra.mxu0 %v957
    %1011 = vmatpush.msra.mxu0 %v954
    %1012 = vmatpush.msra.mxu0 %v951
    %1013 = vmatpush.msra.mxu0 %v948
    %1014 = vmatpush.msra.mxu0 %v945
    %1015 = vmatpush.msra.mxu0 %v942
    %1016 = vmatpush.msra.mxu0 %v939
    %1017 = vmatpush.msra.mxu0 %v936
    %1018 = vmatpush.msra.mxu0 %v933
    %1019 = vmatpush.msra.mxu0 %v930
    %1020 = vmatpush.msra.mxu0 %v927
    %1021 = vmatpush.msra.mxu0 %v924
    %1022 = vmatpush.msra.mxu0 %v921
    %1023 = vmatmul.f32.gmra.mxu0 %v913
    %v1024 = vpop.f32.mrf.mxu0
    %v1025 = vadd.f32 0.0, %v1024
    %1026 = vdwg.mxu0
    %v1027 = vadd.f32 %v916, %v985
    %v1028 = vxor.u32 %v1027, 2147483648
    %v1029 = vmul.f32 %v1028, 1.442695
    %v1030 = vpow.pop %v1029
    %v1031 = vadd.f32 %v1030, 1.0
    %v1032 = vrcp.pop %v1031
    %v1033 = vmul.f32 %v1031, %v1032
    %v1034 = vsub.f32 1.0, %v1033
    %v1035 = vmul.f32 %v1032, %v1034
    %v1036 = vadd.f32 %v1032, %v1035
    %vm1037 = vweird.f32 %v1031
    %vm1038 = vweird.f32 %v1032
    %vm1039 = vmor %vm1037, %vm1038
    %v1040 = vsel %vm1039, %v1032, %v1036
    %v1041 = vand.u32 2147483647, %v1031
    %vm1042 = vcmp.eq.f32.partialorder %v1041, 8.507059e+37
    %v1043 = vand.u32 %v1031, 2147483648
    %v1044 = vor.u32 1.1754944e-38, %v1043
    %v1045 = vsel %vm1042, %v1044, %v1040
    %v1046 = vmul.f32 1.0, %v1045
    %v1047 = vadd.f32 %v917, %v1005
    %v1048 = vxor.u32 %v1047, 2147483648
    %v1049 = vmul.f32 %v1048, 1.442695
    %v1050 = vpow.pop %v1049
    %v1051 = vadd.f32 %v1050, 1.0
    %v1052 = vrcp.pop %v1051
    %v1053 = vmul.f32 %v1051, %v1052
    %v1054 = vsub.f32 1.0, %v1053
    %v1055 = vmul.f32 %v1052, %v1054
    %v1056 = vadd.f32 %v1052, %v1055
    %vm1057 = vweird.f32 %v1051
    %vm1058 = vweird.f32 %v1052
    %vm1059 = vmor %vm1057, %vm1058
    %v1060 = vsel %vm1059, %v1052, %v1056
    %v1061 = vand.u32 2147483647, %v1051
    %vm1062 = vcmp.eq.f32.partialorder %v1061, 8.507059e+37
    %v1063 = vand.u32 %v1051, 2147483648
    %v1064 = vor.u32 1.1754944e-38, %v1063
    %v1065 = vsel %vm1062, %v1064, %v1060
    %v1066 = vmul.f32 1.0, %v1065
    %v1067 = vadd.f32 %v1025, %v107
    %v1068 = vmul.f32 %v1046, %v1067
    %v1069 = vadd.f32 %v918, %v1068
    %v1070 = vtanh.pop %v1069
    %v1071 = vsub.f32 %v913, %v1070
    %v1072 = vmul.f32 %v1066, %v1071
    %v1073 = vadd.f32 %v1070, %v1072
    %1074 = vst [vmem:[#allocation3 + $0x30] sm:$0xff] %v1073
    %s1075 = scalar_lea.vmem %s0, 168
    %v1076 = vld [vmem:[%s1075] sm:$0xff]
    %v1077 = vld [vmem:[%s1075 + $0x8] sm:$0xff]
    %v1078 = vld [vmem:[%s1075 + $0x10] sm:$0xff]
    %v1079 = vld [vmem:[%s1] sm:$0xff]
    %v1080 = vld [vmem:[%s1 + $0x8] sm:$0xff]
    %v1081 = vld [vmem:[%s1 + $0x10] sm:$0xff]
    %v1082 = vld [vmem:[%s1 + $0x18] sm:$0xff]
    %v1083 = vld [vmem:[%s1 + $0x20] sm:$0xff]
    %v1084 = vld [vmem:[%s1 + $0x28] sm:$0xff]
    %v1085 = vld [vmem:[%s1 + $0x30] sm:$0xff]
    %v1086 = vld [vmem:[%s1 + $0x38] sm:$0xff]
    %v1087 = vld [vmem:[%s1 + $0x40] sm:$0xff]
    %v1088 = vld [vmem:[%s1 + $0x48] sm:$0xff]
    %v1089 = vld [vmem:[%s1 + $0x50] sm:$0xff]
    %v1090 = vld [vmem:[%s1 + $0x58] sm:$0xff]
    %v1091 = vld [vmem:[%s1 + $0x60] sm:$0xff]
    %v1092 = vld [vmem:[%s1 + $0x68] sm:$0xff]
    %v1093 = vld [vmem:[%s1 + $0x70] sm:$0xff]
    %v1094 = vld [vmem:[%s1 + $0x78] sm:$0xff]
    %v1095 = vld [vmem:[%s1 + $0x80] sm:$0xff]
    %v1096 = vld [vmem:[%s1 + $0x88] sm:$0xff]
    %v1097 = vld [vmem:[%s1 + $0x90] sm:$0xff]
    %v1098 = vld [vmem:[%s1 + $0x98] sm:$0xff]
    %v1099 = vld [vmem:[%s1 + $0xa0] sm:$0xff]
    %v1100 = vld [vmem:[%s1 + $0xa8] sm:$0xff]
    %v1101 = vld [vmem:[%s1 + $0xb0] sm:$0xff]
    %v1102 = vld [vmem:[%s1 + $0xb8] sm:$0xff]
    %v1103 = vld [vmem:[%s1 + $0xc0] sm:$0xff]
    %v1104 = vld [vmem:[%s1 + $0xc8] sm:$0xff]
    %v1105 = vld [vmem:[%s1 + $0xd0] sm:$0xff]
    %v1106 = vld [vmem:[%s1 + $0xd8] sm:$0xff]
    %v1107 = vld [vmem:[%s1 + $0xe0] sm:$0xff]
    %v1108 = vld [vmem:[%s1 + $0xe8] sm:$0xff]
    %v1109 = vld [vmem:[%s1 + $0xf0] sm:$0xff]
    %v1110 = vld [vmem:[%s1 + $0xf8] sm:$0xff]
    %v1111 = vld [vmem:[%s1 + $0x100] sm:$0xff]
    %v1112 = vld [vmem:[%s1 + $0x108] sm:$0xff]
    %v1113 = vld [vmem:[%s1 + $0x110] sm:$0xff]
    %v1114 = vld [vmem:[%s1 + $0x118] sm:$0xff]
    %v1115 = vld [vmem:[%s1 + $0x120] sm:$0xff]
    %v1116 = vld [vmem:[%s1 + $0x128] sm:$0xff]
    %v1117 = vld [vmem:[%s1 + $0x130] sm:$0xff]
    %v1118 = vld [vmem:[%s1 + $0x138] sm:$0xff]
    %v1119 = vld [vmem:[%s1 + $0x140] sm:$0xff]
    %v1120 = vld [vmem:[%s1 + $0x148] sm:$0xff]
    %v1121 = vld [vmem:[%s1 + $0x150] sm:$0xff]
    %v1122 = vld [vmem:[%s1 + $0x158] sm:$0xff]
    %v1123 = vld [vmem:[%s1 + $0x160] sm:$0xff]
    %v1124 = vld [vmem:[%s1 + $0x168] sm:$0xff]
    %v1125 = vld [vmem:[%s1 + $0x170] sm:$0xff]
    %v1126 = vld [vmem:[%s1 + $0x178] sm:$0xff]
    %1127 = vmatpush.msra.mxu0 %v1124
    %1128 = vmatpush.msra.mxu0 %v1121
    %1129 = vmatpush.msra.mxu0 %v1118
    %1130 = vmatpush.msra.mxu0 %v1115
    %1131 = vmatpush.msra.mxu0 %v1112
    %1132 = vmatpush.msra.mxu0 %v1109
    %1133 = vmatpush.msra.mxu0 %v1106
    %1134 = vmatpush.msra.mxu0 %v1103
    %1135 = vmatpush.msra.mxu0 %v1100
    %1136 = vmatpush.msra.mxu0 %v1097
    %1137 = vmatpush.msra.mxu0 %v1094
    %1138 = vmatpush.msra.mxu0 %v1091
    %1139 = vmatpush.msra.mxu0 %v1088
    %1140 = vmatpush.msra.mxu0 %v1085
    %1141 = vmatpush.msra.mxu0 %v1082
    %1142 = vmatpush.msra.mxu0 %v1079
    %1143 = vmatmul.f32.gmra.mxu0 %v1073
    %v1144 = vpop.f32.mrf.mxu0
    %v1145 = vadd.f32 0.0, %v1144
    %1146 = vdwg.mxu0
    %1147 = vmatpush.msra.mxu0 %v1125
    %1148 = vmatpush.msra.mxu0 %v1122
    %1149 = vmatpush.msra.mxu0 %v1119
    %1150 = vmatpush.msra.mxu0 %v1116
    %1151 = vmatpush.msra.mxu0 %v1113
    %1152 = vmatpush.msra.mxu0 %v1110
    %1153 = vmatpush.msra.mxu0 %v1107
    %1154 = vmatpush.msra.mxu0 %v1104
    %1155 = vmatpush.msra.mxu0 %v1101
    %1156 = vmatpush.msra.mxu0 %v1098
    %1157 = vmatpush.msra.mxu0 %v1095
    %1158 = vmatpush.msra.mxu0 %v1092
    %1159 = vmatpush.msra.mxu0 %v1089
    %1160 = vmatpush.msra.mxu0 %v1086
    %1161 = vmatpush.msra.mxu0 %v1083
    %1162 = vmatpush.msra.mxu0 %v1080
    %1163 = vmatmul.f32.gmra.mxu0 %v1073
    %v1164 = vpop.f32.mrf.mxu0
    %v1165 = vadd.f32 0.0, %v1164
    %1166 = vdwg.mxu0
    %1167 = vmatpush.msra.mxu0 %v1126
    %1168 = vmatpush.msra.mxu0 %v1123
    %1169 = vmatpush.msra.mxu0 %v1120
    %1170 = vmatpush.msra.mxu0 %v1117
    %1171 = vmatpush.msra.mxu0 %v1114
    %1172 = vmatpush.msra.mxu0 %v1111
    %1173 = vmatpush.msra.mxu0 %v1108
    %1174 = vmatpush.msra.mxu0 %v1105
    %1175 = vmatpush.msra.mxu0 %v1102
    %1176 = vmatpush.msra.mxu0 %v1099
    %1177 = vmatpush.msra.mxu0 %v1096
    %1178 = vmatpush.msra.mxu0 %v1093
    %1179 = vmatpush.msra.mxu0 %v1090
    %1180 = vmatpush.msra.mxu0 %v1087
    %1181 = vmatpush.msra.mxu0 %v1084
    %1182 = vmatpush.msra.mxu0 %v1081
    %1183 = vmatmul.f32.gmra.mxu0 %v1073
    %v1184 = vpop.f32.mrf.mxu0
    %v1185 = vadd.f32 0.0, %v1184
    %1186 = vdwg.mxu0
    %v1187 = vadd.f32 %v1076, %v1145
    %v1188 = vxor.u32 %v1187, 2147483648
    %v1189 = vmul.f32 %v1188, 1.442695
    %v1190 = vpow.pop %v1189
    %v1191 = vadd.f32 %v1190, 1.0
    %v1192 = vrcp.pop %v1191
    %v1193 = vmul.f32 %v1191, %v1192
    %v1194 = vsub.f32 1.0, %v1193
    %v1195 = vmul.f32 %v1192, %v1194
    %v1196 = vadd.f32 %v1192, %v1195
    %vm1197 = vweird.f32 %v1191
    %vm1198 = vweird.f32 %v1192
    %vm1199 = vmor %vm1197, %vm1198
    %v1200 = vsel %vm1199, %v1192, %v1196
    %v1201 = vand.u32 2147483647, %v1191
    %vm1202 = vcmp.eq.f32.partialorder %v1201, 8.507059e+37
    %v1203 = vand.u32 %v1191, 2147483648
    %v1204 = vor.u32 1.1754944e-38, %v1203
    %v1205 = vsel %vm1202, %v1204, %v1200
    %v1206 = vmul.f32 1.0, %v1205
    %v1207 = vadd.f32 %v1077, %v1165
    %v1208 = vxor.u32 %v1207, 2147483648
    %v1209 = vmul.f32 %v1208, 1.442695
    %v1210 = vpow.pop %v1209
    %v1211 = vadd.f32 %v1210, 1.0
    %v1212 = vrcp.pop %v1211
    %v1213 = vmul.f32 %v1211, %v1212
    %v1214 = vsub.f32 1.0, %v1213
    %v1215 = vmul.f32 %v1212, %v1214
    %v1216 = vadd.f32 %v1212, %v1215
    %vm1217 = vweird.f32 %v1211
    %vm1218 = vweird.f32 %v1212
    %vm1219 = vmor %vm1217, %vm1218
    %v1220 = vsel %vm1219, %v1212, %v1216
    %v1221 = vand.u32 2147483647, %v1211
    %vm1222 = vcmp.eq.f32.partialorder %v1221, 8.507059e+37
    %v1223 = vand.u32 %v1211, 2147483648
    %v1224 = vor.u32 1.1754944e-38, %v1223
    %v1225 = vsel %vm1222, %v1224, %v1220
    %v1226 = vmul.f32 1.0, %v1225
    %v1227 = vadd.f32 %v1185, %v107
    %v1228 = vmul.f32 %v1206, %v1227
    %v1229 = vadd.f32 %v1078, %v1228
    %v1230 = vtanh.pop %v1229
    %v1231 = vsub.f32 %v1073, %v1230
    %v1232 = vmul.f32 %v1226, %v1231
    %v1233 = vadd.f32 %v1230, %v1232
    %1234 = vst [vmem:[#allocation3 + $0x38] sm:$0xff] %v1233
    %v1235 = vld [vmem:[#allocation3] sm:$0xff]
    %v1236 = vld [vmem:[#allocation3 + $0x8] sm:$0xff]
    %v1237 = vld [vmem:[#allocation3 + $0x10] sm:$0xff]
    %v1238 = vld [vmem:[#allocation3 + $0x18] sm:$0xff]
    %v1239 = vld [vmem:[#allocation3 + $0x20] sm:$0xff]
    %v1240 = vld [vmem:[#allocation3 + $0x28] sm:$0xff]
    %v1241 = vld [vmem:[#allocation3 + $0x30] sm:$0xff]
    %v1242 = vld [vmem:[#allocation3 + $0x38] sm:$0xff]
    %v1243 = vld [vmem:[#allocation4] sm:$0xff]
    %v1244 = vld [vmem:[#allocation4 + $0x8] sm:$0xff]
    %v1245 = vld [vmem:[#allocation4 + $0x10] sm:$0xff]
    %v1246 = vld [vmem:[#allocation4 + $0x18] sm:$0xff]
    %v1247 = vld [vmem:[#allocation4 + $0x20] sm:$0xff]
    %v1248 = vld [vmem:[#allocation4 + $0x28] sm:$0xff]
    %v1249 = vld [vmem:[#allocation4 + $0x30] sm:$0xff]
    %v1250 = vld [vmem:[#allocation4 + $0x38] sm:$0xff]
    %v1251 = vld [vmem:[#allocation4 + $0x40] sm:$0xff]
    %v1252 = vld [vmem:[#allocation4 + $0x48] sm:$0xff]
    %v1253 = vld [vmem:[#allocation4 + $0x50] sm:$0xff]
    %v1254 = vld [vmem:[#allocation4 + $0x58] sm:$0xff]
    %v1255 = vld [vmem:[#allocation4 + $0x60] sm:$0xff]
    %v1256 = vld [vmem:[#allocation4 + $0x68] sm:$0xff]
    %v1257 = vld [vmem:[#allocation4 + $0x70] sm:$0xff]
    %v1258 = vld [vmem:[#allocation4 + $0x78] sm:$0xff]
    %v1259 = vld [vmem:[#allocation4 + $0x80] sm:$0xff]
    %v1260 = vld [vmem:[#allocation4 + $0x88] sm:$0xff]
    %v1261 = vld [vmem:[#allocation4 + $0x90] sm:$0xff]
    %v1262 = vld [vmem:[#allocation4 + $0x98] sm:$0xff]
    %v1263 = vld [vmem:[#allocation4 + $0xa0] sm:$0xff]
    %v1264 = vld [vmem:[#allocation4 + $0xa8] sm:$0xff]
    %v1265 = vld [vmem:[#allocation4 + $0xb0] sm:$0xff]
    %v1266 = vld [vmem:[#allocation4 + $0xb8] sm:$0xff]
    %v1267 = vld [vmem:[#allocation4 + $0xc0] sm:$0xff]
    %v1268 = vld [vmem:[#allocation4 + $0xc8] sm:$0xff]
    %v1269 = vld [vmem:[#allocation4 + $0xd0] sm:$0xff]
    %v1270 = vld [vmem:[#allocation4 + $0xd8] sm:$0xff]
    %v1271 = vld [vmem:[#allocation4 + $0xe0] sm:$0xff]
    %v1272 = vld [vmem:[#allocation4 + $0xe8] sm:$0xff]
    %v1273 = vld [vmem:[#allocation4 + $0xf0] sm:$0xff]
    %v1274 = vld [vmem:[#allocation4 + $0xf8] sm:$0xff]
    %v1275 = vld [vmem:[#allocation4 + $0x100] sm:$0xff]
    %v1276 = vld [vmem:[#allocation4 + $0x108] sm:$0xff]
    %v1277 = vld [vmem:[#allocation4 + $0x110] sm:$0xff]
    %v1278 = vld [vmem:[#allocation4 + $0x118] sm:$0xff]
    %v1279 = vld [vmem:[#allocation4 + $0x120] sm:$0xff]
    %v1280 = vld [vmem:[#allocation4 + $0x128] sm:$0xff]
    %v1281 = vld [vmem:[#allocation4 + $0x130] sm:$0xff]
    %v1282 = vld [vmem:[#allocation4 + $0x138] sm:$0xff]
    %v1283 = vld [vmem:[#allocation4 + $0x140] sm:$0xff]
    %v1284 = vld [vmem:[#allocation4 + $0x148] sm:$0xff]
    %v1285 = vld [vmem:[#allocation4 + $0x150] sm:$0xff]
    %v1286 = vld [vmem:[#allocation4 + $0x158] sm:$0xff]
    %v1287 = vld [vmem:[#allocation4 + $0x160] sm:$0xff]
    %v1288 = vld [vmem:[#allocation4 + $0x168] sm:$0xff]
    %v1289 = vld [vmem:[#allocation4 + $0x170] sm:$0xff]
    %v1290 = vld [vmem:[#allocation4 + $0x178] sm:$0xff]
    %v1291 = vld [vmem:[%s4] sm:$0x7]
    %v1293 = vperm.slane %v1291, 0
    %v1294 = vperm.slane %v1291, 1
    %v1295 = vperm.slane %v1291, 2
    %1299 = vmatpush.msra.mxu0 %v1288
    %1300 = vmatpush.msra.mxu0 %v1285
    %1301 = vmatpush.msra.mxu0 %v1282
    %1302 = vmatpush.msra.mxu0 %v1279
    %1303 = vmatpush.msra.mxu0 %v1276
    %1304 = vmatpush.msra.mxu0 %v1273
    %1305 = vmatpush.msra.mxu0 %v1270
    %1306 = vmatpush.msra.mxu0 %v1267
    %1307 = vmatpush.msra.mxu0 %v1264
    %1308 = vmatpush.msra.mxu0 %v1261
    %1309 = vmatpush.msra.mxu0 %v1258
    %1310 = vmatpush.msra.mxu0 %v1255
    %1311 = vmatpush.msra.mxu0 %v1252
    %1312 = vmatpush.msra.mxu0 %v1249
    %1313 = vmatpush.msra.mxu0 %v1246
    %1314 = vmatpush.msra.mxu0 %v1243
    %1315 = vmatmul.f32.gmra.mxu0 %v1235
    %v1316 = vpop.f32.mrf.mxu0
    %v1317 = vadd.f32 %v1293, %v1316
    %1318 = vmatmul.f32.gmra.mxu0 %v1236
    %v1319 = vpop.f32.mrf.mxu0
    %v1320 = vadd.f32 %v1293, %v1319
    %1321 = vmatmul.f32.gmra.mxu0 %v1237
    %v1322 = vpop.f32.mrf.mxu0
    %v1323 = vadd.f32 %v1293, %v1322
    %1324 = vmatmul.f32.gmra.mxu0 %v1238
    %v1325 = vpop.f32.mrf.mxu0
    %v1326 = vadd.f32 %v1293, %v1325
    %1327 = vmatmul.f32.gmra.mxu0 %v1239
    %v1328 = vpop.f32.mrf.mxu0
    %v1329 = vadd.f32 %v1293, %v1328
    %1330 = vmatmul.f32.gmra.mxu0 %v1240
    %v1331 = vpop.f32.mrf.mxu0
    %v1332 = vadd.f32 %v1293, %v1331
    %1333 = vmatmul.f32.gmra.mxu0 %v1241
    %v1334 = vpop.f32.mrf.mxu0
    %v1335 = vadd.f32 %v1293, %v1334
    %1336 = vmatmul.f32.gmra.mxu0 %v1242
    %v1337 = vpop.f32.mrf.mxu0
    %v1338 = vadd.f32 %v1293, %v1337
    %1339 = vdwg.mxu0
    %1340 = vmatpush.msra.mxu0 %v1289
    %1341 = vmatpush.msra.mxu0 %v1286
    %1342 = vmatpush.msra.mxu0 %v1283
    %1343 = vmatpush.msra.mxu0 %v1280
    %1344 = vmatpush.msra.mxu0 %v1277
    %1345 = vmatpush.msra.mxu0 %v1274
    %1346 = vmatpush.msra.mxu0 %v1271
    %1347 = vmatpush.msra.mxu0 %v1268
    %1348 = vmatpush.msra.mxu0 %v1265
    %1349 = vmatpush.msra.mxu0 %v1262
    %1350 = vmatpush.msra.mxu0 %v1259
    %1351 = vmatpush.msra.mxu0 %v1256
    %1352 = vmatpush.msra.mxu0 %v1253
    %1353 = vmatpush.msra.mxu0 %v1250
    %1354 = vmatpush.msra.mxu0 %v1247
    %1355 = vmatpush.msra.mxu0 %v1244
    %1356 = vmatmul.f32.gmra.mxu0 %v1235
    %v1357 = vpop.f32.mrf.mxu0
    %v1358 = vadd.f32 %v1294, %v1357
    %1359 = vmatmul.f32.gmra.mxu0 %v1236
    %v1360 = vpop.f32.mrf.mxu0
    %v1361 = vadd.f32 %v1294, %v1360
    %1362 = vmatmul.f32.gmra.mxu0 %v1237
    %v1363 = vpop.f32.mrf.mxu0
    %v1364 = vadd.f32 %v1294, %v1363
    %1365 = vmatmul.f32.gmra.mxu0 %v1238
    %v1366 = vpop.f32.mrf.mxu0
    %v1367 = vadd.f32 %v1294, %v1366
    %1368 = vmatmul.f32.gmra.mxu0 %v1239
    %v1369 = vpop.f32.mrf.mxu0
    %v1370 = vadd.f32 %v1294, %v1369
    %1371 = vmatmul.f32.gmra.mxu0 %v1240
    %v1372 = vpop.f32.mrf.mxu0
    %v1373 = vadd.f32 %v1294, %v1372
    %1374 = vmatmul.f32.gmra.mxu0 %v1241
    %v1375 = vpop.f32.mrf.mxu0
    %v1376 = vadd.f32 %v1294, %v1375
    %1377 = vmatmul.f32.gmra.mxu0 %v1242
    %v1378 = vpop.f32.mrf.mxu0
    %v1379 = vadd.f32 %v1294, %v1378
    %1380 = vdwg.mxu0
    %1381 = vmatpush.msra.mxu0 %v1290
    %1382 = vmatpush.msra.mxu0 %v1287
    %1383 = vmatpush.msra.mxu0 %v1284
    %1384 = vmatpush.msra.mxu0 %v1281
    %1385 = vmatpush.msra.mxu0 %v1278
    %1386 = vmatpush.msra.mxu0 %v1275
    %1387 = vmatpush.msra.mxu0 %v1272
    %1388 = vmatpush.msra.mxu0 %v1269
    %1389 = vmatpush.msra.mxu0 %v1266
    %1390 = vmatpush.msra.mxu0 %v1263
    %1391 = vmatpush.msra.mxu0 %v1260
    %1392 = vmatpush.msra.mxu0 %v1257
    %1393 = vmatpush.msra.mxu0 %v1254
    %1394 = vmatpush.msra.mxu0 %v1251
    %1395 = vmatpush.msra.mxu0 %v1248
    %1396 = vmatpush.msra.mxu0 %v1245
    %1397 = vmatmul.f32.gmra.mxu0 %v1235
    %v1398 = vpop.f32.mrf.mxu0
    %v1399 = vadd.f32 %v1295, %v1398
    %1400 = vmatmul.f32.gmra.mxu0 %v1236
    %v1401 = vpop.f32.mrf.mxu0
    %v1402 = vadd.f32 %v1295, %v1401
    %1403 = vmatmul.f32.gmra.mxu0 %v1237
    %v1404 = vpop.f32.mrf.mxu0
    %v1405 = vadd.f32 %v1295, %v1404
    %1406 = vmatmul.f32.gmra.mxu0 %v1238
    %v1407 = vpop.f32.mrf.mxu0
    %v1408 = vadd.f32 %v1295, %v1407
    %1409 = vmatmul.f32.gmra.mxu0 %v1239
    %v1410 = vpop.f32.mrf.mxu0
    %v1411 = vadd.f32 %v1295, %v1410
    %1412 = vmatmul.f32.gmra.mxu0 %v1240
    %v1413 = vpop.f32.mrf.mxu0
    %v1414 = vadd.f32 %v1295, %v1413
    %1415 = vmatmul.f32.gmra.mxu0 %v1241
    %v1416 = vpop.f32.mrf.mxu0
    %v1417 = vadd.f32 %v1295, %v1416
    %1418 = vmatmul.f32.gmra.mxu0 %v1242
    %v1419 = vpop.f32.mrf.mxu0
    %v1420 = vadd.f32 %v1295, %v1419
    %1421 = vdwg.mxu0
    %1422 = vst [vmem:[#allocation2] sm:$0xff] %v1317
    %1423 = vst [vmem:[#allocation2 + $0x8] sm:$0xff] %v1358
    %1424 = vst [vmem:[#allocation2 + $0x10] sm:$0xff] %v1399
    %1425 = vst [vmem:[#allocation2 + $0x18] sm:$0xff] %v1320
    %1426 = vst [vmem:[#allocation2 + $0x20] sm:$0xff] %v1361
    %1427 = vst [vmem:[#allocation2 + $0x28] sm:$0xff] %v1402
    %1428 = vst [vmem:[#allocation2 + $0x30] sm:$0xff] %v1323
    %1429 = vst [vmem:[#allocation2 + $0x38] sm:$0xff] %v1364
    %1430 = vst [vmem:[#allocation2 + $0x40] sm:$0xff] %v1405
    %1431 = vst [vmem:[#allocation2 + $0x48] sm:$0xff] %v1326
    %1432 = vst [vmem:[#allocation2 + $0x50] sm:$0xff] %v1367
    %1433 = vst [vmem:[#allocation2 + $0x58] sm:$0xff] %v1408
    %1434 = vst [vmem:[#allocation2 + $0x60] sm:$0xff] %v1329
    %1435 = vst [vmem:[#allocation2 + $0x68] sm:$0xff] %v1370
    %1436 = vst [vmem:[#allocation2 + $0x70] sm:$0xff] %v1411
    %1437 = vst [vmem:[#allocation2 + $0x78] sm:$0xff] %v1332
    %1438 = vst [vmem:[#allocation2 + $0x80] sm:$0xff] %v1373
    %1439 = vst [vmem:[#allocation2 + $0x88] sm:$0xff] %v1414
    %1440 = vst [vmem:[#allocation2 + $0x90] sm:$0xff] %v1335
    %1441 = vst [vmem:[#allocation2 + $0x98] sm:$0xff] %v1376
    %1442 = vst [vmem:[#allocation2 + $0xa0] sm:$0xff] %v1417
    %1443 = vst [vmem:[#allocation2 + $0xa8] sm:$0xff] %v1338
    %1444 = vst [vmem:[#allocation2 + $0xb0] sm:$0xff] %v1379
    %1445 = vst [vmem:[#allocation2 + $0xb8] sm:$0xff] %v1420
    %v1446 = vld [vmem:[%s6] sm:$0x1]
    %v1447 = vld [vmem:[#allocation2] sm:$0xff]
    %v1448 = vld [vmem:[#allocation2 + $0x8] sm:$0xff]
    %v1449 = vld [vmem:[#allocation2 + $0x10] sm:$0xff]
    %v1450 = vxor.u32 %v1447, 2147483648
    %v1451 = vmul.f32 %v1450, 1.442695
    %v1452 = vpow.pop %v1451
    %v1453 = vadd.f32 %v1452, 1.0
    %v1454 = vrcp.pop %v1453
    %v1455 = vmul.f32 %v1453, %v1454
    %v1456 = vsub.f32 1.0, %v1455
    %v1457 = vmul.f32 %v1454, %v1456
    %v1458 = vadd.f32 %v1454, %v1457
    %vm1459 = vweird.f32 %v1453
    %vm1460 = vweird.f32 %v1454
    %vm1461 = vmor %vm1459, %vm1460
    %v1462 = vsel %vm1461, %v1454, %v1458
    %v1463 = vand.u32 2147483647, %v1453
    %vm1464 = vcmp.eq.f32.partialorder %v1463, 8.507059e+37
    %v1465 = vand.u32 %v1453, 2147483648
    %v1466 = vor.u32 1.1754944e-38, %v1465
    %v1467 = vsel %vm1464, %v1466, %v1462
    %v1468 = vmul.f32 1.0, %v1467
    %v1469 = vxor.u32 %v1448, 2147483648
    %v1470 = vmul.f32 %v1469, 1.442695
    %v1471 = vpow.pop %v1470
    %v1472 = vadd.f32 %v1471, 1.0
    %v1473 = vrcp.pop %v1472
    %v1474 = vmul.f32 %v1472, %v1473
    %v1475 = vsub.f32 1.0, %v1474
    %v1476 = vmul.f32 %v1473, %v1475
    %v1477 = vadd.f32 %v1473, %v1476
    %vm1478 = vweird.f32 %v1472
    %vm1479 = vweird.f32 %v1473
    %vm1480 = vmor %vm1478, %vm1479
    %v1481 = vsel %vm1480, %v1473, %v1477
    %v1482 = vand.u32 2147483647, %v1472
    %vm1483 = vcmp.eq.f32.partialorder %v1482, 8.507059e+37
    %v1484 = vand.u32 %v1472, 2147483648
    %v1485 = vor.u32 1.1754944e-38, %v1484
    %v1486 = vsel %vm1483, %v1485, %v1481
    %v1487 = vmul.f32 1.0, %v1486
    %v1489 = vperm.slane %v1446, 0
    %v1491 = vmul.f32 %v1468, %v1489
    %v1492 = vadd.f32 %v1449, %v1491
    %v1493 = vtanh.pop %v1492
    %v1494 = vmul.f32 %v1487, %v1493
    %v1495 = vsub.f32 %v1493, %v1494
    %v1496 = vld [vmem:[#allocation2 + $0x18] sm:$0xff]
    %v1497 = vld [vmem:[#allocation2 + $0x20] sm:$0xff]
    %v1498 = vld [vmem:[#allocation2 + $0x28] sm:$0xff]
    %v1499 = vld [vmem:[#allocation6] sm:$0xff]
    %v1500 = vld [vmem:[#allocation6 + $0x8] sm:$0xff]
    %v1501 = vld [vmem:[#allocation6 + $0x10] sm:$0xff]
    %v1502 = vld [vmem:[#allocation6 + $0x18] sm:$0xff]
    %v1503 = vld [vmem:[#allocation6 + $0x20] sm:$0xff]
    %v1504 = vld [vmem:[#allocation6 + $0x28] sm:$0xff]
    %v1505 = vld [vmem:[#allocation6 + $0x30] sm:$0xff]
    %v1506 = vld [vmem:[#allocation6 + $0x38] sm:$0xff]
    %v1507 = vld [vmem:[#allocation6 + $0x40] sm:$0xff]
    %v1508 = vld [vmem:[#allocation6 + $0x48] sm:$0xff]
    %v1509 = vld [vmem:[#allocation6 + $0x50] sm:$0xff]
    %v1510 = vld [vmem:[#allocation6 + $0x58] sm:$0xff]
    %v1511 = vld [vmem:[#allocation6 + $0x60] sm:$0xff]
    %v1512 = vld [vmem:[#allocation6 + $0x68] sm:$0xff]
    %v1513 = vld [vmem:[#allocation6 + $0x70] sm:$0xff]
    %v1514 = vld [vmem:[#allocation6 + $0x78] sm:$0xff]
    %v1515 = vld [vmem:[#allocation6 + $0x80] sm:$0xff]
    %v1516 = vld [vmem:[#allocation6 + $0x88] sm:$0xff]
    %v1517 = vld [vmem:[#allocation6 + $0x90] sm:$0xff]
    %v1518 = vld [vmem:[#allocation6 + $0x98] sm:$0xff]
    %v1519 = vld [vmem:[#allocation6 + $0xa0] sm:$0xff]
    %v1520 = vld [vmem:[#allocation6 + $0xa8] sm:$0xff]
    %v1521 = vld [vmem:[#allocation6 + $0xb0] sm:$0xff]
    %v1522 = vld [vmem:[#allocation6 + $0xb8] sm:$0xff]
    %v1523 = vld [vmem:[#allocation6 + $0xc0] sm:$0xff]
    %v1524 = vld [vmem:[#allocation6 + $0xc8] sm:$0xff]
    %v1525 = vld [vmem:[#allocation6 + $0xd0] sm:$0xff]
    %v1526 = vld [vmem:[#allocation6 + $0xd8] sm:$0xff]
    %v1527 = vld [vmem:[#allocation6 + $0xe0] sm:$0xff]
    %v1528 = vld [vmem:[#allocation6 + $0xe8] sm:$0xff]
    %v1529 = vld [vmem:[#allocation6 + $0xf0] sm:$0xff]
    %v1530 = vld [vmem:[#allocation6 + $0xf8] sm:$0xff]
    %v1531 = vld [vmem:[#allocation6 + $0x100] sm:$0xff]
    %v1532 = vld [vmem:[#allocation6 + $0x108] sm:$0xff]
    %v1533 = vld [vmem:[#allocation6 + $0x110] sm:$0xff]
    %v1534 = vld [vmem:[#allocation6 + $0x118] sm:$0xff]
    %v1535 = vld [vmem:[#allocation6 + $0x120] sm:$0xff]
    %v1536 = vld [vmem:[#allocation6 + $0x128] sm:$0xff]
    %v1537 = vld [vmem:[#allocation6 + $0x130] sm:$0xff]
    %v1538 = vld [vmem:[#allocation6 + $0x138] sm:$0xff]
    %v1539 = vld [vmem:[#allocation6 + $0x140] sm:$0xff]
    %v1540 = vld [vmem:[#allocation6 + $0x148] sm:$0xff]
    %v1541 = vld [vmem:[#allocation6 + $0x150] sm:$0xff]
    %v1542 = vld [vmem:[#allocation6 + $0x158] sm:$0xff]
    %v1543 = vld [vmem:[#allocation6 + $0x160] sm:$0xff]
    %v1544 = vld [vmem:[#allocation6 + $0x168] sm:$0xff]
    %v1545 = vld [vmem:[#allocation6 + $0x170] sm:$0xff]
    %v1546 = vld [vmem:[#allocation6 + $0x178] sm:$0xff]
    %1547 = vmatpush.msra.mxu0 %v1544
    %1548 = vmatpush.msra.mxu0 %v1541
    %1549 = vmatpush.msra.mxu0 %v1538
    %1550 = vmatpush.msra.mxu0 %v1535
    %1551 = vmatpush.msra.mxu0 %v1532
    %1552 = vmatpush.msra.mxu0 %v1529
    %1553 = vmatpush.msra.mxu0 %v1526
    %1554 = vmatpush.msra.mxu0 %v1523
    %1555 = vmatpush.msra.mxu0 %v1520
    %1556 = vmatpush.msra.mxu0 %v1517
    %1557 = vmatpush.msra.mxu0 %v1514
    %1558 = vmatpush.msra.mxu0 %v1511
    %1559 = vmatpush.msra.mxu0 %v1508
    %1560 = vmatpush.msra.mxu0 %v1505
    %1561 = vmatpush.msra.mxu0 %v1502
    %1562 = vmatpush.msra.mxu0 %v1499
    %1563 = vmatmul.f32.gmra.mxu0 %v1495
    %v1564 = vpop.f32.mrf.mxu0
    %v1565 = vadd.f32 0.0, %v1564
    %1566 = vdwg.mxu0
    %1567 = vmatpush.msra.mxu0 %v1545
    %1568 = vmatpush.msra.mxu0 %v1542
    %1569 = vmatpush.msra.mxu0 %v1539
    %1570 = vmatpush.msra.mxu0 %v1536
    %1571 = vmatpush.msra.mxu0 %v1533
    %1572 = vmatpush.msra.mxu0 %v1530
    %1573 = vmatpush.msra.mxu0 %v1527
    %1574 = vmatpush.msra.mxu0 %v1524
    %1575 = vmatpush.msra.mxu0 %v1521
    %1576 = vmatpush.msra.mxu0 %v1518
    %1577 = vmatpush.msra.mxu0 %v1515
    %1578 = vmatpush.msra.mxu0 %v1512
    %1579 = vmatpush.msra.mxu0 %v1509
    %1580 = vmatpush.msra.mxu0 %v1506
    %1581 = vmatpush.msra.mxu0 %v1503
    %1582 = vmatpush.msra.mxu0 %v1500
    %1583 = vmatmul.f32.gmra.mxu0 %v1495
    %v1584 = vpop.f32.mrf.mxu0
    %v1585 = vadd.f32 0.0, %v1584
    %1586 = vdwg.mxu0
    %1587 = vmatpush.msra.mxu0 %v1546
    %1588 = vmatpush.msra.mxu0 %v1543
    %1589 = vmatpush.msra.mxu0 %v1540
    %1590 = vmatpush.msra.mxu0 %v1537
    %1591 = vmatpush.msra.mxu0 %v1534
    %1592 = vmatpush.msra.mxu0 %v1531
    %1593 = vmatpush.msra.mxu0 %v1528
    %1594 = vmatpush.msra.mxu0 %v1525
    %1595 = vmatpush.msra.mxu0 %v1522
    %1596 = vmatpush.msra.mxu0 %v1519
    %1597 = vmatpush.msra.mxu0 %v1516
    %1598 = vmatpush.msra.mxu0 %v1513
    %1599 = vmatpush.msra.mxu0 %v1510
    %1600 = vmatpush.msra.mxu0 %v1507
    %1601 = vmatpush.msra.mxu0 %v1504
    %1602 = vmatpush.msra.mxu0 %v1501
    %1603 = vmatmul.f32.gmra.mxu0 %v1495
    %v1604 = vpop.f32.mrf.mxu0
    %v1605 = vadd.f32 0.0, %v1604
    %1606 = vdwg.mxu0
    %v1607 = vadd.f32 %v1496, %v1565
    %v1608 = vxor.u32 %v1607, 2147483648
    %v1609 = vmul.f32 %v1608, 1.442695
    %v1610 = vpow.pop %v1609
    %v1611 = vadd.f32 %v1610, 1.0
    %v1612 = vrcp.pop %v1611
    %v1613 = vmul.f32 %v1611, %v1612
    %v1614 = vsub.f32 1.0, %v1613
    %v1615 = vmul.f32 %v1612, %v1614
    %v1616 = vadd.f32 %v1612, %v1615
    %vm1617 = vweird.f32 %v1611
    %vm1618 = vweird.f32 %v1612
    %vm1619 = vmor %vm1617, %vm1618
    %v1620 = vsel %vm1619, %v1612, %v1616
    %v1621 = vand.u32 2147483647, %v1611
    %vm1622 = vcmp.eq.f32.partialorder %v1621, 8.507059e+37
    %v1623 = vand.u32 %v1611, 2147483648
    %v1624 = vor.u32 1.1754944e-38, %v1623
    %v1625 = vsel %vm1622, %v1624, %v1620
    %v1626 = vmul.f32 1.0, %v1625
    %v1627 = vadd.f32 %v1497, %v1585
    %v1628 = vxor.u32 %v1627, 2147483648
    %v1629 = vmul.f32 %v1628, 1.442695
    %v1630 = vpow.pop %v1629
    %v1631 = vadd.f32 %v1630, 1.0
    %v1632 = vrcp.pop %v1631
    %v1633 = vmul.f32 %v1631, %v1632
    %v1634 = vsub.f32 1.0, %v1633
    %v1635 = vmul.f32 %v1632, %v1634
    %v1636 = vadd.f32 %v1632, %v1635
    %vm1637 = vweird.f32 %v1631
    %vm1638 = vweird.f32 %v1632
    %vm1639 = vmor %vm1637, %vm1638
    %v1640 = vsel %vm1639, %v1632, %v1636
    %v1641 = vand.u32 2147483647, %v1631
    %vm1642 = vcmp.eq.f32.partialorder %v1641, 8.507059e+37
    %v1643 = vand.u32 %v1631, 2147483648
    %v1644 = vor.u32 1.1754944e-38, %v1643
    %v1645 = vsel %vm1642, %v1644, %v1640
    %v1646 = vmul.f32 1.0, %v1645
    %v1647 = vadd.f32 %v1605, %v1489
    %v1648 = vmul.f32 %v1626, %v1647
    %v1649 = vadd.f32 %v1498, %v1648
    %v1650 = vtanh.pop %v1649
    %v1651 = vsub.f32 %v1495, %v1650
    %v1652 = vmul.f32 %v1646, %v1651
    %v1653 = vadd.f32 %v1650, %v1652
    %v1654 = vld [vmem:[#allocation2 + $0x30] sm:$0xff]
    %v1655 = vld [vmem:[#allocation2 + $0x38] sm:$0xff]
    %v1656 = vld [vmem:[#allocation2 + $0x40] sm:$0xff]
    %1657 = vmatpush.msra.mxu0 %v1544
    %1658 = vmatpush.msra.mxu0 %v1541
    %1659 = vmatpush.msra.mxu0 %v1538
    %1660 = vmatpush.msra.mxu0 %v1535
    %1661 = vmatpush.msra.mxu0 %v1532
    %1662 = vmatpush.msra.mxu0 %v1529
    %1663 = vmatpush.msra.mxu0 %v1526
    %1664 = vmatpush.msra.mxu0 %v1523
    %1665 = vmatpush.msra.mxu0 %v1520
    %1666 = vmatpush.msra.mxu0 %v1517
    %1667 = vmatpush.msra.mxu0 %v1514
    %1668 = vmatpush.msra.mxu0 %v1511
    %1669 = vmatpush.msra.mxu0 %v1508
    %1670 = vmatpush.msra.mxu0 %v1505
    %1671 = vmatpush.msra.mxu0 %v1502
    %1672 = vmatpush.msra.mxu0 %v1499
    %1673 = vmatmul.f32.gmra.mxu0 %v1653
    %v1674 = vpop.f32.mrf.mxu0
    %v1675 = vadd.f32 0.0, %v1674
    %1676 = vdwg.mxu0
    %1677 = vmatpush.msra.mxu0 %v1545
    %1678 = vmatpush.msra.mxu0 %v1542
    %1679 = vmatpush.msra.mxu0 %v1539
    %1680 = vmatpush.msra.mxu0 %v1536
    %1681 = vmatpush.msra.mxu0 %v1533
    %1682 = vmatpush.msra.mxu0 %v1530
    %1683 = vmatpush.msra.mxu0 %v1527
    %1684 = vmatpush.msra.mxu0 %v1524
    %1685 = vmatpush.msra.mxu0 %v1521
    %1686 = vmatpush.msra.mxu0 %v1518
    %1687 = vmatpush.msra.mxu0 %v1515
    %1688 = vmatpush.msra.mxu0 %v1512
    %1689 = vmatpush.msra.mxu0 %v1509
    %1690 = vmatpush.msra.mxu0 %v1506
    %1691 = vmatpush.msra.mxu0 %v1503
    %1692 = vmatpush.msra.mxu0 %v1500
    %1693 = vmatmul.f32.gmra.mxu0 %v1653
    %v1694 = vpop.f32.mrf.mxu0
    %v1695 = vadd.f32 0.0, %v1694
    %1696 = vdwg.mxu0
    %1697 = vmatpush.msra.mxu0 %v1546
    %1698 = vmatpush.msra.mxu0 %v1543
    %1699 = vmatpush.msra.mxu0 %v1540
    %1700 = vmatpush.msra.mxu0 %v1537
    %1701 = vmatpush.msra.mxu0 %v1534
    %1702 = vmatpush.msra.mxu0 %v1531
    %1703 = vmatpush.msra.mxu0 %v1528
    %1704 = vmatpush.msra.mxu0 %v1525
    %1705 = vmatpush.msra.mxu0 %v1522
    %1706 = vmatpush.msra.mxu0 %v1519
    %1707 = vmatpush.msra.mxu0 %v1516
    %1708 = vmatpush.msra.mxu0 %v1513
    %1709 = vmatpush.msra.mxu0 %v1510
    %1710 = vmatpush.msra.mxu0 %v1507
    %1711 = vmatpush.msra.mxu0 %v1504
    %1712 = vmatpush.msra.mxu0 %v1501
    %1713 = vmatmul.f32.gmra.mxu0 %v1653
    %v1714 = vpop.f32.mrf.mxu0
    %v1715 = vadd.f32 0.0, %v1714
    %1716 = vdwg.mxu0
    %v1717 = vadd.f32 %v1654, %v1675
    %v1718 = vxor.u32 %v1717, 2147483648
    %v1719 = vmul.f32 %v1718, 1.442695
    %v1720 = vpow.pop %v1719
    %v1721 = vadd.f32 %v1720, 1.0
    %v1722 = vrcp.pop %v1721
    %v1723 = vmul.f32 %v1721, %v1722
    %v1724 = vsub.f32 1.0, %v1723
    %v1725 = vmul.f32 %v1722, %v1724
    %v1726 = vadd.f32 %v1722, %v1725
    %vm1727 = vweird.f32 %v1721
    %vm1728 = vweird.f32 %v1722
    %vm1729 = vmor %vm1727, %vm1728
    %v1730 = vsel %vm1729, %v1722, %v1726
    %v1731 = vand.u32 2147483647, %v1721
    %vm1732 = vcmp.eq.f32.partialorder %v1731, 8.507059e+37
    %v1733 = vand.u32 %v1721, 2147483648
    %v1734 = vor.u32 1.1754944e-38, %v1733
    %v1735 = vsel %vm1732, %v1734, %v1730
    %v1736 = vmul.f32 1.0, %v1735
    %v1737 = vadd.f32 %v1655, %v1695
    %v1738 = vxor.u32 %v1737, 2147483648
    %v1739 = vmul.f32 %v1738, 1.442695
    %v1740 = vpow.pop %v1739
    %v1741 = vadd.f32 %v1740, 1.0
    %v1742 = vrcp.pop %v1741
    %v1743 = vmul.f32 %v1741, %v1742
    %v1744 = vsub.f32 1.0, %v1743
    %v1745 = vmul.f32 %v1742, %v1744
    %v1746 = vadd.f32 %v1742, %v1745
    %vm1747 = vweird.f32 %v1741
    %vm1748 = vweird.f32 %v1742
    %vm1749 = vmor %vm1747, %vm1748
    %v1750 = vsel %vm1749, %v1742, %v1746
    %v1751 = vand.u32 2147483647, %v1741
    %vm1752 = vcmp.eq.f32.partialorder %v1751, 8.507059e+37
    %v1753 = vand.u32 %v1741, 2147483648
    %v1754 = vor.u32 1.1754944e-38, %v1753
    %v1755 = vsel %vm1752, %v1754, %v1750
    %v1756 = vmul.f32 1.0, %v1755
    %v1757 = vadd.f32 %v1715, %v1489
    %v1758 = vmul.f32 %v1736, %v1757
    %v1759 = vadd.f32 %v1656, %v1758
    %v1760 = vtanh.pop %v1759
    %v1761 = vsub.f32 %v1653, %v1760
    %v1762 = vmul.f32 %v1756, %v1761
    %v1763 = vadd.f32 %v1760, %v1762
    %v1764 = vld [vmem:[#allocation2 + $0x48] sm:$0xff]
    %v1765 = vld [vmem:[#allocation2 + $0x50] sm:$0xff]
    %v1766 = vld [vmem:[#allocation2 + $0x58] sm:$0xff]
    %1767 = vmatpush.msra.mxu0 %v1544
    %1768 = vmatpush.msra.mxu0 %v1541
    %1769 = vmatpush.msra.mxu0 %v1538
    %1770 = vmatpush.msra.mxu0 %v1535
    %1771 = vmatpush.msra.mxu0 %v1532
    %1772 = vmatpush.msra.mxu0 %v1529
    %1773 = vmatpush.msra.mxu0 %v1526
    %1774 = vmatpush.msra.mxu0 %v1523
    %1775 = vmatpush.msra.mxu0 %v1520
    %1776 = vmatpush.msra.mxu0 %v1517
    %1777 = vmatpush.msra.mxu0 %v1514
    %1778 = vmatpush.msra.mxu0 %v1511
    %1779 = vmatpush.msra.mxu0 %v1508
    %1780 = vmatpush.msra.mxu0 %v1505
    %1781 = vmatpush.msra.mxu0 %v1502
    %1782 = vmatpush.msra.mxu0 %v1499
    %1783 = vmatmul.f32.gmra.mxu0 %v1763
    %v1784 = vpop.f32.mrf.mxu0
    %v1785 = vadd.f32 0.0, %v1784
    %1786 = vdwg.mxu0
    %1787 = vmatpush.msra.mxu0 %v1545
    %1788 = vmatpush.msra.mxu0 %v1542
    %1789 = vmatpush.msra.mxu0 %v1539
    %1790 = vmatpush.msra.mxu0 %v1536
    %1791 = vmatpush.msra.mxu0 %v1533
    %1792 = vmatpush.msra.mxu0 %v1530
    %1793 = vmatpush.msra.mxu0 %v1527
    %1794 = vmatpush.msra.mxu0 %v1524
    %1795 = vmatpush.msra.mxu0 %v1521
    %1796 = vmatpush.msra.mxu0 %v1518
    %1797 = vmatpush.msra.mxu0 %v1515
    %1798 = vmatpush.msra.mxu0 %v1512
    %1799 = vmatpush.msra.mxu0 %v1509
    %1800 = vmatpush.msra.mxu0 %v1506
    %1801 = vmatpush.msra.mxu0 %v1503
    %1802 = vmatpush.msra.mxu0 %v1500
    %1803 = vmatmul.f32.gmra.mxu0 %v1763
    %v1804 = vpop.f32.mrf.mxu0
    %v1805 = vadd.f32 0.0, %v1804
    %1806 = vdwg.mxu0
    %1807 = vmatpush.msra.mxu0 %v1546
    %1808 = vmatpush.msra.mxu0 %v1543
    %1809 = vmatpush.msra.mxu0 %v1540
    %1810 = vmatpush.msra.mxu0 %v1537
    %1811 = vmatpush.msra.mxu0 %v1534
    %1812 = vmatpush.msra.mxu0 %v1531
    %1813 = vmatpush.msra.mxu0 %v1528
    %1814 = vmatpush.msra.mxu0 %v1525
    %1815 = vmatpush.msra.mxu0 %v1522
    %1816 = vmatpush.msra.mxu0 %v1519
    %1817 = vmatpush.msra.mxu0 %v1516
    %1818 = vmatpush.msra.mxu0 %v1513
    %1819 = vmatpush.msra.mxu0 %v1510
    %1820 = vmatpush.msra.mxu0 %v1507
    %1821 = vmatpush.msra.mxu0 %v1504
    %1822 = vmatpush.msra.mxu0 %v1501
    %1823 = vmatmul.f32.gmra.mxu0 %v1763
    %v1824 = vpop.f32.mrf.mxu0
    %v1825 = vadd.f32 0.0, %v1824
    %1826 = vdwg.mxu0
    %v1827 = vadd.f32 %v1764, %v1785
    %v1828 = vxor.u32 %v1827, 2147483648
    %v1829 = vmul.f32 %v1828, 1.442695
    %v1830 = vpow.pop %v1829
    %v1831 = vadd.f32 %v1830, 1.0
    %v1832 = vrcp.pop %v1831
    %v1833 = vmul.f32 %v1831, %v1832
    %v1834 = vsub.f32 1.0, %v1833
    %v1835 = vmul.f32 %v1832, %v1834
    %v1836 = vadd.f32 %v1832, %v1835
    %vm1837 = vweird.f32 %v1831
    %vm1838 = vweird.f32 %v1832
    %vm1839 = vmor %vm1837, %vm1838
    %v1840 = vsel %vm1839, %v1832, %v1836
    %v1841 = vand.u32 2147483647, %v1831
    %vm1842 = vcmp.eq.f32.partialorder %v1841, 8.507059e+37
    %v1843 = vand.u32 %v1831, 2147483648
    %v1844 = vor.u32 1.1754944e-38, %v1843
    %v1845 = vsel %vm1842, %v1844, %v1840
    %v1846 = vmul.f32 1.0, %v1845
    %v1847 = vadd.f32 %v1765, %v1805
    %v1848 = vxor.u32 %v1847, 2147483648
    %v1849 = vmul.f32 %v1848, 1.442695
    %v1850 = vpow.pop %v1849
    %v1851 = vadd.f32 %v1850, 1.0
    %v1852 = vrcp.pop %v1851
    %v1853 = vmul.f32 %v1851, %v1852
    %v1854 = vsub.f32 1.0, %v1853
    %v1855 = vmul.f32 %v1852, %v1854
    %v1856 = vadd.f32 %v1852, %v1855
    %vm1857 = vweird.f32 %v1851
    %vm1858 = vweird.f32 %v1852
    %vm1859 = vmor %vm1857, %vm1858
    %v1860 = vsel %vm1859, %v1852, %v1856
    %v1861 = vand.u32 2147483647, %v1851
    %vm1862 = vcmp.eq.f32.partialorder %v1861, 8.507059e+37
    %v1863 = vand.u32 %v1851, 2147483648
    %v1864 = vor.u32 1.1754944e-38, %v1863
    %v1865 = vsel %vm1862, %v1864, %v1860
    %v1866 = vmul.f32 1.0, %v1865
    %v1867 = vadd.f32 %v1825, %v1489
    %v1868 = vmul.f32 %v1846, %v1867
    %v1869 = vadd.f32 %v1766, %v1868
    %v1870 = vtanh.pop %v1869
    %v1871 = vsub.f32 %v1763, %v1870
    %v1872 = vmul.f32 %v1866, %v1871
    %v1873 = vadd.f32 %v1870, %v1872
    %v1874 = vld [vmem:[#allocation2 + $0x60] sm:$0xff]
    %v1875 = vld [vmem:[#allocation2 + $0x68] sm:$0xff]
    %v1876 = vld [vmem:[#allocation2 + $0x70] sm:$0xff]
    %1877 = vmatpush.msra.mxu0 %v1544
    %1878 = vmatpush.msra.mxu0 %v1541
    %1879 = vmatpush.msra.mxu0 %v1538
    %1880 = vmatpush.msra.mxu0 %v1535
    %1881 = vmatpush.msra.mxu0 %v1532
    %1882 = vmatpush.msra.mxu0 %v1529
    %1883 = vmatpush.msra.mxu0 %v1526
    %1884 = vmatpush.msra.mxu0 %v1523
    %1885 = vmatpush.msra.mxu0 %v1520
    %1886 = vmatpush.msra.mxu0 %v1517
    %1887 = vmatpush.msra.mxu0 %v1514
    %1888 = vmatpush.msra.mxu0 %v1511
    %1889 = vmatpush.msra.mxu0 %v1508
    %1890 = vmatpush.msra.mxu0 %v1505
    %1891 = vmatpush.msra.mxu0 %v1502
    %1892 = vmatpush.msra.mxu0 %v1499
    %1893 = vmatmul.f32.gmra.mxu0 %v1873
    %v1894 = vpop.f32.mrf.mxu0
    %v1895 = vadd.f32 0.0, %v1894
    %1896 = vdwg.mxu0
    %1897 = vmatpush.msra.mxu0 %v1545
    %1898 = vmatpush.msra.mxu0 %v1542
    %1899 = vmatpush.msra.mxu0 %v1539
    %1900 = vmatpush.msra.mxu0 %v1536
    %1901 = vmatpush.msra.mxu0 %v1533
    %1902 = vmatpush.msra.mxu0 %v1530
    %1903 = vmatpush.msra.mxu0 %v1527
    %1904 = vmatpush.msra.mxu0 %v1524
    %1905 = vmatpush.msra.mxu0 %v1521
    %1906 = vmatpush.msra.mxu0 %v1518
    %1907 = vmatpush.msra.mxu0 %v1515
    %1908 = vmatpush.msra.mxu0 %v1512
    %1909 = vmatpush.msra.mxu0 %v1509
    %1910 = vmatpush.msra.mxu0 %v1506
    %1911 = vmatpush.msra.mxu0 %v1503
    %1912 = vmatpush.msra.mxu0 %v1500
    %1913 = vmatmul.f32.gmra.mxu0 %v1873
    %v1914 = vpop.f32.mrf.mxu0
    %v1915 = vadd.f32 0.0, %v1914
    %1916 = vdwg.mxu0
    %1917 = vmatpush.msra.mxu0 %v1546
    %1918 = vmatpush.msra.mxu0 %v1543
    %1919 = vmatpush.msra.mxu0 %v1540
    %1920 = vmatpush.msra.mxu0 %v1537
    %1921 = vmatpush.msra.mxu0 %v1534
    %1922 = vmatpush.msra.mxu0 %v1531
    %1923 = vmatpush.msra.mxu0 %v1528
    %1924 = vmatpush.msra.mxu0 %v1525
    %1925 = vmatpush.msra.mxu0 %v1522
    %1926 = vmatpush.msra.mxu0 %v1519
    %1927 = vmatpush.msra.mxu0 %v1516
    %1928 = vmatpush.msra.mxu0 %v1513
    %1929 = vmatpush.msra.mxu0 %v1510
    %1930 = vmatpush.msra.mxu0 %v1507
    %1931 = vmatpush.msra.mxu0 %v1504
    %1932 = vmatpush.msra.mxu0 %v1501
    %1933 = vmatmul.f32.gmra.mxu0 %v1873
    %v1934 = vpop.f32.mrf.mxu0
    %v1935 = vadd.f32 0.0, %v1934
    %1936 = vdwg.mxu0
    %v1937 = vadd.f32 %v1874, %v1895
    %v1938 = vxor.u32 %v1937, 2147483648
    %v1939 = vmul.f32 %v1938, 1.442695
    %v1940 = vpow.pop %v1939
    %v1941 = vadd.f32 %v1940, 1.0
    %v1942 = vrcp.pop %v1941
    %v1943 = vmul.f32 %v1941, %v1942
    %v1944 = vsub.f32 1.0, %v1943
    %v1945 = vmul.f32 %v1942, %v1944
    %v1946 = vadd.f32 %v1942, %v1945
    %vm1947 = vweird.f32 %v1941
    %vm1948 = vweird.f32 %v1942
    %vm1949 = vmor %vm1947, %vm1948
    %v1950 = vsel %vm1949, %v1942, %v1946
    %v1951 = vand.u32 2147483647, %v1941
    %vm1952 = vcmp.eq.f32.partialorder %v1951, 8.507059e+37
    %v1953 = vand.u32 %v1941, 2147483648
    %v1954 = vor.u32 1.1754944e-38, %v1953
    %v1955 = vsel %vm1952, %v1954, %v1950
    %v1956 = vmul.f32 1.0, %v1955
    %v1957 = vadd.f32 %v1875, %v1915
    %v1958 = vxor.u32 %v1957, 2147483648
    %v1959 = vmul.f32 %v1958, 1.442695
    %v1960 = vpow.pop %v1959
    %v1961 = vadd.f32 %v1960, 1.0
    %v1962 = vrcp.pop %v1961
    %v1963 = vmul.f32 %v1961, %v1962
    %v1964 = vsub.f32 1.0, %v1963
    %v1965 = vmul.f32 %v1962, %v1964
    %v1966 = vadd.f32 %v1962, %v1965
    %vm1967 = vweird.f32 %v1961
    %vm1968 = vweird.f32 %v1962
    %vm1969 = vmor %vm1967, %vm1968
    %v1970 = vsel %vm1969, %v1962, %v1966
    %v1971 = vand.u32 2147483647, %v1961
    %vm1972 = vcmp.eq.f32.partialorder %v1971, 8.507059e+37
    %v1973 = vand.u32 %v1961, 2147483648
    %v1974 = vor.u32 1.1754944e-38, %v1973
    %v1975 = vsel %vm1972, %v1974, %v1970
    %v1976 = vmul.f32 1.0, %v1975
    %v1977 = vadd.f32 %v1935, %v1489
    %v1978 = vmul.f32 %v1956, %v1977
    %v1979 = vadd.f32 %v1876, %v1978
    %v1980 = vtanh.pop %v1979
    %v1981 = vsub.f32 %v1873, %v1980
    %v1982 = vmul.f32 %v1976, %v1981
    %v1983 = vadd.f32 %v1980, %v1982
    %v1984 = vld [vmem:[#allocation2 + $0x78] sm:$0xff]
    %v1985 = vld [vmem:[#allocation2 + $0x80] sm:$0xff]
    %v1986 = vld [vmem:[#allocation2 + $0x88] sm:$0xff]
    %1987 = vmatpush.msra.mxu0 %v1544
    %1988 = vmatpush.msra.mxu0 %v1541
    %1989 = vmatpush.msra.mxu0 %v1538
    %1990 = vmatpush.msra.mxu0 %v1535
    %1991 = vmatpush.msra.mxu0 %v1532
    %1992 = vmatpush.msra.mxu0 %v1529
    %1993 = vmatpush.msra.mxu0 %v1526
    %1994 = vmatpush.msra.mxu0 %v1523
    %1995 = vmatpush.msra.mxu0 %v1520
    %1996 = vmatpush.msra.mxu0 %v1517
    %1997 = vmatpush.msra.mxu0 %v1514
    %1998 = vmatpush.msra.mxu0 %v1511
    %1999 = vmatpush.msra.mxu0 %v1508
    %2000 = vmatpush.msra.mxu0 %v1505
    %2001 = vmatpush.msra.mxu0 %v1502
    %2002 = vmatpush.msra.mxu0 %v1499
    %2003 = vmatmul.f32.gmra.mxu0 %v1983
    %v2004 = vpop.f32.mrf.mxu0
    %v2005 = vadd.f32 0.0, %v2004
    %2006 = vdwg.mxu0
    %2007 = vmatpush.msra.mxu0 %v1545
    %2008 = vmatpush.msra.mxu0 %v1542
    %2009 = vmatpush.msra.mxu0 %v1539
    %2010 = vmatpush.msra.mxu0 %v1536
    %2011 = vmatpush.msra.mxu0 %v1533
    %2012 = vmatpush.msra.mxu0 %v1530
    %2013 = vmatpush.msra.mxu0 %v1527
    %2014 = vmatpush.msra.mxu0 %v1524
    %2015 = vmatpush.msra.mxu0 %v1521
    %2016 = vmatpush.msra.mxu0 %v1518
    %2017 = vmatpush.msra.mxu0 %v1515
    %2018 = vmatpush.msra.mxu0 %v1512
    %2019 = vmatpush.msra.mxu0 %v1509
    %2020 = vmatpush.msra.mxu0 %v1506
    %2021 = vmatpush.msra.mxu0 %v1503
    %2022 = vmatpush.msra.mxu0 %v1500
    %2023 = vmatmul.f32.gmra.mxu0 %v1983
    %v2024 = vpop.f32.mrf.mxu0
    %v2025 = vadd.f32 0.0, %v2024
    %2026 = vdwg.mxu0
    %2027 = vmatpush.msra.mxu0 %v1546
    %2028 = vmatpush.msra.mxu0 %v1543
    %2029 = vmatpush.msra.mxu0 %v1540
    %2030 = vmatpush.msra.mxu0 %v1537
    %2031 = vmatpush.msra.mxu0 %v1534
    %2032 = vmatpush.msra.mxu0 %v1531
    %2033 = vmatpush.msra.mxu0 %v1528
    %2034 = vmatpush.msra.mxu0 %v1525
    %2035 = vmatpush.msra.mxu0 %v1522
    %2036 = vmatpush.msra.mxu0 %v1519
    %2037 = vmatpush.msra.mxu0 %v1516
    %2038 = vmatpush.msra.mxu0 %v1513
    %2039 = vmatpush.msra.mxu0 %v1510
    %2040 = vmatpush.msra.mxu0 %v1507
    %2041 = vmatpush.msra.mxu0 %v1504
    %2042 = vmatpush.msra.mxu0 %v1501
    %2043 = vmatmul.f32.gmra.mxu0 %v1983
    %v2044 = vpop.f32.mrf.mxu0
    %v2045 = vadd.f32 0.0, %v2044
    %2046 = vdwg.mxu0
    %v2047 = vadd.f32 %v1984, %v2005
    %v2048 = vxor.u32 %v2047, 2147483648
    %v2049 = vmul.f32 %v2048, 1.442695
    %v2050 = vpow.pop %v2049
    %v2051 = vadd.f32 %v2050, 1.0
    %v2052 = vrcp.pop %v2051
    %v2053 = vmul.f32 %v2051, %v2052
    %v2054 = vsub.f32 1.0, %v2053
    %v2055 = vmul.f32 %v2052, %v2054
    %v2056 = vadd.f32 %v2052, %v2055
    %vm2057 = vweird.f32 %v2051
    %vm2058 = vweird.f32 %v2052
    %vm2059 = vmor %vm2057, %vm2058
    %v2060 = vsel %vm2059, %v2052, %v2056
    %v2061 = vand.u32 2147483647, %v2051
    %vm2062 = vcmp.eq.f32.partialorder %v2061, 8.507059e+37
    %v2063 = vand.u32 %v2051, 2147483648
    %v2064 = vor.u32 1.1754944e-38, %v2063
    %v2065 = vsel %vm2062, %v2064, %v2060
    %v2066 = vmul.f32 1.0, %v2065
    %v2067 = vadd.f32 %v1985, %v2025
    %v2068 = vxor.u32 %v2067, 2147483648
    %v2069 = vmul.f32 %v2068, 1.442695
    %v2070 = vpow.pop %v2069
    %v2071 = vadd.f32 %v2070, 1.0
    %v2072 = vrcp.pop %v2071
    %v2073 = vmul.f32 %v2071, %v2072
    %v2074 = vsub.f32 1.0, %v2073
    %v2075 = vmul.f32 %v2072, %v2074
    %v2076 = vadd.f32 %v2072, %v2075
    %vm2077 = vweird.f32 %v2071
    %vm2078 = vweird.f32 %v2072
    %vm2079 = vmor %vm2077, %vm2078
    %v2080 = vsel %vm2079, %v2072, %v2076
    %v2081 = vand.u32 2147483647, %v2071
    %vm2082 = vcmp.eq.f32.partialorder %v2081, 8.507059e+37
    %v2083 = vand.u32 %v2071, 2147483648
    %v2084 = vor.u32 1.1754944e-38, %v2083
    %v2085 = vsel %vm2082, %v2084, %v2080
    %v2086 = vmul.f32 1.0, %v2085
    %v2087 = vadd.f32 %v2045, %v1489
    %v2088 = vmul.f32 %v2066, %v2087
    %v2089 = vadd.f32 %v1986, %v2088
    %v2090 = vtanh.pop %v2089
    %v2091 = vsub.f32 %v1983, %v2090
    %v2092 = vmul.f32 %v2086, %v2091
    %v2093 = vadd.f32 %v2090, %v2092
    %v2094 = vld [vmem:[#allocation2 + $0x90] sm:$0xff]
    %v2095 = vld [vmem:[#allocation2 + $0x98] sm:$0xff]
    %v2096 = vld [vmem:[#allocation2 + $0xa0] sm:$0xff]
    %2097 = vmatpush.msra.mxu0 %v1544
    %2098 = vmatpush.msra.mxu0 %v1541
    %2099 = vmatpush.msra.mxu0 %v1538
    %2100 = vmatpush.msra.mxu0 %v1535
    %2101 = vmatpush.msra.mxu0 %v1532
    %2102 = vmatpush.msra.mxu0 %v1529
    %2103 = vmatpush.msra.mxu0 %v1526
    %2104 = vmatpush.msra.mxu0 %v1523
    %2105 = vmatpush.msra.mxu0 %v1520
    %2106 = vmatpush.msra.mxu0 %v1517
    %2107 = vmatpush.msra.mxu0 %v1514
    %2108 = vmatpush.msra.mxu0 %v1511
    %2109 = vmatpush.msra.mxu0 %v1508
    %2110 = vmatpush.msra.mxu0 %v1505
    %2111 = vmatpush.msra.mxu0 %v1502
    %2112 = vmatpush.msra.mxu0 %v1499
    %2113 = vmatmul.f32.gmra.mxu0 %v2093
    %v2114 = vpop.f32.mrf.mxu0
    %v2115 = vadd.f32 0.0, %v2114
    %2116 = vdwg.mxu0
    %2117 = vmatpush.msra.mxu0 %v1545
    %2118 = vmatpush.msra.mxu0 %v1542
    %2119 = vmatpush.msra.mxu0 %v1539
    %2120 = vmatpush.msra.mxu0 %v1536
    %2121 = vmatpush.msra.mxu0 %v1533
    %2122 = vmatpush.msra.mxu0 %v1530
    %2123 = vmatpush.msra.mxu0 %v1527
    %2124 = vmatpush.msra.mxu0 %v1524
    %2125 = vmatpush.msra.mxu0 %v1521
    %2126 = vmatpush.msra.mxu0 %v1518
    %2127 = vmatpush.msra.mxu0 %v1515
    %2128 = vmatpush.msra.mxu0 %v1512
    %2129 = vmatpush.msra.mxu0 %v1509
    %2130 = vmatpush.msra.mxu0 %v1506
    %2131 = vmatpush.msra.mxu0 %v1503
    %2132 = vmatpush.msra.mxu0 %v1500
    %2133 = vmatmul.f32.gmra.mxu0 %v2093
    %v2134 = vpop.f32.mrf.mxu0
    %v2135 = vadd.f32 0.0, %v2134
    %2136 = vdwg.mxu0
    %2137 = vmatpush.msra.mxu0 %v1546
    %2138 = vmatpush.msra.mxu0 %v1543
    %2139 = vmatpush.msra.mxu0 %v1540
    %2140 = vmatpush.msra.mxu0 %v1537
    %2141 = vmatpush.msra.mxu0 %v1534
    %2142 = vmatpush.msra.mxu0 %v1531
    %2143 = vmatpush.msra.mxu0 %v1528
    %2144 = vmatpush.msra.mxu0 %v1525
    %2145 = vmatpush.msra.mxu0 %v1522
    %2146 = vmatpush.msra.mxu0 %v1519
    %2147 = vmatpush.msra.mxu0 %v1516
    %2148 = vmatpush.msra.mxu0 %v1513
    %2149 = vmatpush.msra.mxu0 %v1510
    %2150 = vmatpush.msra.mxu0 %v1507
    %2151 = vmatpush.msra.mxu0 %v1504
    %2152 = vmatpush.msra.mxu0 %v1501
    %2153 = vmatmul.f32.gmra.mxu0 %v2093
    %v2154 = vpop.f32.mrf.mxu0
    %v2155 = vadd.f32 0.0, %v2154
    %2156 = vdwg.mxu0
    %v2157 = vadd.f32 %v2094, %v2115
    %v2158 = vxor.u32 %v2157, 2147483648
    %v2159 = vmul.f32 %v2158, 1.442695
    %v2160 = vpow.pop %v2159
    %v2161 = vadd.f32 %v2160, 1.0
    %v2162 = vrcp.pop %v2161
    %v2163 = vmul.f32 %v2161, %v2162
    %v2164 = vsub.f32 1.0, %v2163
    %v2165 = vmul.f32 %v2162, %v2164
    %v2166 = vadd.f32 %v2162, %v2165
    %vm2167 = vweird.f32 %v2161
    %vm2168 = vweird.f32 %v2162
    %vm2169 = vmor %vm2167, %vm2168
    %v2170 = vsel %vm2169, %v2162, %v2166
    %v2171 = vand.u32 2147483647, %v2161
    %vm2172 = vcmp.eq.f32.partialorder %v2171, 8.507059e+37
    %v2173 = vand.u32 %v2161, 2147483648
    %v2174 = vor.u32 1.1754944e-38, %v2173
    %v2175 = vsel %vm2172, %v2174, %v2170
    %v2176 = vmul.f32 1.0, %v2175
    %v2177 = vadd.f32 %v2095, %v2135
    %v2178 = vxor.u32 %v2177, 2147483648
    %v2179 = vmul.f32 %v2178, 1.442695
    %v2180 = vpow.pop %v2179
    %v2181 = vadd.f32 %v2180, 1.0
    %v2182 = vrcp.pop %v2181
    %v2183 = vmul.f32 %v2181, %v2182
    %v2184 = vsub.f32 1.0, %v2183
    %v2185 = vmul.f32 %v2182, %v2184
    %v2186 = vadd.f32 %v2182, %v2185
    %vm2187 = vweird.f32 %v2181
    %vm2188 = vweird.f32 %v2182
    %vm2189 = vmor %vm2187, %vm2188
    %v2190 = vsel %vm2189, %v2182, %v2186
    %v2191 = vand.u32 2147483647, %v2181
    %vm2192 = vcmp.eq.f32.partialorder %v2191, 8.507059e+37
    %v2193 = vand.u32 %v2181, 2147483648
    %v2194 = vor.u32 1.1754944e-38, %v2193
    %v2195 = vsel %vm2192, %v2194, %v2190
    %v2196 = vmul.f32 1.0, %v2195
    %v2197 = vadd.f32 %v2155, %v1489
    %v2198 = vmul.f32 %v2176, %v2197
    %v2199 = vadd.f32 %v2096, %v2198
    %v2200 = vtanh.pop %v2199
    %v2201 = vsub.f32 %v2093, %v2200
    %v2202 = vmul.f32 %v2196, %v2201
    %v2203 = vadd.f32 %v2200, %v2202
    %v2204 = vld [vmem:[#allocation2 + $0xa8] sm:$0xff]
    %v2205 = vld [vmem:[#allocation2 + $0xb0] sm:$0xff]
    %v2206 = vld [vmem:[#allocation2 + $0xb8] sm:$0xff]
    %2207 = vmatpush.msra.mxu0 %v1544
    %2208 = vmatpush.msra.mxu0 %v1541
    %2209 = vmatpush.msra.mxu0 %v1538
    %2210 = vmatpush.msra.mxu0 %v1535
    %2211 = vmatpush.msra.mxu0 %v1532
    %2212 = vmatpush.msra.mxu0 %v1529
    %2213 = vmatpush.msra.mxu0 %v1526
    %2214 = vmatpush.msra.mxu0 %v1523
    %2215 = vmatpush.msra.mxu0 %v1520
    %2216 = vmatpush.msra.mxu0 %v1517
    %2217 = vmatpush.msra.mxu0 %v1514
    %2218 = vmatpush.msra.mxu0 %v1511
    %2219 = vmatpush.msra.mxu0 %v1508
    %2220 = vmatpush.msra.mxu0 %v1505
    %2221 = vmatpush.msra.mxu0 %v1502
    %2222 = vmatpush.msra.mxu0 %v1499
    %2223 = vmatmul.f32.gmra.mxu0 %v2203
    %v2224 = vpop.f32.mrf.mxu0
    %v2225 = vadd.f32 0.0, %v2224
    %2226 = vdwg.mxu0
    %2227 = vmatpush.msra.mxu0 %v1545
    %2228 = vmatpush.msra.mxu0 %v1542
    %2229 = vmatpush.msra.mxu0 %v1539
    %2230 = vmatpush.msra.mxu0 %v1536
    %2231 = vmatpush.msra.mxu0 %v1533
    %2232 = vmatpush.msra.mxu0 %v1530
    %2233 = vmatpush.msra.mxu0 %v1527
    %2234 = vmatpush.msra.mxu0 %v1524
    %2235 = vmatpush.msra.mxu0 %v1521
    %2236 = vmatpush.msra.mxu0 %v1518
    %2237 = vmatpush.msra.mxu0 %v1515
    %2238 = vmatpush.msra.mxu0 %v1512
    %2239 = vmatpush.msra.mxu0 %v1509
    %2240 = vmatpush.msra.mxu0 %v1506
    %2241 = vmatpush.msra.mxu0 %v1503
    %2242 = vmatpush.msra.mxu0 %v1500
    %2243 = vmatmul.f32.gmra.mxu0 %v2203
    %v2244 = vpop.f32.mrf.mxu0
    %v2245 = vadd.f32 0.0, %v2244
    %2246 = vdwg.mxu0
    %2247 = vmatpush.msra.mxu0 %v1546
    %2248 = vmatpush.msra.mxu0 %v1543
    %2249 = vmatpush.msra.mxu0 %v1540
    %2250 = vmatpush.msra.mxu0 %v1537
    %2251 = vmatpush.msra.mxu0 %v1534
    %2252 = vmatpush.msra.mxu0 %v1531
    %2253 = vmatpush.msra.mxu0 %v1528
    %2254 = vmatpush.msra.mxu0 %v1525
    %2255 = vmatpush.msra.mxu0 %v1522
    %2256 = vmatpush.msra.mxu0 %v1519
    %2257 = vmatpush.msra.mxu0 %v1516
    %2258 = vmatpush.msra.mxu0 %v1513
    %2259 = vmatpush.msra.mxu0 %v1510
    %2260 = vmatpush.msra.mxu0 %v1507
    %2261 = vmatpush.msra.mxu0 %v1504
    %2262 = vmatpush.msra.mxu0 %v1501
    %2263 = vmatmul.f32.gmra.mxu0 %v2203
    %v2264 = vpop.f32.mrf.mxu0
    %v2265 = vadd.f32 0.0, %v2264
    %2266 = vdwg.mxu0
    %v2267 = vadd.f32 %v2204, %v2225
    %v2268 = vxor.u32 %v2267, 2147483648
    %v2269 = vmul.f32 %v2268, 1.442695
    %v2270 = vpow.pop %v2269
    %v2271 = vadd.f32 %v2270, 1.0
    %v2272 = vrcp.pop %v2271
    %v2273 = vmul.f32 %v2271, %v2272
    %v2274 = vsub.f32 1.0, %v2273
    %v2275 = vmul.f32 %v2272, %v2274
    %v2276 = vadd.f32 %v2272, %v2275
    %vm2277 = vweird.f32 %v2271
    %vm2278 = vweird.f32 %v2272
    %vm2279 = vmor %vm2277, %vm2278
    %v2280 = vsel %vm2279, %v2272, %v2276
    %v2281 = vand.u32 2147483647, %v2271
    %vm2282 = vcmp.eq.f32.partialorder %v2281, 8.507059e+37
    %v2283 = vand.u32 %v2271, 2147483648
    %v2284 = vor.u32 1.1754944e-38, %v2283
    %v2285 = vsel %vm2282, %v2284, %v2280
    %v2286 = vmul.f32 1.0, %v2285
    %v2287 = vadd.f32 %v2205, %v2245
    %v2288 = vxor.u32 %v2287, 2147483648
    %v2289 = vmul.f32 %v2288, 1.442695
    %v2290 = vpow.pop %v2289
    %v2291 = vadd.f32 %v2290, 1.0
    %v2292 = vrcp.pop %v2291
    %v2293 = vmul.f32 %v2291, %v2292
    %v2294 = vsub.f32 1.0, %v2293
    %v2295 = vmul.f32 %v2292, %v2294
    %v2296 = vadd.f32 %v2292, %v2295
    %vm2297 = vweird.f32 %v2291
    %vm2298 = vweird.f32 %v2292
    %vm2299 = vmor %vm2297, %vm2298
    %v2300 = vsel %vm2299, %v2292, %v2296
    %v2301 = vand.u32 2147483647, %v2291
    %vm2302 = vcmp.eq.f32.partialorder %v2301, 8.507059e+37
    %v2303 = vand.u32 %v2291, 2147483648
    %v2304 = vor.u32 1.1754944e-38, %v2303
    %v2305 = vsel %vm2302, %v2304, %v2300
    %v2306 = vmul.f32 1.0, %v2305
    %v2307 = vadd.f32 %v2265, %v1489
    %v2308 = vmul.f32 %v2286, %v2307
    %v2309 = vadd.f32 %v2206, %v2308
    %v2310 = vtanh.pop %v2309
    %v2311 = vsub.f32 %v2203, %v2310
    %v2312 = vmul.f32 %v2306, %v2311
    %v2313 = vadd.f32 %v2310, %v2312
    %v2314 = vld [vmem:[%s7] sm:$0xff]
    %v2315 = vld [vmem:[%s7 + $0x8] sm:$0xff]
    %v2316 = vld [vmem:[%s7 + $0x10] sm:$0xff]
    %v2317 = vld [vmem:[%s7 + $0x18] sm:$0xff]
    %v2318 = vld [vmem:[%s7 + $0x20] sm:$0xff]
    %v2319 = vld [vmem:[%s7 + $0x28] sm:$0xff]
    %v2320 = vld [vmem:[%s7 + $0x30] sm:$0xff]
    %v2321 = vld [vmem:[%s7 + $0x38] sm:$0xff]
    %v2322 = vld [vmem:[%s7 + $0x40] sm:$0xff]
    %v2323 = vld [vmem:[%s7 + $0x48] sm:$0xff]
    %v2324 = vld [vmem:[%s7 + $0x50] sm:$0xff]
    %v2325 = vld [vmem:[%s7 + $0x58] sm:$0xff]
    %v2326 = vld [vmem:[%s7 + $0x60] sm:$0xff]
    %v2327 = vld [vmem:[%s7 + $0x68] sm:$0xff]
    %v2328 = vld [vmem:[%s7 + $0x70] sm:$0xff]
    %v2329 = vld [vmem:[%s7 + $0x78] sm:$0xff]
    %v2330 = vld [vmem:[%s8] sm:$0x1]
    %v2332 = vperm.slane %v2330, 0
    %2334 = vmatpush.msra.mxu0 %v2329
    %2335 = vmatpush.msra.mxu0 %v2328
    %2336 = vmatpush.msra.mxu0 %v2327
    %2337 = vmatpush.msra.mxu0 %v2326
    %2338 = vmatpush.msra.mxu0 %v2325
    %2339 = vmatpush.msra.mxu0 %v2324
    %2340 = vmatpush.msra.mxu0 %v2323
    %2341 = vmatpush.msra.mxu0 %v2322
    %2342 = vmatpush.msra.mxu0 %v2321
    %2343 = vmatpush.msra.mxu0 %v2320
    %2344 = vmatpush.msra.mxu0 %v2319
    %2345 = vmatpush.msra.mxu0 %v2318
    %2346 = vmatpush.msra.mxu0 %v2317
    %2347 = vmatpush.msra.mxu0 %v2316
    %2348 = vmatpush.msra.mxu0 %v2315
    %2349 = vmatpush.msra.mxu0 %v2314
    %2350 = vmatmul.f32.gmra.mxu0 %v2313
    %v2351 = vpop.f32.mrf.mxu0
    %v2352 = vadd.f32 %v2332, %v2351
    %2353 = vdwg.mxu0
    %v2354 = vtanh.pop %v2352
    %2355 = vst [vmem:[%s9] sm:$0xff] %v2354
    // Predicated region
    $region46: #{custom_gru_model_forward.1} parent=1 // pred_check
      _
    $region47: #{custom_gru_model_forward.1} parent=1 // pred_check_branch
      %2357 = sbr.rel (0) target = $region49
    $region48: #{custom_gru_model_forward.1} parent=1 // pred_region
      _
    $region49: #{custom_gru_model_forward.1} parent=1 // pred_fallthru
      _
    // Predicated region
    $region50: #{custom_gru_model_forward.1} parent=1 // pred_check
      _
    $region51: #{custom_gru_model_forward.1} parent=1 // pred_check_branch
      %2359 = sbr.rel (0) target = $region53
    $region52: #{custom_gru_model_forward.1} parent=1 // pred_region
      _
    $region53: #{custom_gru_model_forward.1} parent=1 // pred_fallthru
      _
    %2360 = vsyncpa [#allocation5], 1
    %2361 = vsyncpa [#allocation7], 1

</llo_original>
